<compile_context>
chip_gen: v7x
topology: tpu7x:2x2x1
jax: 0.10.0
libtpu: 0.0.40
codegen_flags: <defaults>
</compile_context>

<pallas_src>
import functools

import jax
import jax.numpy as jnp
from jax.experimental import pallas as pl
from jax.experimental.pallas import tpu as pltpu

_VMEM = pl.BlockSpec(memory_space=pltpu.MemorySpace.VMEM)


# --------------------------- in-kernel helpers ------------------------------

def _ln(x, g, b, eps=1e-5):
    """LayerNorm over the last (lane) dim; all f32."""
    mean = jnp.mean(x, axis=-1, keepdims=True)
    var = jnp.mean(jnp.square(x - mean), axis=-1, keepdims=True)
    return (x - mean) * jax.lax.rsqrt(var + eps) * g + b


# ------------------------------ stem linear ---------------------------------

def _linear_kernel(x_ref, w_ref, b_ref, o_ref):
    # bf16 MXU operands, f32 accumulate + f32 bias.
    o_ref[...] = (
        jnp.dot(x_ref[...].astype(jnp.bfloat16), w_ref[...],
                preferred_element_type=jnp.float32)
        + b_ref[...]
    )


def linear(x, w, b, *, num_row_blocks=2):
    """Row-tiled linear; row axis marked parallel so v7x can use both TCs."""
    m, k = x.shape
    n = w.shape[1]
    if m % num_row_blocks == 0 and (m // num_row_blocks) % 8 == 0:
        rb = m // num_row_blocks
    else:
        rb = m
    grid = (m // rb,)
    return pl.pallas_call(
        _linear_kernel,
        out_shape=jax.ShapeDtypeStruct((m, n), jnp.float32),
        grid=grid,
        in_specs=[
            pl.BlockSpec((rb, k), lambda i: (i, 0)),
            pl.BlockSpec((k, n), lambda i: (0, 0)),
            pl.BlockSpec((1, n), lambda i: (0, 0)),
        ],
        out_specs=pl.BlockSpec((rb, n), lambda i: (i, 0)),
        compiler_params=pltpu.CompilerParams(dimension_semantics=("parallel",)),
    )(x, w, b.reshape(1, n))


# ------------------- fused MaxViT attention block kernel --------------------

def _attn_block_kernel(x_ref, ln1_g, ln1_b, qkv_w, qkv_b, proj_w, proj_b,
                       ln2_g, ln2_b, w1, b1, w2, b2, o_ref, *, heads, scale):
    nwb, t, c = x_ref.shape
    hd = c // heads
    bf16 = jnp.bfloat16

    # Residual stream lives in vregs/VMEM for the whole block (f32).
    x = x_ref[...].reshape(nwb * t, c)

    # ---- attention branch -------------------------------------------------
    xn = _ln(x, ln1_g[...], ln1_b[...])
    qkv = jnp.dot(xn.astype(bf16), qkv_w[...],
                  preferred_element_type=jnp.float32) + qkv_b[...]
    # 128-lane-aligned static slices of the fused QKV slab.
    q = qkv[:, 0 * c:1 * c].reshape(nwb, t, c)
    k = qkv[:, 1 * c:2 * c].reshape(nwb, t, c).astype(bf16)
    v = qkv[:, 2 * c:3 * c].reshape(nwb, t, c)

    # Head split via lane masks: keeps every matmul full 128-wide on the MXU and
    # avoids any cross-sublane head transpose / sub-128-lane relayout.
    lane = jax.lax.broadcasted_iota(jnp.int32, (1, 1, c), 2)
    o = jnp.zeros((nwb, t, c), jnp.float32)
    for h in range(heads):  # static unroll (heads is tiny)
        m = ((lane >= h * hd) & (lane < (h + 1) * hd)).astype(jnp.float32)
        s = jnp.einsum("wtd,wsd->wts", (q * m).astype(bf16), k,
                       preferred_element_type=jnp.float32) * scale
        s = s - jnp.max(s, axis=-1, keepdims=True)
        p = jnp.exp(s)
        # EUP reciprocal instead of a VALU divide.
        p = p * pl.reciprocal(jnp.sum(p, axis=-1, keepdims=True), approx=True)
        o = o + jnp.einsum("wts,wsd->wtd", p.astype(bf16), (v * m).astype(bf16),
                           preferred_element_type=jnp.float32)

    o = o.reshape(nwb * t, c)
    o = jnp.dot(o.astype(bf16), proj_w[...],
                preferred_element_type=jnp.float32) + proj_b[...]
    x = x + o  # residual 1 (in VMEM)

    # ---- MLP branch --------------------------------------------------------
    xn2 = _ln(x, ln2_g[...], ln2_b[...])
    hdn = jnp.dot(xn2.astype(bf16), w1[...],
                  preferred_element_type=jnp.float32) + b1[...]
    # TODO(synk): PyTorch nn.GELU default is exact erf; tanh approximation used here.
    hdn = jax.nn.gelu(hdn, approximate=True)
    hdn = jnp.dot(hdn.astype(bf16), w2[...],
                  preferred_element_type=jnp.float32) + b2[...]
    x = x + hdn  # residual 2 (in VMEM)

    o_ref[...] = x.reshape(nwb, t, c)


def attn_block(tokens, p, *, heads):
    """tokens: (num_windows, T, C) f32 -> (num_windows, T, C) f32, one pallas_call."""
    nw, t, c = tokens.shape
    c3 = 3 * c
    hidden = p["mlp_w1"].shape[1]
    scale = 1.0 / float(c // heads) ** 0.5

    # Split windows into 2 blocks -> "parallel" grid axis (both v7x TensorCores).
    wb = nw // 2 if nw % 2 == 0 else nw
    grid = (nw // wb,)
    bcast = lambda i: (0, 0)

    return pl.pallas_call(
        functools.partial(_attn_block_kernel, heads=heads, scale=scale),
        out_shape=jax.ShapeDtypeStruct((nw, t, c), jnp.float32),
        grid=grid,
        in_specs=[
            pl.BlockSpec((wb, t, c), lambda i: (i, 0, 0)),  # tokens
            pl.BlockSpec((1, c), bcast),                    # ln1_g
            pl.BlockSpec((1, c), bcast),                    # ln1_b
            pl.BlockSpec((c, c3), bcast),                   # qkv_w
            pl.BlockSpec((1, c3), bcast),                   # qkv_b
            pl.BlockSpec((c, c), bcast),                    # proj_w
            pl.BlockSpec((1, c), bcast),                    # proj_b
            pl.BlockSpec((1, c), bcast),                    # ln2_g
            pl.BlockSpec((1, c), bcast),                    # ln2_b
            pl.BlockSpec((c, hidden), bcast),               # mlp_w1
            pl.BlockSpec((1, hidden), bcast),               # mlp_b1
            pl.BlockSpec((hidden, c), bcast),               # mlp_w2
            pl.BlockSpec((1, c), bcast),                    # mlp_b2
        ],
        out_specs=pl.BlockSpec((wb, t, c), lambda i: (i, 0, 0)),
        compiler_params=pltpu.CompilerParams(dimension_semantics=("parallel",)),
    )(
        tokens,
        p["ln1_g"].reshape(1, c), p["ln1_b"].reshape(1, c),
        p["qkv_w"], p["qkv_b"].reshape(1, c3),
        p["proj_w"], p["proj_b"].reshape(1, c),
        p["ln2_g"].reshape(1, c), p["ln2_b"].reshape(1, c),
        p["mlp_w1"], p["mlp_b1"].reshape(1, hidden),
        p["mlp_w2"], p["mlp_b2"].reshape(1, c),
    )


# ----------------- fused final norm + pool + classifier ---------------------

def _head_kernel(x_ref, g_ref, b_ref, cw_ref, cb_ref, o_ref, *, batch):
    bt, c = x_ref.shape
    hw = bt // batch
    xn = _ln(x_ref[...], g_ref[...], b_ref[...])
    feats = jnp.mean(xn.reshape(batch, hw, c), axis=1)      # global average pool
    o_ref[...] = (
        jnp.dot(feats.astype(jnp.bfloat16), cw_ref[...],
                preferred_element_type=jnp.float32)
        + cb_ref[...]
    )


def head(x_flat, batch, g, b, cls_w, cls_b):
    _, c = x_flat.shape
    n = cls_w.shape[1]
    return pl.pallas_call(
        functools.partial(_head_kernel, batch=batch),
        out_shape=jax.ShapeDtypeStruct((batch, n), jnp.float32),
        in_specs=[_VMEM] * 5,
        out_specs=_VMEM,
    )(x_flat, g.reshape(1, c), b.reshape(1, c), cls_w, cls_b.reshape(1, n))


# -------------------------- window / grid plumbing --------------------------
# Pure layout ops on the lane-dense (..., C=128) axis; left to XLA (lane dim is
# never permuted, so these are cheap relabels between kernels).

def window_partition(x, p):
    b, h, w, c = x.shape
    x = x.reshape(b, h // p, p, w // p, p, c)
    x = jnp.transpose(x, (0, 1, 3, 2, 4, 5))
    return x.reshape(b * (h // p) * (w // p), p * p, c)


def window_unpartition(x, p, b, h, w, c):
    x = x.reshape(b, h // p, w // p, p, p, c)
    x = jnp.transpose(x, (0, 1, 3, 2, 4, 5))
    return x.reshape(b, h, w, c)


def grid_partition(x, g):
    b, h, w, c = x.shape
    x = x.reshape(b, g, h // g, g, w // g, c)
    x = jnp.transpose(x, (0, 2, 4, 1, 3, 5))
    return x.reshape(b * (h // g) * (w // g), g * g, c)


def grid_unpartition(x, g, b, h, w, c):
    x = x.reshape(b, h // g, w // g, g, g, c)
    x = jnp.transpose(x, (0, 3, 1, 4, 2, 5))
    return x.reshape(b, h, w, c)


# ------------------------------ full forward --------------------------------

def maxvit_finetune_forward(params, x_nchw, *, part=4, heads=2):
    x = jnp.transpose(x_nchw, (0, 2, 3, 1)).astype(jnp.float32)   # NCHW -> NHWC
    b, h, w, cin = x.shape

    # Conv stem: 3x3, stride 2, pad 1 -> im2col (XLA layout glue) + Pallas matmul.
    xp = jnp.pad(x, ((0, 0), (1, 1), (1, 1), (0, 0)))
    cols = [xp[:, dy:dy + h:2, dx:dx + w:2, :] for dy in range(3) for dx in range(3)]
    cols = jnp.concatenate(cols, axis=-1)                          # (b, h/2, w/2, 9*cin)
    ho, wo = h // 2, w // 2
    c = params["stem_w"].shape[1]
    rows = b * ho * wo
    feat = linear(cols.reshape(rows, 9 * cin),
                  params["stem_w"], params["stem_b"]).reshape(b, ho, wo, c)

    # TODO(synk): full timm maxvit_base_tf_224 (4 stages, MBConv, pretrained
    # weights) cannot be reproduced in-script; single reduced MaxViT stage here.

    # Block (window) attention — one fused pallas_call.
    win = window_partition(feat, part)
    win = attn_block(win, params["blk"], heads=heads)
    feat = window_unpartition(win, part, b, ho, wo, c)

    # Grid attention — one fused pallas_call.
    grd = grid_partition(feat, part)
    grd = attn_block(grd, params["grd"], heads=heads)
    feat = grid_unpartition(grd, part, b, ho, wo, c)

    # Final norm + global average pool + classifier — one fused pallas_call.
    logits = head(feat.reshape(b * ho * wo, c), b,
                  params["fn_g"], params["fn_b"],
                  params["cls_w"], params["cls_b"])
    return logits


# ------------------------------- parameters ---------------------------------

def init_params(key, num_classes=10, cin=3, c=128, mlp_ratio=4):
    ks = jax.random.split(key, 16)

    def wgt(k, shape, scale=0.02):
        # MXU weights stored bf16 (cast once, not per-call).
        return (scale * jax.random.normal(k, shape)).astype(jnp.bfloat16)

    def attn_params(keys):
        return {
            "ln1_g": jnp.ones((c,), jnp.float32),
            "ln1_b": jnp.zeros((c,), jnp.float32),
            "qkv_w": wgt(keys[0], (c, 3 * c)),
            "qkv_b": jnp.zeros((3 * c,), jnp.float32),
            "proj_w": wgt(keys[1], (c, c)),
            "proj_b": jnp.zeros((c,), jnp.float32),
            "ln2_g": jnp.ones((c,), jnp.float32),
            "ln2_b": jnp.zeros((c,), jnp.float32),
            "mlp_w1": wgt(keys[2], (c, mlp_ratio * c)),
            "mlp_b1": jnp.zeros((mlp_ratio * c,), jnp.float32),
            "mlp_w2": wgt(keys[3], (mlp_ratio * c, c)),
            "mlp_b2": jnp.zeros((c,), jnp.float32),
        }

    return {
        "stem_w": wgt(ks[0], (9 * cin, c)),
        "stem_b": jnp.zeros((c,), jnp.float32),
        "blk": attn_params(ks[1:5]),
        "grd": attn_params(ks[5:9]),
        "fn_g": jnp.ones((c,), jnp.float32),
        "fn_b": jnp.zeros((c,), jnp.float32),
        "cls_w": wgt(ks[9], (c, num_classes)),
        "cls_b": jnp.zeros((num_classes,), jnp.float32),
    }


if __name__ == "__main__":
    key = jax.random.PRNGKey(0)
    pkey, xkey = jax.random.split(key)

    num_classes = 10
    params = init_params(pkey, num_classes=num_classes)
    x = jax.random.normal(xkey, (2, 3, 16, 16), dtype=jnp.float32)   # NCHW like PyTorch

    fwd = jax.jit(functools.partial(maxvit_finetune_forward, params))
    logits = fwd(x)
    jax.block_until_ready(logits)

    assert logits.shape == (2, num_classes), logits.shape
    assert bool(jnp.all(jnp.isfinite(logits)))
    print("KERNEL_OK")
</pallas_src>

<mosaic_0001>
module attributes {stable_mosaic.version = 11 : i64} {
  func.func @_linear_kernel(%arg0: i32, %arg1: memref<64x27xf32, #tpu.memory_space<vmem>>, %arg2: memref<27x128xbf16, #tpu.memory_space<vmem>>, %arg3: memref<1x128xf32, #tpu.memory_space<vmem>>, %arg4: memref<64x128xf32, #tpu.memory_space<vmem>>) attributes {dimension_semantics = [#tpu.dimension_semantics<parallel>], iteration_bounds = array<i64: 2>, scalar_prefetch = 0 : i64, scratch_operands = 0 : i64, tpu.core_type = #tpu.core_type<tc>, window_params = [{transform_indices = @transform_0, window_bounds = array<i64: 64, 27>}, {pipeline_mode = #tpu.pipeline_mode<synchronous>, transform_indices = @transform_1, window_bounds = array<i64: 27, 128>}, {pipeline_mode = #tpu.pipeline_mode<synchronous>, transform_indices = @transform_2, window_bounds = array<i64: 1, 128>}, {transform_indices = @transform_3, window_bounds = array<i64: 64, 128>}]} {
    %c0 = arith.constant 0 : index
    %c0_0 = arith.constant 0 : index
    %0 = vector.load %arg1[%c0, %c0_0] : memref<64x27xf32, #tpu.memory_space<vmem>>, vector<64x27xf32>
    %1 = arith.truncf %0 : vector<64x27xf32> to vector<64x27xbf16>
    %c0_1 = arith.constant 0 : index
    %c0_2 = arith.constant 0 : index
    %2 = vector.load %arg2[%c0_1, %c0_2] : memref<27x128xbf16, #tpu.memory_space<vmem>>, vector<27x128xbf16>
    %cst = arith.constant dense<0.000000e+00> : vector<64x128xf32>
    %3 = tpu.matmul %1, %2, %cst {dimension_numbers = #tpu.dot_dimension_numbers<[1], [0], [0], [1], [0, 0, 1, 1], [], []>} : vector<64x27xbf16>, vector<27x128xbf16>, vector<64x128xf32> -> vector<64x128xf32>
    %c0_3 = arith.constant 0 : index
    %c0_4 = arith.constant 0 : index
    %4 = vector.load %arg3[%c0_3, %c0_4] : memref<1x128xf32, #tpu.memory_space<vmem>>, vector<1x128xf32>
    %5 = vector.broadcast %4 : vector<1x128xf32> to vector<64x128xf32>
    %6 = arith.addf %3, %5 : vector<64x128xf32>
    %c0_5 = arith.constant 0 : index
    %c0_6 = arith.constant 0 : index
    %7 = vector.load %arg4[%c0_5, %c0_6] : memref<64x128xf32, #tpu.memory_space<vmem>>, vector<64x128xf32>
    tpu.vector_store %arg4[%c0_5, %c0_6], %6 {strides = array<i32>} : memref<64x128xf32, #tpu.memory_space<vmem>>, vector<64x128xf32>,
    return
  }
  func.func @transform_0(%arg0: i32) -> (i32, i32) {
    %c0_i32 = arith.constant 0 : i32
    %c0_i32_0 = arith.constant 0 : i32
    return %arg0, %c0_i32 : i32, i32
  }
  func.func @transform_1(%arg0: i32) -> (i32, i32) {
    %c0_i32 = arith.constant 0 : i32
    %c0_i32_0 = arith.constant 0 : i32
    %c0_i32_1 = arith.constant 0 : i32
    return %c0_i32, %c0_i32_0 : i32, i32
  }
  func.func @transform_2(%arg0: i32) -> (i32, i32) {
    %c0_i32 = arith.constant 0 : i32
    %c0_i32_0 = arith.constant 0 : i32
    %c0_i32_1 = arith.constant 0 : i32
    return %c0_i32, %c0_i32_0 : i32, i32
  }
  func.func @transform_3(%arg0: i32) -> (i32, i32) {
    %c0_i32 = arith.constant 0 : i32
    %c0_i32_0 = arith.constant 0 : i32
    return %arg0, %c0_i32 : i32, i32
  }
}

module attributes {stable_mosaic.version = 11 : i64} {
  func.func @_attn_block_kernel(%arg0: i32, %arg1: memref<4x16x128xf32, #tpu.memory_space<vmem>>, %arg2: memref<1x128xf32, #tpu.memory_space<vmem>>, %arg3: memref<1x128xf32, #tpu.memory_space<vmem>>, %arg4: memref<128x384xbf16, #tpu.memory_space<vmem>>, %arg5: memref<1x384xf32, #tpu.memory_space<vmem>>, %arg6: memref<128x128xbf16, #tpu.memory_space<vmem>>, %arg7: memref<1x128xf32, #tpu.memory_space<vmem>>, %arg8: memref<1x128xf32, #tpu.memory_space<vmem>>, %arg9: memref<1x128xf32, #tpu.memory_space<vmem>>, %arg10: memref<128x512xbf16, #tpu.memory_space<vmem>>, %arg11: memref<1x512xf32, #tpu.memory_space<vmem>>, %arg12: memref<512x128xbf16, #tpu.memory_space<vmem>>, %arg13: memref<1x128xf32, #tpu.memory_space<vmem>>, %arg14: memref<4x16x128xf32, #tpu.memory_space<vmem>>) attributes {dimension_semantics = [#tpu.dimension_semantics<parallel>], iteration_bounds = array<i64: 2>, scalar_prefetch = 0 : i64, scratch_operands = 0 : i64, tpu.core_type = #tpu.core_type<tc>, window_params = [{transform_indices = @transform_0, window_bounds = array<i64: 4, 16, 128>}, {pipeline_mode = #tpu.pipeline_mode<synchronous>, transform_indices = @transform_1, window_bounds = array<i64: 1, 128>}, {pipeline_mode = #tpu.pipeline_mode<synchronous>, transform_indices = @transform_2, window_bounds = array<i64: 1, 128>}, {pipeline_mode = #tpu.pipeline_mode<synchronous>, transform_indices = @transform_3, window_bounds = array<i64: 128, 384>}, {pipeline_mode = #tpu.pipeline_mode<synchronous>, transform_indices = @transform_4, window_bounds = array<i64: 1, 384>}, {pipeline_mode = #tpu.pipeline_mode<synchronous>, transform_indices = @transform_5, window_bounds = array<i64: 128, 128>}, {pipeline_mode = #tpu.pipeline_mode<synchronous>, transform_indices = @transform_6, window_bounds = array<i64: 1, 128>}, {pipeline_mode = #tpu.pipeline_mode<synchronous>, transform_indices = @transform_7, window_bounds = array<i64: 1, 128>}, {pipeline_mode = #tpu.pipeline_mode<synchronous>, transform_indices = @transform_8, window_bounds = array<i64: 1, 128>}, {pipeline_mode = #tpu.pipeline_mode<synchronous>, transform_indices = @transform_9, window_bounds = array<i64: 128, 512>}, {pipeline_mode = #tpu.pipeline_mode<synchronous>, transform_indices = @transform_10, window_bounds = array<i64: 1, 512>}, {pipeline_mode = #tpu.pipeline_mode<synchronous>, transform_indices = @transform_11, window_bounds = array<i64: 512, 128>}, {pipeline_mode = #tpu.pipeline_mode<synchronous>, transform_indices = @transform_12, window_bounds = array<i64: 1, 128>}, {transform_indices = @transform_13, window_bounds = array<i64: 4, 16, 128>}]} {
    %c0 = arith.constant 0 : index
    %c0_0 = arith.constant 0 : index
    %c0_1 = arith.constant 0 : index
    %0 = vector.load %arg1[%c0, %c0_0, %c0_1] : memref<4x16x128xf32, #tpu.memory_space<vmem>>, vector<4x16x128xf32>
    %1 = vector.shape_cast %0 : vector<4x16x128xf32> to vector<64x128xf32>
    %c0_2 = arith.constant 0 : index
    %c0_3 = arith.constant 0 : index
    %2 = vector.load %arg2[%c0_2, %c0_3] : memref<1x128xf32, #tpu.memory_space<vmem>>, vector<1x128xf32>
    %c0_4 = arith.constant 0 : index
    %c0_5 = arith.constant 0 : index
    %3 = vector.load %arg3[%c0_4, %c0_5] : memref<1x128xf32, #tpu.memory_space<vmem>>, vector<1x128xf32>
    %cst = arith.constant dense<0.000000e+00> : vector<64xf32>
    %4 = vector.multi_reduction <add>, %1, %cst [1] : vector<64x128xf32> to vector<64xf32>
    %5 = vector.shape_cast %4 : vector<64xf32> to vector<64x1xf32>
    %cst_6 = arith.constant 1.280000e+02 : f32
    %6 = vector.broadcast %cst_6 : f32 to vector<64x1xf32>
    %7 = arith.divf %5, %6 : vector<64x1xf32>
    %8 = vector.broadcast %7 : vector<64x1xf32> to vector<64x128xf32>
    %9 = arith.subf %1, %8 : vector<64x128xf32>
    %10 = arith.mulf %9, %9 : vector<64x128xf32>
    %cst_7 = arith.constant dense<0.000000e+00> : vector<64xf32>
    %11 = vector.multi_reduction <add>, %10, %cst_7 [1] : vector<64x128xf32> to vector<64xf32>
    %12 = vector.shape_cast %11 : vector<64xf32> to vector<64x1xf32>
    %cst_8 = arith.constant 1.280000e+02 : f32
    %13 = vector.broadcast %cst_8 : f32 to vector<64x1xf32>
    %14 = arith.divf %12, %13 : vector<64x1xf32>
    %15 = vector.broadcast %7 : vector<64x1xf32> to vector<64x128xf32>
    %16 = arith.subf %1, %15 : vector<64x128xf32>
    %cst_9 = arith.constant 9.99999974E-6 : f32
    %17 = vector.broadcast %cst_9 : f32 to vector<64x1xf32>
    %18 = arith.addf %14, %17 : vector<64x1xf32>
    %19 = math.rsqrt %18 : vector<64x1xf32>
    %20 = vector.broadcast %19 : vector<64x1xf32> to vector<64x128xf32>
    %21 = arith.mulf %16, %20 : vector<64x128xf32>
    %22 = vector.broadcast %2 : vector<1x128xf32> to vector<64x128xf32>
    %23 = arith.mulf %21, %22 : vector<64x128xf32>
    %24 = vector.broadcast %3 : vector<1x128xf32> to vector<64x128xf32>
    %25 = arith.addf %23, %24 : vector<64x128xf32>
    %26 = arith.truncf %25 : vector<64x128xf32> to vector<64x128xbf16>
    %c0_10 = arith.constant 0 : index
    %c0_11 = arith.constant 0 : index
    %27 = vector.load %arg4[%c0_10, %c0_11] : memref<128x384xbf16, #tpu.memory_space<vmem>>, vector<128x384xbf16>
    %cst_12 = arith.constant dense<0.000000e+00> : vector<64x384xf32>
    %28 = tpu.matmul %26, %27, %cst_12 {dimension_numbers = #tpu.dot_dimension_numbers<[1], [0], [0], [1], [0, 0, 1, 1], [], []>} : vector<64x128xbf16>, vector<128x384xbf16>, vector<64x384xf32> -> vector<64x384xf32>
    %c0_13 = arith.constant 0 : index
    %c0_14 = arith.constant 0 : index
    %29 = vector.load %arg5[%c0_13, %c0_14] : memref<1x384xf32, #tpu.memory_space<vmem>>, vector<1x384xf32>
    %30 = vector.broadcast %29 : vector<1x384xf32> to vector<64x384xf32>
    %31 = arith.addf %28, %30 : vector<64x384xf32>
    %32 = vector.extract_strided_slice %31 {offsets = [0, 0], sizes = [64, 128], strides = [1, 1]} : vector<64x384xf32> to vector<64x128xf32>
    %33 = vector.shape_cast %32 : vector<64x128xf32> to vector<4x16x128xf32>
    %34 = vector.extract_strided_slice %31 {offsets = [0, 128], sizes = [64, 128], strides = [1, 1]} : vector<64x384xf32> to vector<64x128xf32>
    %35 = vector.shape_cast %34 : vector<64x128xf32> to vector<4x16x128xf32>
    %36 = arith.truncf %35 : vector<4x16x128xf32> to vector<4x16x128xbf16>
    %37 = vector.extract_strided_slice %31 {offsets = [0, 256], sizes = [64, 128], strides = [1, 1]} : vector<64x384xf32> to vector<64x128xf32>
    %38 = vector.shape_cast %37 : vector<64x128xf32> to vector<4x16x128xf32>
    %39 = tpu.iota {dimensions = array<i32: 2>} : vector<1x1x128xi32>
    %cst_15 = arith.constant 0.000000e+00 : f32
    %40 = vector.broadcast %cst_15 : f32 to vector<4x16x128xf32>
    %c0_i32 = arith.constant 0 : i32
    %41 = vector.broadcast %c0_i32 : i32 to vector<1x1x128xi32>
    %42 = arith.cmpi sge, %39, %41 : vector<1x1x128xi32>
    %c64_i32 = arith.constant 64 : i32
    %43 = vector.broadcast %c64_i32 : i32 to vector<1x1x128xi32>
    %44 = arith.cmpi slt, %39, %43 : vector<1x1x128xi32>
    %45 = arith.andi %42, %44 : vector<1x1x128xi1>
    %46 = arith.extui %45 : vector<1x1x128xi1> to vector<1x1x128xi32>
    %47 = arith.sitofp %46 : vector<1x1x128xi32> to vector<1x1x128xf32>
    %48 = vector.broadcast %47 : vector<1x1x128xf32> to vector<4x16x128xf32>
    %49 = arith.mulf %33, %48 : vector<4x16x128xf32>
    %50 = arith.truncf %49 : vector<4x16x128xf32> to vector<4x16x128xbf16>
    "tpu.trace_start"() <{level = 10 : i32, message = "wtd,wsd->wts"}> : () -> ()
    %cst_16 = arith.constant dense<0.000000e+00> : vector<4x16x16xf32>
    %51 = tpu.matmul %50, %36, %cst_16 {dimension_numbers = #tpu.dot_dimension_numbers<[2], [2], [1], [1], [0, 0, 0, 1, 1, 1], [0], [0]>} : vector<4x16x128xbf16>, vector<4x16x128xbf16>, vector<4x16x16xf32> -> vector<4x16x16xf32>
    "tpu.trace_stop"() : () -> ()
    %cst_17 = arith.constant 1.250000e-01 : f32
    %52 = vector.broadcast %cst_17 : f32 to vector<4x16x16xf32>
    %53 = arith.mulf %51, %52 : vector<4x16x16xf32>
    %cst_18 = arith.constant dense<0xFF800000> : vector<4x16xf32>
    %54 = vector.multi_reduction <maximumf>, %53, %cst_18 [2] : vector<4x16x16xf32> to vector<4x16xf32>
    %55 = vector.shape_cast %54 : vector<4x16xf32> to vector<4x16x1xf32>
    %56 = vector.broadcast %55 : vector<4x16x1xf32> to vector<4x16x16xf32>
    %57 = arith.subf %53, %56 : vector<4x16x16xf32>
    %58 = math.exp %57 : vector<4x16x16xf32>
    %cst_19 = arith.constant dense<0.000000e+00> : vector<4x16xf32>
    %59 = vector.multi_reduction <add>, %58, %cst_19 [2] : vector<4x16x16xf32> to vector<4x16xf32>
    %60 = vector.shape_cast %59 : vector<4x16xf32> to vector<4x16x1xf32>
    %61 = tpu.reciprocal %60 {approx = true} : vector<4x16x1xf32> -> vector<4x16x1xf32>
    %62 = vector.broadcast %61 : vector<4x16x1xf32> to vector<4x16x16xf32>
    %63 = arith.mulf %58, %62 : vector<4x16x16xf32>
    %64 = arith.truncf %63 : vector<4x16x16xf32> to vector<4x16x16xbf16>
    %65 = vector.broadcast %47 : vector<1x1x128xf32> to vector<4x16x128xf32>
    %66 = arith.mulf %38, %65 : vector<4x16x128xf32>
    %67 = arith.truncf %66 : vector<4x16x128xf32> to vector<4x16x128xbf16>
    "tpu.trace_start"() <{level = 10 : i32, message = "wts,wsd->wtd"}> : () -> ()
    %cst_20 = arith.constant dense<0.000000e+00> : vector<4x16x128xf32>
    %68 = tpu.matmul %64, %67, %cst_20 {dimension_numbers = #tpu.dot_dimension_numbers<[2], [1], [1], [2], [0, 0, 0, 1, 1, 2], [0], [0]>} : vector<4x16x16xbf16>, vector<4x16x128xbf16>, vector<4x16x128xf32> -> vector<4x16x128xf32>
    "tpu.trace_stop"() : () -> ()
    %69 = arith.addf %40, %68 : vector<4x16x128xf32>
    %c64_i32_21 = arith.constant 64 : i32
    %70 = vector.broadcast %c64_i32_21 : i32 to vector<1x1x128xi32>
    %71 = arith.cmpi sge, %39, %70 : vector<1x1x128xi32>
    %c128_i32 = arith.constant 128 : i32
    %72 = vector.broadcast %c128_i32 : i32 to vector<1x1x128xi32>
    %73 = arith.cmpi slt, %39, %72 : vector<1x1x128xi32>
    %74 = arith.andi %71, %73 : vector<1x1x128xi1>
    %75 = arith.extui %74 : vector<1x1x128xi1> to vector<1x1x128xi32>
    %76 = arith.sitofp %75 : vector<1x1x128xi32> to vector<1x1x128xf32>
    %77 = vector.broadcast %76 : vector<1x1x128xf32> to vector<4x16x128xf32>
    %78 = arith.mulf %33, %77 : vector<4x16x128xf32>
    %79 = arith.truncf %78 : vector<4x16x128xf32> to vector<4x16x128xbf16>
    "tpu.trace_start"() <{level = 10 : i32, message = "wtd,wsd->wts"}> : () -> ()
    %cst_22 = arith.constant dense<0.000000e+00> : vector<4x16x16xf32>
    %80 = tpu.matmul %79, %36, %cst_22 {dimension_numbers = #tpu.dot_dimension_numbers<[2], [2], [1], [1], [0, 0, 0, 1, 1, 1], [0], [0]>} : vector<4x16x128xbf16>, vector<4x16x128xbf16>, vector<4x16x16xf32> -> vector<4x16x16xf32>
    "tpu.trace_stop"() : () -> ()
    %cst_23 = arith.constant 1.250000e-01 : f32
    %81 = vector.broadcast %cst_23 : f32 to vector<4x16x16xf32>
    %82 = arith.mulf %80, %81 : vector<4x16x16xf32>
    %cst_24 = arith.constant dense<0xFF800000> : vector<4x16xf32>
    %83 = vector.multi_reduction <maximumf>, %82, %cst_24 [2] : vector<4x16x16xf32> to vector<4x16xf32>
    %84 = vector.shape_cast %83 : vector<4x16xf32> to vector<4x16x1xf32>
    %85 = vector.broadcast %84 : vector<4x16x1xf32> to vector<4x16x16xf32>
    %86 = arith.subf %82, %85 : vector<4x16x16xf32>
    %87 = math.exp %86 : vector<4x16x16xf32>
    %cst_25 = arith.constant dense<0.000000e+00> : vector<4x16xf32>
    %88 = vector.multi_reduction <add>, %87, %cst_25 [2] : vector<4x16x16xf32> to vector<4x16xf32>
    %89 = vector.shape_cast %88 : vector<4x16xf32> to vector<4x16x1xf32>
    %90 = tpu.reciprocal %89 {approx = true} : vector<4x16x1xf32> -> vector<4x16x1xf32>
    %91 = vector.broadcast %90 : vector<4x16x1xf32> to vector<4x16x16xf32>
    %92 = arith.mulf %87, %91 : vector<4x16x16xf32>
    %93 = arith.truncf %92 : vector<4x16x16xf32> to vector<4x16x16xbf16>
    %94 = vector.broadcast %76 : vector<1x1x128xf32> to vector<4x16x128xf32>
    %95 = arith.mulf %38, %94 : vector<4x16x128xf32>
    %96 = arith.truncf %95 : vector<4x16x128xf32> to vector<4x16x128xbf16>
    "tpu.trace_start"() <{level = 10 : i32, message = "wts,wsd->wtd"}> : () -> ()
    %cst_26 = arith.constant dense<0.000000e+00> : vector<4x16x128xf32>
    %97 = tpu.matmul %93, %96, %cst_26 {dimension_numbers = #tpu.dot_dimension_numbers<[2], [1], [1], [2], [0, 0, 0, 1, 1, 2], [0], [0]>} : vector<4x16x16xbf16>, vector<4x16x128xbf16>, vector<4x16x128xf32> -> vector<4x16x128xf32>
    "tpu.trace_stop"() : () -> ()
    %98 = arith.addf %69, %97 : vector<4x16x128xf32>
    %99 = vector.shape_cast %98 : vector<4x16x128xf32> to vector<64x128xf32>
    %100 = arith.truncf %99 : vector<64x128xf32> to vector<64x128xbf16>
    %c0_27 = arith.constant 0 : index
    %c0_28 = arith.constant 0 : index
    %101 = vector.load %arg6[%c0_27, %c0_28] : memref<128x128xbf16, #tpu.memory_space<vmem>>, vector<128x128xbf16>
    %cst_29 = arith.constant dense<0.000000e+00> : vector<64x128xf32>
    %102 = tpu.matmul %100, %101, %cst_29 {dimension_numbers = #tpu.dot_dimension_numbers<[1], [0], [0], [1], [0, 0, 1, 1], [], []>} : vector<64x128xbf16>, vector<128x128xbf16>, vector<64x128xf32> -> vector<64x128xf32>
    %c0_30 = arith.constant 0 : index
    %c0_31 = arith.constant 0 : index
    %103 = vector.load %arg7[%c0_30, %c0_31] : memref<1x128xf32, #tpu.memory_space<vmem>>, vector<1x128xf32>
    %104 = vector.broadcast %103 : vector<1x128xf32> to vector<64x128xf32>
    %105 = arith.addf %102, %104 : vector<64x128xf32>
    %106 = arith.addf %1, %105 : vector<64x128xf32>
    %c0_32 = arith.constant 0 : index
    %c0_33 = arith.constant 0 : index
    %107 = vector.load %arg8[%c0_32, %c0_33] : memref<1x128xf32, #tpu.memory_space<vmem>>, vector<1x128xf32>
    %c0_34 = arith.constant 0 : index
    %c0_35 = arith.constant 0 : index
    %108 = vector.load %arg9[%c0_34, %c0_35] : memref<1x128xf32, #tpu.memory_space<vmem>>, vector<1x128xf32>
    %cst_36 = arith.constant dense<0.000000e+00> : vector<64xf32>
    %109 = vector.multi_reduction <add>, %106, %cst_36 [1] : vector<64x128xf32> to vector<64xf32>
    %110 = vector.shape_cast %109 : vector<64xf32> to vector<64x1xf32>
    %cst_37 = arith.constant 1.280000e+02 : f32
    %111 = vector.broadcast %cst_37 : f32 to vector<64x1xf32>
    %112 = arith.divf %110, %111 : vector<64x1xf32>
    %113 = vector.broadcast %112 : vector<64x1xf32> to vector<64x128xf32>
    %114 = arith.subf %106, %113 : vector<64x128xf32>
    %115 = arith.mulf %114, %114 : vector<64x128xf32>
    %cst_38 = arith.constant dense<0.000000e+00> : vector<64xf32>
    %116 = vector.multi_reduction <add>, %115, %cst_38 [1] : vector<64x128xf32> to vector<64xf32>
    %117 = vector.shape_cast %116 : vector<64xf32> to vector<64x1xf32>
    %cst_39 = arith.constant 1.280000e+02 : f32
    %118 = vector.broadcast %cst_39 : f32 to vector<64x1xf32>
    %119 = arith.divf %117, %118 : vector<64x1xf32>
    %120 = vector.broadcast %112 : vector<64x1xf32> to vector<64x128xf32>
    %121 = arith.subf %106, %120 : vector<64x128xf32>
    %cst_40 = arith.constant 9.99999974E-6 : f32
    %122 = vector.broadcast %cst_40 : f32 to vector<64x1xf32>
    %123 = arith.addf %119, %122 : vector<64x1xf32>
    %124 = math.rsqrt %123 : vector<64x1xf32>
    %125 = vector.broadcast %124 : vector<64x1xf32> to vector<64x128xf32>
    %126 = arith.mulf %121, %125 : vector<64x128xf32>
    %127 = vector.broadcast %107 : vector<1x128xf32> to vector<64x128xf32>
    %128 = arith.mulf %126, %127 : vector<64x128xf32>
    %129 = vector.broadcast %108 : vector<1x128xf32> to vector<64x128xf32>
    %130 = arith.addf %128, %129 : vector<64x128xf32>
    %131 = arith.truncf %130 : vector<64x128xf32> to vector<64x128xbf16>
    %c0_41 = arith.constant 0 : index
    %c0_42 = arith.constant 0 : index
    %132 = vector.load %arg10[%c0_41, %c0_42] : memref<128x512xbf16, #tpu.memory_space<vmem>>, vector<128x512xbf16>
    %cst_43 = arith.constant dense<0.000000e+00> : vector<64x512xf32>
    %133 = tpu.matmul %131, %132, %cst_43 {dimension_numbers = #tpu.dot_dimension_numbers<[1], [0], [0], [1], [0, 0, 1, 1], [], []>} : vector<64x128xbf16>, vector<128x512xbf16>, vector<64x512xf32> -> vector<64x512xf32>
    %c0_44 = arith.constant 0 : index
    %c0_45 = arith.constant 0 : index
    %134 = vector.load %arg11[%c0_44, %c0_45] : memref<1x512xf32, #tpu.memory_space<vmem>>, vector<1x512xf32>
    %135 = vector.broadcast %134 : vector<1x512xf32> to vector<64x512xf32>
    %136 = arith.addf %133, %135 : vector<64x512xf32>
    %137 = arith.mulf %136, %136 : vector<64x512xf32>
    %138 = arith.mulf %136, %137 : vector<64x512xf32>
    %cst_46 = arith.constant 4.471500e-02 : f32
    %139 = vector.broadcast %cst_46 : f32 to vector<64x512xf32>
    %140 = arith.mulf %139, %138 : vector<64x512xf32>
    %141 = arith.addf %136, %140 : vector<64x512xf32>
    %cst_47 = arith.constant 0.797884583 : f32
    %142 = vector.broadcast %cst_47 : f32 to vector<64x512xf32>
    %143 = arith.mulf %142, %141 : vector<64x512xf32>
    %144 = math.tanh %143 : vector<64x512xf32>
    %cst_48 = arith.constant 1.000000e+00 : f32
    %145 = vector.broadcast %cst_48 : f32 to vector<64x512xf32>
    %146 = arith.addf %145, %144 : vector<64x512xf32>
    %cst_49 = arith.constant 5.000000e-01 : f32
    %147 = vector.broadcast %cst_49 : f32 to vector<64x512xf32>
    %148 = arith.mulf %147, %146 : vector<64x512xf32>
    %149 = arith.mulf %136, %148 : vector<64x512xf32>
    %150 = arith.truncf %149 : vector<64x512xf32> to vector<64x512xbf16>
    %c0_50 = arith.constant 0 : index
    %c0_51 = arith.constant 0 : index
    %151 = vector.load %arg12[%c0_50, %c0_51] : memref<512x128xbf16, #tpu.memory_space<vmem>>, vector<512x128xbf16>
    %cst_52 = arith.constant dense<0.000000e+00> : vector<64x128xf32>
    %152 = tpu.matmul %150, %151, %cst_52 {dimension_numbers = #tpu.dot_dimension_numbers<[1], [0], [0], [1], [0, 0, 1, 1], [], []>} : vector<64x512xbf16>, vector<512x128xbf16>, vector<64x128xf32> -> vector<64x128xf32>
    %c0_53 = arith.constant 0 : index
    %c0_54 = arith.constant 0 : index
    %153 = vector.load %arg13[%c0_53, %c0_54] : memref<1x128xf32, #tpu.memory_space<vmem>>, vector<1x128xf32>
    %154 = vector.broadcast %153 : vector<1x128xf32> to vector<64x128xf32>
    %155 = arith.addf %152, %154 : vector<64x128xf32>
    %156 = arith.addf %106, %155 : vector<64x128xf32>
    %157 = vector.shape_cast %156 : vector<64x128xf32> to vector<4x16x128xf32>
    %c0_55 = arith.constant 0 : index
    %c0_56 = arith.constant 0 : index
    %c0_57 = arith.constant 0 : index
    %158 = vector.load %arg14[%c0_55, %c0_56, %c0_57] : memref<4x16x128xf32, #tpu.memory_space<vmem>>, vector<4x16x128xf32>
    tpu.vector_store %arg14[%c0_55, %c0_56, %c0_57], %157 {strides = array<i32>} : memref<4x16x128xf32, #tpu.memory_space<vmem>>, vector<4x16x128xf32>,
    return
  }
  func.func @transform_0(%arg0: i32) -> (i32, i32, i32) {
    %c0_i32 = arith.constant 0 : i32
    %c0_i32_0 = arith.constant 0 : i32
    %c0_i32_1 = arith.constant 0 : i32
    return %arg0, %c0_i32, %c0_i32_0 : i32, i32, i32
  }
  func.func @transform_1(%arg0: i32) -> (i32, i32) {
    %c0_i32 = arith.constant 0 : i32
    %c0_i32_0 = arith.constant 0 : i32
    %c0_i32_1 = arith.constant 0 : i32
    return %c0_i32, %c0_i32_0 : i32, i32
  }
  func.func @transform_2(%arg0: i32) -> (i32, i32) {
    %c0_i32 = arith.constant 0 : i32
    %c0_i32_0 = arith.constant 0 : i32
    %c0_i32_1 = arith.constant 0 : i32
    return %c0_i32, %c0_i32_0 : i32, i32
  }
  func.func @transform_3(%arg0: i32) -> (i32, i32) {
    %c0_i32 = arith.constant 0 : i32
    %c0_i32_0 = arith.constant 0 : i32
    %c0_i32_1 = arith.constant 0 : i32
    return %c0_i32, %c0_i32_0 : i32, i32
  }
  func.func @transform_4(%arg0: i32) -> (i32, i32) {
    %c0_i32 = arith.constant 0 : i32
    %c0_i32_0 = arith.constant 0 : i32
    %c0_i32_1 = arith.constant 0 : i32
    return %c0_i32, %c0_i32_0 : i32, i32
  }
  func.func @transform_5(%arg0: i32) -> (i32, i32) {
    %c0_i32 = arith.constant 0 : i32
    %c0_i32_0 = arith.constant 0 : i32
    %c0_i32_1 = arith.constant 0 : i32
    return %c0_i32, %c0_i32_0 : i32, i32
  }
  func.func @transform_6(%arg0: i32) -> (i32, i32) {
    %c0_i32 = arith.constant 0 : i32
    %c0_i32_0 = arith.constant 0 : i32
    %c0_i32_1 = arith.constant 0 : i32
    return %c0_i32, %c0_i32_0 : i32, i32
  }
  func.func @transform_7(%arg0: i32) -> (i32, i32) {
    %c0_i32 = arith.constant 0 : i32
    %c0_i32_0 = arith.constant 0 : i32
    %c0_i32_1 = arith.constant 0 : i32
    return %c0_i32, %c0_i32_0 : i32, i32
  }
  func.func @transform_8(%arg0: i32) -> (i32, i32) {
    %c0_i32 = arith.constant 0 : i32
    %c0_i32_0 = arith.constant 0 : i32
    %c0_i32_1 = arith.constant 0 : i32
    return %c0_i32, %c0_i32_0 : i32, i32
  }
  func.func @transform_9(%arg0: i32) -> (i32, i32) {
    %c0_i32 = arith.constant 0 : i32
    %c0_i32_0 = arith.constant 0 : i32
    %c0_i32_1 = arith.constant 0 : i32
    return %c0_i32, %c0_i32_0 : i32, i32
  }
  func.func @transform_10(%arg0: i32) -> (i32, i32) {
    %c0_i32 = arith.constant 0 : i32
    %c0_i32_0 = arith.constant 0 : i32
    %c0_i32_1 = arith.constant 0 : i32
    return %c0_i32, %c0_i32_0 : i32, i32
  }
  func.func @transform_11(%arg0: i32) -> (i32, i32) {
    %c0_i32 = arith.constant 0 : i32
    %c0_i32_0 = arith.constant 0 : i32
    %c0_i32_1 = arith.constant 0 : i32
    return %c0_i32, %c0_i32_0 : i32, i32
  }
  func.func @transform_12(%arg0: i32) -> (i32, i32) {
    %c0_i32 = arith.constant 0 : i32
    %c0_i32_0 = arith.constant 0 : i32
    %c0_i32_1 = arith.constant 0 : i32
    return %c0_i32, %c0_i32_0 : i32, i32
  }
  func.func @transform_13(%arg0: i32) -> (i32, i32, i32) {
    %c0_i32 = arith.constant 0 : i32
    %c0_i32_0 = arith.constant 0 : i32
    %c0_i32_1 = arith.constant 0 : i32
    return %arg0, %c0_i32, %c0_i32_0 : i32, i32, i32
  }
}

module attributes {stable_mosaic.version = 11 : i64} {
  func.func @_head_kernel(%arg0: memref<128x128xf32, #tpu.memory_space<vmem>>, %arg1: memref<1x128xf32, #tpu.memory_space<vmem>>, %arg2: memref<1x128xf32, #tpu.memory_space<vmem>>, %arg3: memref<128x10xbf16, #tpu.memory_space<vmem>>, %arg4: memref<1x10xf32, #tpu.memory_space<vmem>>, %arg5: memref<2x10xf32, #tpu.memory_space<vmem>>) attributes {dimension_semantics = [], scalar_prefetch = 0 : i64, scratch_operands = 0 : i64, tpu.core_type = #tpu.core_type<tc>} {
    %c0 = arith.constant 0 : index
    %c0_0 = arith.constant 0 : index
    %0 = vector.load %arg0[%c0, %c0_0] : memref<128x128xf32, #tpu.memory_space<vmem>>, vector<128x128xf32>
    %c0_1 = arith.constant 0 : index
    %c0_2 = arith.constant 0 : index
    %1 = vector.load %arg1[%c0_1, %c0_2] : memref<1x128xf32, #tpu.memory_space<vmem>>, vector<1x128xf32>
    %c0_3 = arith.constant 0 : index
    %c0_4 = arith.constant 0 : index
    %2 = vector.load %arg2[%c0_3, %c0_4] : memref<1x128xf32, #tpu.memory_space<vmem>>, vector<1x128xf32>
    %cst = arith.constant dense<0.000000e+00> : vector<128xf32>
    %3 = vector.multi_reduction <add>, %0, %cst [1] : vector<128x128xf32> to vector<128xf32>
    %4 = vector.shape_cast %3 : vector<128xf32> to vector<128x1xf32>
    %cst_5 = arith.constant 1.280000e+02 : f32
    %5 = vector.broadcast %cst_5 : f32 to vector<128x1xf32>
    %6 = arith.divf %4, %5 : vector<128x1xf32>
    %7 = vector.broadcast %6 : vector<128x1xf32> to vector<128x128xf32>
    %8 = arith.subf %0, %7 : vector<128x128xf32>
    %9 = arith.mulf %8, %8 : vector<128x128xf32>
    %cst_6 = arith.constant dense<0.000000e+00> : vector<128xf32>
    %10 = vector.multi_reduction <add>, %9, %cst_6 [1] : vector<128x128xf32> to vector<128xf32>
    %11 = vector.shape_cast %10 : vector<128xf32> to vector<128x1xf32>
    %cst_7 = arith.constant 1.280000e+02 : f32
    %12 = vector.broadcast %cst_7 : f32 to vector<128x1xf32>
    %13 = arith.divf %11, %12 : vector<128x1xf32>
    %14 = vector.broadcast %6 : vector<128x1xf32> to vector<128x128xf32>
    %15 = arith.subf %0, %14 : vector<128x128xf32>
    %cst_8 = arith.constant 9.99999974E-6 : f32
    %16 = vector.broadcast %cst_8 : f32 to vector<128x1xf32>
    %17 = arith.addf %13, %16 : vector<128x1xf32>
    %18 = math.rsqrt %17 : vector<128x1xf32>
    %19 = vector.broadcast %18 : vector<128x1xf32> to vector<128x128xf32>
    %20 = arith.mulf %15, %19 : vector<128x128xf32>
    %21 = vector.broadcast %1 : vector<1x128xf32> to vector<128x128xf32>
    %22 = arith.mulf %20, %21 : vector<128x128xf32>
    %23 = vector.broadcast %2 : vector<1x128xf32> to vector<128x128xf32>
    %24 = arith.addf %22, %23 : vector<128x128xf32>
    %25 = vector.shape_cast %24 : vector<128x128xf32> to vector<2x64x128xf32>
    %cst_9 = arith.constant dense<0.000000e+00> : vector<2x128xf32>
    %26 = vector.multi_reduction <add>, %25, %cst_9 [1] : vector<2x64x128xf32> to vector<2x128xf32>
    %cst_10 = arith.constant 6.400000e+01 : f32
    %27 = vector.broadcast %cst_10 : f32 to vector<2x128xf32>
    %28 = arith.divf %26, %27 : vector<2x128xf32>
    %29 = arith.truncf %28 : vector<2x128xf32> to vector<2x128xbf16>
    %c0_11 = arith.constant 0 : index
    %c0_12 = arith.constant 0 : index
    %30 = vector.load %arg3[%c0_11, %c0_12] : memref<128x10xbf16, #tpu.memory_space<vmem>>, vector<128x10xbf16>
    %cst_13 = arith.constant dense<0.000000e+00> : vector<2x10xf32>
    %31 = tpu.matmul %29, %30, %cst_13 {dimension_numbers = #tpu.dot_dimension_numbers<[1], [0], [0], [1], [0, 0, 1, 1], [], []>} : vector<2x128xbf16>, vector<128x10xbf16>, vector<2x10xf32> -> vector<2x10xf32>
    %c0_14 = arith.constant 0 : index
    %c0_15 = arith.constant 0 : index
    %32 = vector.load %arg4[%c0_14, %c0_15] : memref<1x10xf32, #tpu.memory_space<vmem>>, vector<1x10xf32>
    %33 = vector.broadcast %32 : vector<1x10xf32> to vector<2x10xf32>
    %34 = arith.addf %31, %33 : vector<2x10xf32>
    %c0_16 = arith.constant 0 : index
    %c0_17 = arith.constant 0 : index
    %35 = vector.load %arg5[%c0_16, %c0_17] : memref<2x10xf32, #tpu.memory_space<vmem>>, vector<2x10xf32>
    tpu.vector_store %arg5[%c0_16, %c0_17], %34 {strides = array<i32>} : memref<2x10xf32, #tpu.memory_space<vmem>>, vector<2x10xf32>,
    return
  }
}

</mosaic_0001>

<llo_original>
// kernel: maxvit_finetune_forward.4
$region0: #{maxvit_finetune_forward.4}
  #allocation0 [shape = 'u32[]', space=smem, size = 0x4, offset = 0x4, fixed_abs, tag = 'smem constant byte address 0x4 - core index']
  #allocation1 [shape = 'u32[144,128]{1,0:T(1,128)}', space=vmem, size = 0x12000, scoped, tag = 'internal scratch']
  %s0 = inlined_call_operand.vmem [shape: f32[128,27], index: 0, kind: input, shape index: {}]
  %s1 = inlined_call_operand.vmem [shape: bf16[27,128], index: 1, kind: input, shape index: {}]
  %s2 = inlined_call_operand.vmem [shape: f32[1,128], index: 2, kind: input, shape index: {}]
  %s3 = inlined_call_operand.vmem [shape: f32[128,128], index: 3, kind: output, shape index: {}]
  %s4 = sld [smem:[#allocation0]]
  $region45: #{maxvit_finetune_forward.4} parent=0
    _
  %s6 = ssub.s32 1, %s4
  %s7 = scalar_select 0, %s6, %s4
  loop: start=0, step=1, limit=4
  $region2: #{maxvit_finetune_forward.4} parent=0 // loop_pre_header
    _
  $region3: #{maxvit_finetune_forward.4} parent=0 // loop_header
    %s9 = sphi 0, %s13
    %p10 = scmp.ge.s32.totalorder %s9, 4
    %s19 = sphi 0, %s21
    %s22 = sphi 0, %s19
    %s23 = sphi 0, %s22
    %s39 = sphi 0, %s23
    %s43 = sphi 0, %s43
    %s45 = sphi 0, %s43
    %s46 = sphi 0, %s45
    %s60 = sphi 0, %s46
    %s64 = sphi 0, %s64
    %s66 = sphi 0, %s64
    %s67 = sphi 0, %s66
    %s81 = sphi 0, %s67
    %s87 = sphi 0, %s89
    %s90 = sphi 0, %s87
    %s91 = sphi 0, %s90
    %s107 = sphi 0, %s91
  $region4: #{maxvit_finetune_forward.4} parent=0 // loop_header_branch
    %12 = sbr.rel (%p10) target = $region8
  $region5: #{maxvit_finetune_forward.4} parent=0 // loop_body
    %s14 = ssub.s32 %s9, 1
    %s15 = ssub.s32 %s9, 2
    %s16 = sadd.s32 %s9, 1
    %s17 = ssub.s32 %s9, %s16
    %p18 = scmp.eq.s32.totalorder %s17, 0
    %s20 = sadd.s32 %s19, 1
    %s21 = scalar_select %p18, %s19, %s20
    %p24 = pneg %p18
    %p25 = scmp.eq.s32.totalorder %s9, 1
    %p26 = por %p24, %p25
    %p27 = scmp.ne.s32.totalorder %s19, %s22
    %p28 = scmp.eq.s32.totalorder %s9, 0
    %p29 = por %p27, %p28
    %p30 = scmp.ne.s32.totalorder %s19, %s22
    %p31 = scmp.eq.s32.totalorder %s14, 1
    %p32 = por %p30, %p31
    %p33 = scmp.ne.s32.totalorder %s22, %s23
    %p34 = scmp.eq.s32.totalorder %s14, 0
    %p35 = por %p33, %p34
    %p36 = scmp.ne.s32.totalorder %s22, %s23
    %p37 = scmp.eq.s32.totalorder %s15, 1
    %p38 = por %p36, %p37
    %p40 = scmp.ne.s32.totalorder %s23, %s39
    %p41 = scmp.eq.s32.totalorder %s15, 0
    %p42 = por %p40, %p41
    %s44 = sadd.s32 %s43, 1
    %p47 = scmp.eq.s32.totalorder %s9, 1
    %p48 = scmp.ne.s32.totalorder %s43, %s45
    %p49 = scmp.eq.s32.totalorder %s9, 0
    %p50 = por %p48, %p49
    %p51 = scmp.ne.s32.totalorder %s43, %s45
    %p52 = scmp.eq.s32.totalorder %s14, 1
    %p53 = por %p51, %p52
    %p54 = scmp.ne.s32.totalorder %s45, %s46
    %p55 = scmp.eq.s32.totalorder %s14, 0
    %p56 = por %p54, %p55
    %p57 = scmp.ne.s32.totalorder %s45, %s46
    %p58 = scmp.eq.s32.totalorder %s15, 1
    %p59 = por %p57, %p58
    %p61 = scmp.ne.s32.totalorder %s46, %s60
    %p62 = scmp.eq.s32.totalorder %s15, 0
    %p63 = por %p61, %p62
    %s65 = sadd.s32 %s64, 1
    %p68 = scmp.eq.s32.totalorder %s9, 1
    %p69 = scmp.ne.s32.totalorder %s64, %s66
    %p70 = scmp.eq.s32.totalorder %s9, 0
    %p71 = por %p69, %p70
    %p72 = scmp.ne.s32.totalorder %s64, %s66
    %p73 = scmp.eq.s32.totalorder %s14, 1
    %p74 = por %p72, %p73
    %p75 = scmp.ne.s32.totalorder %s66, %s67
    %p76 = scmp.eq.s32.totalorder %s14, 0
    %p77 = por %p75, %p76
    %p78 = scmp.ne.s32.totalorder %s66, %s67
    %p79 = scmp.eq.s32.totalorder %s15, 1
    %p80 = por %p78, %p79
    %p82 = scmp.ne.s32.totalorder %s67, %s81
    %p83 = scmp.eq.s32.totalorder %s15, 0
    %p84 = por %p82, %p83
    %s85 = ssub.s32 %s9, %s16
    %p86 = scmp.eq.s32.totalorder %s85, 0
    %s88 = sadd.s32 %s87, 1
    %s89 = scalar_select %p86, %s87, %s88
    %p92 = pneg %p86
    %p93 = scmp.eq.s32.totalorder %s9, 1
    %p94 = por %p92, %p93
    %p95 = scmp.ne.s32.totalorder %s87, %s90
    %p96 = scmp.eq.s32.totalorder %s9, 0
    %p97 = por %p95, %p96
    %p98 = scmp.ne.s32.totalorder %s87, %s90
    %p99 = scmp.eq.s32.totalorder %s14, 1
    %p100 = por %p98, %p99
    %p101 = scmp.ne.s32.totalorder %s90, %s91
    %p102 = scmp.eq.s32.totalorder %s14, 0
    %p103 = por %p101, %p102
    %p104 = scmp.ne.s32.totalorder %s90, %s91
    %p105 = scmp.eq.s32.totalorder %s15, 1
    %p106 = por %p104, %p105
    %p108 = scmp.ne.s32.totalorder %s91, %s107
    %p109 = scmp.eq.s32.totalorder %s15, 0
    %p110 = por %p108, %p109
    %p111 = scmp.le.s32.totalorder 1, %s9
    %p112 = scmp.lt.s32.totalorder %s9, 3
    %p113 = pnand %p111, %p112
    %p114 = pneg %p113
    // Predicated region
    $region9: #{maxvit_finetune_forward.4} parent=5 // pred_check
      _
    $region10: #{maxvit_finetune_forward.4} parent=5 // pred_check_branch
      %116 = sbr.rel (%p113) target = $region12
    $region11: #{maxvit_finetune_forward.4} parent=5 // pred_region
      %s117 = ssub.s32 %s9, 1
      // Predicated region
      $region13: #{maxvit_finetune_forward.4} parent=11 // pred_check
        %p118 = pneg %p56
      $region14: #{maxvit_finetune_forward.4} parent=11 // pred_check_branch
        %120 = sbr.rel (%p118) target = $region16
      $region15: #{maxvit_finetune_forward.4} parent=11 // pred_region
        _
      $region16: #{maxvit_finetune_forward.4} parent=11 // pred_fallthru
        _
      // Predicated region
      $region17: #{maxvit_finetune_forward.4} parent=11 // pred_check
        %p121 = pneg %p77
      $region18: #{maxvit_finetune_forward.4} parent=11 // pred_check_branch
        %123 = sbr.rel (%p121) target = $region20
      $region19: #{maxvit_finetune_forward.4} parent=11 // pred_region
        _
      $region20: #{maxvit_finetune_forward.4} parent=11 // pred_fallthru
        _
    $region12: #{maxvit_finetune_forward.4} parent=5 // pred_fallthru
      _
    %p124 = scmp.lt.s32.totalorder %s9, 2
    // Predicated region
    $region21: #{maxvit_finetune_forward.4} parent=5 // pred_check
      %p125 = pneg %p124
    $region22: #{maxvit_finetune_forward.4} parent=5 // pred_check_branch
      %127 = sbr.rel (%p125) target = $region24
    $region23: #{maxvit_finetune_forward.4} parent=5 // pred_region
      // Predicated region
      $region25: #{maxvit_finetune_forward.4} parent=23 // pred_check
        %p128 = pneg %p29
      $region26: #{maxvit_finetune_forward.4} parent=23 // pred_check_branch
        %130 = sbr.rel (%p128) target = $region28
      $region27: #{maxvit_finetune_forward.4} parent=23 // pred_region
        %s131 = smul.u32 8, %s9
        %p132 = scmp.lt.s32.totalorder %s131, 15
        %s133 = scalar_select %p132, %s131, 15
        %s134 = smul.addr %s133, 8
        %s135 = scalar_lea.vmem %s0, %s134
        %s136 = smul.u32 8, %s9
      $region28: #{maxvit_finetune_forward.4} parent=23 // pred_fallthru
        _
    $region24: #{maxvit_finetune_forward.4} parent=5 // pred_fallthru
      _
    %p137 = scmp.le.s32.totalorder 1, %s9
    %p138 = scmp.lt.s32.totalorder %s9, 3
    %p139 = pnand %p137, %p138
    %p140 = pneg %p139
    // Predicated region
    $region29: #{maxvit_finetune_forward.4} parent=5 // pred_check
      _
    $region30: #{maxvit_finetune_forward.4} parent=5 // pred_check_branch
      %142 = sbr.rel (%p139) target = $region32
    $region31: #{maxvit_finetune_forward.4} parent=5 // pred_region
      %s143 = ssub.s32 %s9, 1
      %s144 = smul.u32 8, %s14
      %p145 = scmp.lt.s32.totalorder %s144, 15
      %s146 = scalar_select %p145, %s144, 15
      %s147 = smul.addr %s146, 8
      %s148 = scalar_lea.vmem %s0, %s147
      %p149 = pneg %p35
      %p150 = pneg %p32
      %p151 = pneg %p56
      %p152 = pneg %p53
      %p153 = pneg %p77
      %p154 = pneg %p74
      %p155 = pneg %p103
      %p156 = pneg %p100
      %s157 = smul.u32 8, %s14
      %p158 = scmp.lt.s32.totalorder %s157, 15
      %s159 = scalar_select %p158, %s157, 15
      %s160 = smul.addr %s159, 8
      %s161 = scalar_lea.vmem %s3, %s160
      %s162 = smul.u32 8, %s14
      %p163 = scmp.lt.s32.totalorder %s162, 15
      %s164 = scalar_select %p163, %s162, 15
      %s165 = smul.addr %s164, 8
      %s166 = scalar_lea.vmem %s0, %s165
      %s167 = smul.u32 8, %s14
      %s168 = smul.u32 8, %s14
      %p169 = scmp.lt.s32.totalorder %s168, 15
      %s170 = scalar_select %p169, %s168, 15
      %s171 = smul.addr %s170, 8
      %s172 = scalar_lea.vmem %s3, %s171
      %s173 = smul.u32 8, %s14
      %v175 = vld [vmem:[%s166] sm:$0xff]
      %v176 = vld [vmem:[%s166 + $0x8] sm:$0xff]
      %v177 = vld [vmem:[%s166 + $0x10] sm:$0xff]
      %v178 = vld [vmem:[%s166 + $0x18] sm:$0xff]
      %v179 = vld [vmem:[%s166 + $0x20] sm:$0xff]
      %v180 = vld [vmem:[%s166 + $0x28] sm:$0xff]
      %v181 = vld [vmem:[%s166 + $0x30] sm:$0xff]
      %v182 = vld [vmem:[%s166 + $0x38] sm:$0xff]
      %v183 = vpack.c.bf16 %v176, %v175
      %v184 = vpack.c.bf16 %v178, %v177
      %v185 = vpack.c.bf16 %v180, %v179
      %v186 = vpack.c.bf16 %v182, %v181
      %v187 = vld [vmem:[%s1] sm:$0xf]
      %v188 = vld [vmem:[%s1 + $0x4] sm:$0xf]
      %v189 = vld [vmem:[%s1 + $0x8] sm:$0xf]
      %v190 = vld [vmem:[%s1 + $0xc] sm:$0x3]
      %v191 = vld [vmem:[%s2] sm:$0x1]
      %v193 = vlaneseq
      %v194 = vshrl.u32 %v193, 7
      %v195 = vsub.s32 0, %v194
      %v196 = vrot.slane %v191, %v195
      %v202 = vunpack.c.l.b16 %v187
      %v203 = vunpack.c.l.b16 %v188
      %v204 = vunpack.c.l.b16 %v189
      %v205 = vunpack.c.l.b16 %v190
      %v206 = vpack.c.b16 %v203, %v202
      %v207 = vpack.c.b16 %v205, %v204
      %vm209 = vcmask 220160
      %v211 = vsel %vm209, %v183, 0
      %v214 = vsel %vm209, %v184, 0
      %v217 = vsel %vm209, %v185, 0
      %v220 = vsel %vm209, %v186, 0
      %vm222 = vcmask 1044480
      %vm223 = vcmask 1045504
      %v224 = vsel %vm222, 4294967295, 65535
      %v225 = vsel %vm223, %v224, 0
      %v227 = vand.u32 %v207, %v225
      %229 = vmatprep.subr.bf16.mxu0 0
      %230 = vmatpush1.bf16.msra.mxu0 %v206
      %231 = vmatprep.subr.bf16.mxu0 0
      %232 = vmatpush1.bf16.msra.mxu0 %v227
      %233 = vmatprep.subr.bf16.mxu0 0
      %234 = vmatpush1.bf16.msra.mxu0 0
      %235 = vmatprep.subr.bf16.mxu0 0
      %236 = vmatpush1.bf16.msra.mxu0 0
      %237 = vmatprep.subr.bf16.mxu0 0
      %238 = vmatpush1.bf16.msra.mxu0 0
      %239 = vmatprep.subr.bf16.mxu0 0
      %240 = vmatpush1.bf16.msra.mxu0 0
      %241 = vmatprep.subr.bf16.mxu0 0
      %242 = vmatpush1.bf16.msra.mxu0 0
      %243 = vmatprep.subr.bf16.mxu0 0
      %244 = vmatpush1.bf16.msra.mxu0 0
      %245 = vmatprep.subr.bf16.mxu0 0
      %246 = vmatpush1.bf16.msra.mxu0 0
      %247 = vmatprep.subr.bf16.mxu0 0
      %248 = vmatpush1.bf16.msra.mxu0 0
      %249 = vmatprep.subr.bf16.mxu0 0
      %250 = vmatpush1.bf16.msra.mxu0 0
      %251 = vmatprep.subr.bf16.mxu0 0
      %252 = vmatpush1.bf16.msra.mxu0 0
      %253 = vmatprep.subr.bf16.mxu0 0
      %254 = vmatpush1.bf16.msra.mxu0 0
      %255 = vmatprep.subr.bf16.mxu0 0
      %256 = vmatpush1.bf16.msra.mxu0 0
      %257 = vmatprep.subr.bf16.mxu0 0
      %258 = vmatpush1.bf16.msra.mxu0 0
      %259 = vmatprep.subr.bf16.mxu0 0
      %260 = vmatpush1.bf16.msra.mxu0 0
      %261 = vmatprep.mubr.bf16.mxu0 0
      %262 = vmatmul.mubr.bf16.gmra.mrb[0].mxu0 %v211
      %v263 = vpop.f32.mrb[0].mxu0
      %v264 = vadd.f32 %v196, %v263
      %v265 = vpop.f32.mrb[0].mxu0
      %v266 = vpop.f32.mrb[0].mxu0
      %v267 = vadd.f32 %v196, %v266
      %v268 = vpop.f32.mrb[0].mxu0
      %269 = vmatprep.mubr.bf16.mxu0 0
      %270 = vmatmul.mubr.bf16.gmra.mrb[0].mxu0 %v214
      %v271 = vpop.f32.mrb[0].mxu0
      %v272 = vadd.f32 %v196, %v271
      %v273 = vpop.f32.mrb[0].mxu0
      %v274 = vpop.f32.mrb[0].mxu0
      %v275 = vadd.f32 %v196, %v274
      %v276 = vpop.f32.mrb[0].mxu0
      %277 = vmatprep.mubr.bf16.mxu0 0
      %278 = vmatmul.mubr.bf16.gmra.mrb[0].mxu0 %v217
      %v279 = vpop.f32.mrb[0].mxu0
      %v280 = vadd.f32 %v196, %v279
      %v281 = vpop.f32.mrb[0].mxu0
      %v282 = vpop.f32.mrb[0].mxu0
      %v283 = vadd.f32 %v196, %v282
      %v284 = vpop.f32.mrb[0].mxu0
      %285 = vmatprep.mubr.bf16.mxu0 0
      %286 = vmatmul.mubr.bf16.gmra.mrb[0].mxu0 %v220
      %v287 = vpop.f32.mrb[0].mxu0
      %v288 = vadd.f32 %v196, %v287
      %v289 = vpop.f32.mrb[0].mxu0
      %v290 = vpop.f32.mrb[0].mxu0
      %v291 = vadd.f32 %v196, %v290
      %v292 = vpop.f32.mrb[0].mxu0
      %293 = vdwg.mxu0
      %294 = vst [vmem:[%s172] sm:$0xff] %v264
      %295 = vst [vmem:[%s172 + $0x8] sm:$0xff] %v267
      %296 = vst [vmem:[%s172 + $0x10] sm:$0xff] %v272
      %297 = vst [vmem:[%s172 + $0x18] sm:$0xff] %v275
      %298 = vst [vmem:[%s172 + $0x20] sm:$0xff] %v280
      %299 = vst [vmem:[%s172 + $0x28] sm:$0xff] %v283
      %300 = vst [vmem:[%s172 + $0x30] sm:$0xff] %v288
      %301 = vst [vmem:[%s172 + $0x38] sm:$0xff] %v291
      %s302 = smul.u32 8, %s14
      %p303 = scmp.lt.s32.totalorder %s302, 15
      %s304 = scalar_select %p303, %s302, 15
      %s305 = smul.addr %s304, 8
      %s306 = scalar_lea.vmem %s3, %s305
      // Predicated region
      $region33: #{maxvit_finetune_forward.4} parent=31 // pred_check
        %p307 = pneg %p100
      $region34: #{maxvit_finetune_forward.4} parent=31 // pred_check_branch
        %309 = sbr.rel (%p307) target = $region36
      $region35: #{maxvit_finetune_forward.4} parent=31 // pred_region
        %s310 = smul.u32 8, %s14
      $region36: #{maxvit_finetune_forward.4} parent=31 // pred_fallthru
        _
    $region32: #{maxvit_finetune_forward.4} parent=5 // pred_fallthru
      _
    %p311 = scmp.le.s32.totalorder 2, %s9
    // Predicated region
    $region37: #{maxvit_finetune_forward.4} parent=5 // pred_check
      %p312 = pneg %p311
    $region38: #{maxvit_finetune_forward.4} parent=5 // pred_check_branch
      %314 = sbr.rel (%p312) target = $region40
    $region39: #{maxvit_finetune_forward.4} parent=5 // pred_region
      %s315 = ssub.s32 %s9, 2
      // Predicated region
      $region41: #{maxvit_finetune_forward.4} parent=39 // pred_check
        %p316 = pneg %p106
      $region42: #{maxvit_finetune_forward.4} parent=39 // pred_check_branch
        %318 = sbr.rel (%p316) target = $region44
      $region43: #{maxvit_finetune_forward.4} parent=39 // pred_region
        %s319 = smul.u32 8, %s15
        %p320 = scmp.lt.s32.totalorder %s319, 15
        %s321 = scalar_select %p320, %s319, 15
        %s322 = smul.addr %s321, 8
        %s323 = scalar_lea.vmem %s3, %s322
      $region44: #{maxvit_finetune_forward.4} parent=39 // pred_fallthru
        _
    $region40: #{maxvit_finetune_forward.4} parent=5 // pred_fallthru
      _
  $region6: #{maxvit_finetune_forward.4} parent=0 // loop_footer
    %s13 = sadd.s32 1, %s9
  $region7: #{maxvit_finetune_forward.4} parent=0 // loop_footer_branch
    %8 = sbr.rel target = $region3
  $region8: #{maxvit_finetune_forward.4} parent=0 // loop_exit
    _

// kernel: maxvit_finetune_forward.7
$region0: #{maxvit_finetune_forward.7}
  #allocation0 [shape = 'u32[]', space=smem, size = 0x4, offset = 0x4, fixed_abs, tag = 'smem constant byte address 0x4 - core index']
  #allocation1 [shape = 'u32[144,128]{1,0:T(1,128)}', space=vmem, size = 0x12000, scoped, tag = 'internal scratch']
  %s0 = inlined_call_operand.vmem [shape: f32[128,128], index: 0, kind: input, shape index: {}]
  %s1 = inlined_call_operand.vmem [shape: f32[1,128], index: 1, kind: input, shape index: {}]
  %s2 = inlined_call_operand.vmem [shape: f32[1,128], index: 2, kind: input, shape index: {}]
  %s3 = inlined_call_operand.vmem [shape: bf16[128,10], index: 3, kind: input, shape index: {}]
  %s4 = inlined_call_operand.vmem [shape: f32[1,10], index: 4, kind: input, shape index: {}]
  %s5 = inlined_call_operand.hbm [shape: f32[2,10], index: 5, kind: output, shape index: {}]
  %s6 = sld [smem:[#allocation0]]
  $region30: #{maxvit_finetune_forward.7} parent=0
    _
  %s8 = ssub.s32 1, %s6
  %s9 = scalar_select 0, %s8, %s6
  $region1: #{maxvit_finetune_forward.7} parent=0
    #allocation2 [shape = 'u8[1024]{0}', space=vmem, size = 0x400, scoped, tag = 'output window, operand 0, single buffered']
    #allocation3 [shape = 's32[1]{0}', space=sflag, size = 0x4, scoped, tag = 'scoped memory for maxvit_finetune_forward.7']
    %10 = vsyncpa [#allocation3], 0
    // Predicated region
    $region2: #{maxvit_finetune_forward.7} parent=1 // pred_check
      _
    $region3: #{maxvit_finetune_forward.7} parent=1 // pred_check_branch
      %12 = sbr.rel (0) target = $region5
    $region4: #{maxvit_finetune_forward.7} parent=1 // pred_region
      _
    $region5: #{maxvit_finetune_forward.7} parent=1 // pred_fallthru
      _
    // Predicated region
    $region6: #{maxvit_finetune_forward.7} parent=1 // pred_check
      _
    $region7: #{maxvit_finetune_forward.7} parent=1 // pred_check_branch
      %14 = sbr.rel (0) target = $region9
    $region8: #{maxvit_finetune_forward.7} parent=1 // pred_region
      _
    $region9: #{maxvit_finetune_forward.7} parent=1 // pred_fallthru
      _
    // Predicated region
    $region10: #{maxvit_finetune_forward.7} parent=1 // pred_check
      _
    $region11: #{maxvit_finetune_forward.7} parent=1 // pred_check_branch
      %16 = sbr.rel (0) target = $region13
    $region12: #{maxvit_finetune_forward.7} parent=1 // pred_region
      _
    $region13: #{maxvit_finetune_forward.7} parent=1 // pred_fallthru
      _
    // Predicated region
    $region14: #{maxvit_finetune_forward.7} parent=1 // pred_check
      _
    $region15: #{maxvit_finetune_forward.7} parent=1 // pred_check_branch
      %18 = sbr.rel (0) target = $region17
    $region16: #{maxvit_finetune_forward.7} parent=1 // pred_region
      _
    $region17: #{maxvit_finetune_forward.7} parent=1 // pred_fallthru
      _
    // Predicated region
    $region18: #{maxvit_finetune_forward.7} parent=1 // pred_check
      _
    $region19: #{maxvit_finetune_forward.7} parent=1 // pred_check_branch
      %20 = sbr.rel (0) target = $region21
    $region20: #{maxvit_finetune_forward.7} parent=1 // pred_region
      _
    $region21: #{maxvit_finetune_forward.7} parent=1 // pred_fallthru
      _
    %v22 = vld [vmem:[%s0] sm:$0xff]
    %v23 = vld [vmem:[%s0 + $0x8] sm:$0xff]
    %v24 = vld [vmem:[%s0 + $0x10] sm:$0xff]
    %v25 = vld [vmem:[%s0 + $0x18] sm:$0xff]
    %v26 = vld [vmem:[%s0 + $0x20] sm:$0xff]
    %v27 = vld [vmem:[%s0 + $0x28] sm:$0xff]
    %v28 = vld [vmem:[%s0 + $0x30] sm:$0xff]
    %v29 = vld [vmem:[%s0 + $0x38] sm:$0xff]
    %v30 = vld [vmem:[%s0 + $0x40] sm:$0xff]
    %v31 = vld [vmem:[%s0 + $0x48] sm:$0xff]
    %v32 = vld [vmem:[%s0 + $0x50] sm:$0xff]
    %v33 = vld [vmem:[%s0 + $0x58] sm:$0xff]
    %v34 = vld [vmem:[%s0 + $0x60] sm:$0xff]
    %v35 = vld [vmem:[%s0 + $0x68] sm:$0xff]
    %v36 = vld [vmem:[%s0 + $0x70] sm:$0xff]
    %v37 = vld [vmem:[%s0 + $0x78] sm:$0xff]
    %v38 = vld [vmem:[%s1] sm:$0x1]
    %v39 = vld [vmem:[%s2] sm:$0x1]
    %40 = vadd.xlane.f32.xlu0 %v22
    %v41 = vpop.xlane.xlu0 %40
    %42 = vadd.xlane.f32.xlu0 %v23
    %v43 = vpop.xlane.xlu0 %42
    %44 = vadd.xlane.f32.xlu0 %v24
    %v45 = vpop.xlane.xlu0 %44
    %46 = vadd.xlane.f32.xlu0 %v25
    %v47 = vpop.xlane.xlu0 %46
    %48 = vadd.xlane.f32.xlu0 %v26
    %v49 = vpop.xlane.xlu0 %48
    %50 = vadd.xlane.f32.xlu0 %v27
    %v51 = vpop.xlane.xlu0 %50
    %52 = vadd.xlane.f32.xlu0 %v28
    %v53 = vpop.xlane.xlu0 %52
    %54 = vadd.xlane.f32.xlu0 %v29
    %v55 = vpop.xlane.xlu0 %54
    %56 = vadd.xlane.f32.xlu0 %v30
    %v57 = vpop.xlane.xlu0 %56
    %58 = vadd.xlane.f32.xlu0 %v31
    %v59 = vpop.xlane.xlu0 %58
    %60 = vadd.xlane.f32.xlu0 %v32
    %v61 = vpop.xlane.xlu0 %60
    %62 = vadd.xlane.f32.xlu0 %v33
    %v63 = vpop.xlane.xlu0 %62
    %64 = vadd.xlane.f32.xlu0 %v34
    %v65 = vpop.xlane.xlu0 %64
    %66 = vadd.xlane.f32.xlu0 %v35
    %v67 = vpop.xlane.xlu0 %66
    %68 = vadd.xlane.f32.xlu0 %v36
    %v69 = vpop.xlane.xlu0 %68
    %70 = vadd.xlane.f32.xlu0 %v37
    %v71 = vpop.xlane.xlu0 %70
    %v72 = vrcp.pop 128.0
    %v73 = vmul.f32 %v41, %v72
    %v74 = vmul.f32 %v43, %v72
    %v75 = vmul.f32 %v45, %v72
    %v76 = vmul.f32 %v47, %v72
    %v77 = vmul.f32 %v49, %v72
    %v78 = vmul.f32 %v51, %v72
    %v79 = vmul.f32 %v53, %v72
    %v80 = vmul.f32 %v55, %v72
    %v81 = vmul.f32 %v57, %v72
    %v82 = vmul.f32 %v59, %v72
    %v83 = vmul.f32 %v61, %v72
    %v84 = vmul.f32 %v63, %v72
    %v85 = vmul.f32 %v65, %v72
    %v86 = vmul.f32 %v67, %v72
    %v87 = vmul.f32 %v69, %v72
    %v88 = vmul.f32 %v71, %v72
    %v89 = vsub.f32 %v22, %v73
    %v90 = vsub.f32 %v23, %v74
    %v91 = vsub.f32 %v24, %v75
    %v92 = vsub.f32 %v25, %v76
    %v93 = vsub.f32 %v26, %v77
    %v94 = vsub.f32 %v27, %v78
    %v95 = vsub.f32 %v28, %v79
    %v96 = vsub.f32 %v29, %v80
    %v97 = vsub.f32 %v30, %v81
    %v98 = vsub.f32 %v31, %v82
    %v99 = vsub.f32 %v32, %v83
    %v100 = vsub.f32 %v33, %v84
    %v101 = vsub.f32 %v34, %v85
    %v102 = vsub.f32 %v35, %v86
    %v103 = vsub.f32 %v36, %v87
    %v104 = vsub.f32 %v37, %v88
    %v105 = vmul.f32 %v89, %v89
    %v106 = vmul.f32 %v90, %v90
    %v107 = vmul.f32 %v91, %v91
    %v108 = vmul.f32 %v92, %v92
    %v109 = vmul.f32 %v93, %v93
    %v110 = vmul.f32 %v94, %v94
    %v111 = vmul.f32 %v95, %v95
    %v112 = vmul.f32 %v96, %v96
    %v113 = vmul.f32 %v97, %v97
    %v114 = vmul.f32 %v98, %v98
    %v115 = vmul.f32 %v99, %v99
    %v116 = vmul.f32 %v100, %v100
    %v117 = vmul.f32 %v101, %v101
    %v118 = vmul.f32 %v102, %v102
    %v119 = vmul.f32 %v103, %v103
    %v120 = vmul.f32 %v104, %v104
    %121 = vadd.xlane.f32.xlu0 %v105
    %v122 = vpop.xlane.xlu0 %121
    %123 = vadd.xlane.f32.xlu0 %v106
    %v124 = vpop.xlane.xlu0 %123
    %125 = vadd.xlane.f32.xlu0 %v107
    %v126 = vpop.xlane.xlu0 %125
    %127 = vadd.xlane.f32.xlu0 %v108
    %v128 = vpop.xlane.xlu0 %127
    %129 = vadd.xlane.f32.xlu0 %v109
    %v130 = vpop.xlane.xlu0 %129
    %131 = vadd.xlane.f32.xlu0 %v110
    %v132 = vpop.xlane.xlu0 %131
    %133 = vadd.xlane.f32.xlu0 %v111
    %v134 = vpop.xlane.xlu0 %133
    %135 = vadd.xlane.f32.xlu0 %v112
    %v136 = vpop.xlane.xlu0 %135
    %137 = vadd.xlane.f32.xlu0 %v113
    %v138 = vpop.xlane.xlu0 %137
    %139 = vadd.xlane.f32.xlu0 %v114
    %v140 = vpop.xlane.xlu0 %139
    %141 = vadd.xlane.f32.xlu0 %v115
    %v142 = vpop.xlane.xlu0 %141
    %143 = vadd.xlane.f32.xlu0 %v116
    %v144 = vpop.xlane.xlu0 %143
    %145 = vadd.xlane.f32.xlu0 %v117
    %v146 = vpop.xlane.xlu0 %145
    %147 = vadd.xlane.f32.xlu0 %v118
    %v148 = vpop.xlane.xlu0 %147
    %149 = vadd.xlane.f32.xlu0 %v119
    %v150 = vpop.xlane.xlu0 %149
    %151 = vadd.xlane.f32.xlu0 %v120
    %v152 = vpop.xlane.xlu0 %151
    %v153 = vmul.f32 %v122, %v72
    %v154 = vmul.f32 %v124, %v72
    %v155 = vmul.f32 %v126, %v72
    %v156 = vmul.f32 %v128, %v72
    %v157 = vmul.f32 %v130, %v72
    %v158 = vmul.f32 %v132, %v72
    %v159 = vmul.f32 %v134, %v72
    %v160 = vmul.f32 %v136, %v72
    %v161 = vmul.f32 %v138, %v72
    %v162 = vmul.f32 %v140, %v72
    %v163 = vmul.f32 %v142, %v72
    %v164 = vmul.f32 %v144, %v72
    %v165 = vmul.f32 %v146, %v72
    %v166 = vmul.f32 %v148, %v72
    %v167 = vmul.f32 %v150, %v72
    %v168 = vmul.f32 %v152, %v72
    %v169 = vadd.f32 %v153, 1e-05
    %v170 = vadd.f32 %v154, 1e-05
    %v171 = vadd.f32 %v155, 1e-05
    %v172 = vadd.f32 %v156, 1e-05
    %v173 = vadd.f32 %v157, 1e-05
    %v174 = vadd.f32 %v158, 1e-05
    %v175 = vadd.f32 %v159, 1e-05
    %v176 = vadd.f32 %v160, 1e-05
    %v177 = vadd.f32 %v161, 1e-05
    %v178 = vadd.f32 %v162, 1e-05
    %v179 = vadd.f32 %v163, 1e-05
    %v180 = vadd.f32 %v164, 1e-05
    %v181 = vadd.f32 %v165, 1e-05
    %v182 = vadd.f32 %v166, 1e-05
    %v183 = vadd.f32 %v167, 1e-05
    %v184 = vadd.f32 %v168, 1e-05
    %v185 = vrsqrt.pop %v169
    %v186 = vrsqrt.pop %v170
    %v187 = vrsqrt.pop %v171
    %v188 = vrsqrt.pop %v172
    %v189 = vrsqrt.pop %v173
    %v190 = vrsqrt.pop %v174
    %v191 = vrsqrt.pop %v175
    %v192 = vrsqrt.pop %v176
    %v193 = vrsqrt.pop %v177
    %v194 = vrsqrt.pop %v178
    %v195 = vrsqrt.pop %v179
    %v196 = vrsqrt.pop %v180
    %v197 = vrsqrt.pop %v181
    %v198 = vrsqrt.pop %v182
    %v199 = vrsqrt.pop %v183
    %v200 = vrsqrt.pop %v184
    %v201 = vmul.f32 %v89, %v185
    %v202 = vmul.f32 %v90, %v186
    %v203 = vmul.f32 %v91, %v187
    %v204 = vmul.f32 %v92, %v188
    %v205 = vmul.f32 %v93, %v189
    %v206 = vmul.f32 %v94, %v190
    %v207 = vmul.f32 %v95, %v191
    %v208 = vmul.f32 %v96, %v192
    %v209 = vmul.f32 %v97, %v193
    %v210 = vmul.f32 %v98, %v194
    %v211 = vmul.f32 %v99, %v195
    %v212 = vmul.f32 %v100, %v196
    %v213 = vmul.f32 %v101, %v197
    %v214 = vmul.f32 %v102, %v198
    %v215 = vmul.f32 %v103, %v199
    %v216 = vmul.f32 %v104, %v200
    %v218 = vlaneseq
    %v219 = vshrl.u32 %v218, 7
    %v220 = vsub.s32 0, %v219
    %v221 = vrot.slane %v38, %v220
    %v223 = vmul.f32 %v201, %v221
    %v224 = vmul.f32 %v202, %v221
    %v225 = vmul.f32 %v203, %v221
    %v226 = vmul.f32 %v204, %v221
    %v227 = vmul.f32 %v205, %v221
    %v228 = vmul.f32 %v206, %v221
    %v229 = vmul.f32 %v207, %v221
    %v230 = vmul.f32 %v208, %v221
    %v231 = vmul.f32 %v209, %v221
    %v232 = vmul.f32 %v210, %v221
    %v233 = vmul.f32 %v211, %v221
    %v234 = vmul.f32 %v212, %v221
    %v235 = vmul.f32 %v213, %v221
    %v236 = vmul.f32 %v214, %v221
    %v237 = vmul.f32 %v215, %v221
    %v238 = vmul.f32 %v216, %v221
    %v240 = vlaneseq
    %v241 = vshrl.u32 %v240, 7
    %v242 = vsub.s32 0, %v241
    %v243 = vrot.slane %v39, %v242
    %v245 = vadd.f32 %v223, %v243
    %v246 = vadd.f32 %v224, %v243
    %v247 = vadd.f32 %v225, %v243
    %v248 = vadd.f32 %v226, %v243
    %v249 = vadd.f32 %v227, %v243
    %v250 = vadd.f32 %v228, %v243
    %v251 = vadd.f32 %v229, %v243
    %v252 = vadd.f32 %v230, %v243
    %v253 = vadd.f32 %v231, %v243
    %v254 = vadd.f32 %v232, %v243
    %v255 = vadd.f32 %v233, %v243
    %v256 = vadd.f32 %v234, %v243
    %v257 = vadd.f32 %v235, %v243
    %v258 = vadd.f32 %v236, %v243
    %v259 = vadd.f32 %v237, %v243
    %v260 = vadd.f32 %v238, %v243
    %v261 = vadd.f32 %v245, %v246
    %v262 = vadd.f32 %v261, %v247
    %v263 = vadd.f32 %v262, %v248
    %v264 = vadd.f32 %v263, %v249
    %v265 = vadd.f32 %v264, %v250
    %v266 = vadd.f32 %v265, %v251
    %v267 = vadd.f32 %v266, %v252
    %v268 = vrot.slane %v267, 4
    %v269 = vadd.f32 %v267, %v268
    %v270 = vrot.slane %v269, 2
    %v271 = vadd.f32 %v269, %v270
    %v272 = vrot.slane %v271, 1
    %v273 = vadd.f32 %v271, %v272
    %v274 = vadd.f32 %v253, %v254
    %v275 = vadd.f32 %v274, %v255
    %v276 = vadd.f32 %v275, %v256
    %v277 = vadd.f32 %v276, %v257
    %v278 = vadd.f32 %v277, %v258
    %v279 = vadd.f32 %v278, %v259
    %v280 = vadd.f32 %v279, %v260
    %v281 = vrot.slane %v280, 4
    %v282 = vadd.f32 %v280, %v281
    %v283 = vrot.slane %v282, 2
    %v284 = vadd.f32 %v282, %v283
    %v285 = vrot.slane %v284, 1
    %v286 = vadd.f32 %v284, %v285
    %v287 = vrcp.pop 64.0
    %v288 = vmul.f32 %v273, %v287
    %v289 = vmul.f32 %v286, %v287
    %v290 = vpack.c.bf16 %v288, %v288
    %v291 = vpack.c.bf16 %v289, %v289
    %v292 = vld [vmem:[%s3] sm:$0xf]
    %v293 = vld [vmem:[%s3 + $0x4] sm:$0xf]
    %v294 = vld [vmem:[%s3 + $0x8] sm:$0xf]
    %v295 = vld [vmem:[%s3 + $0xc] sm:$0xf]
    %v296 = vld [vmem:[%s3 + $0x10] sm:$0xf]
    %v297 = vld [vmem:[%s3 + $0x14] sm:$0xf]
    %v298 = vld [vmem:[%s3 + $0x18] sm:$0xf]
    %v299 = vld [vmem:[%s3 + $0x1c] sm:$0xf]
    %v300 = vld [vmem:[%s3 + $0x20] sm:$0xf]
    %v301 = vld [vmem:[%s3 + $0x24] sm:$0xf]
    %v302 = vld [vmem:[%s3 + $0x28] sm:$0xf]
    %v303 = vld [vmem:[%s3 + $0x2c] sm:$0xf]
    %v304 = vld [vmem:[%s3 + $0x30] sm:$0xf]
    %v305 = vld [vmem:[%s3 + $0x34] sm:$0xf]
    %v306 = vld [vmem:[%s3 + $0x38] sm:$0xf]
    %v307 = vld [vmem:[%s3 + $0x3c] sm:$0xf]
    %v308 = vld [vmem:[%s4] sm:$0x1]
    %v310 = vlaneseq
    %v311 = vshrl.u32 %v310, 7
    %v312 = vsub.s32 0, %v311
    %v313 = vrot.slane %v308, %v312
    %v317 = vunpack.c.l.b16 %v290
    %v318 = vunpack.c.l.b16 %v291
    %vm319 = vcmask 1041409
    %v320 = vsel %vm319, %v318, %v317
    %v321 = vpack.c.b16 %v320, %v320
    %v339 = vunpack.c.l.b16 %v292
    %v340 = vunpack.c.l.b16 %v293
    %v341 = vunpack.c.l.b16 %v294
    %v342 = vunpack.c.l.b16 %v295
    %v343 = vunpack.c.l.b16 %v296
    %v344 = vunpack.c.l.b16 %v297
    %v345 = vunpack.c.l.b16 %v298
    %v346 = vunpack.c.l.b16 %v299
    %v347 = vunpack.c.l.b16 %v300
    %v348 = vunpack.c.l.b16 %v301
    %v349 = vunpack.c.l.b16 %v302
    %v350 = vunpack.c.l.b16 %v303
    %v351 = vunpack.c.l.b16 %v304
    %v352 = vunpack.c.l.b16 %v305
    %v353 = vunpack.c.l.b16 %v306
    %v354 = vunpack.c.l.b16 %v307
    %v355 = vpack.c.b16 %v340, %v339
    %v356 = vpack.c.b16 %v342, %v341
    %v357 = vpack.c.b16 %v344, %v343
    %v358 = vpack.c.b16 %v346, %v345
    %v359 = vpack.c.b16 %v348, %v347
    %v360 = vpack.c.b16 %v350, %v349
    %v361 = vpack.c.b16 %v352, %v351
    %v362 = vpack.c.b16 %v354, %v353
    %371 = vmatprep.subr.bf16.mxu0 0
    %372 = vmatpush1.bf16.msra.mxu0 %v355
    %373 = vmatprep.subr.bf16.mxu0 0
    %374 = vmatpush1.bf16.msra.mxu0 %v356
    %375 = vmatprep.subr.bf16.mxu0 0
    %376 = vmatpush1.bf16.msra.mxu0 %v357
    %377 = vmatprep.subr.bf16.mxu0 0
    %378 = vmatpush1.bf16.msra.mxu0 %v358
    %379 = vmatprep.subr.bf16.mxu0 0
    %380 = vmatpush1.bf16.msra.mxu0 %v359
    %381 = vmatprep.subr.bf16.mxu0 0
    %382 = vmatpush1.bf16.msra.mxu0 %v360
    %383 = vmatprep.subr.bf16.mxu0 0
    %384 = vmatpush1.bf16.msra.mxu0 %v361
    %385 = vmatprep.subr.bf16.mxu0 0
    %386 = vmatpush1.bf16.msra.mxu0 %v362
    %387 = vmatprep.subr.bf16.mxu0 0
    %388 = vmatpush1.bf16.msra.mxu0 0
    %389 = vmatprep.subr.bf16.mxu0 0
    %390 = vmatpush1.bf16.msra.mxu0 0
    %391 = vmatprep.subr.bf16.mxu0 0
    %392 = vmatpush1.bf16.msra.mxu0 0
    %393 = vmatprep.subr.bf16.mxu0 0
    %394 = vmatpush1.bf16.msra.mxu0 0
    %395 = vmatprep.subr.bf16.mxu0 0
    %396 = vmatpush1.bf16.msra.mxu0 0
    %397 = vmatprep.subr.bf16.mxu0 0
    %398 = vmatpush1.bf16.msra.mxu0 0
    %399 = vmatprep.subr.bf16.mxu0 0
    %400 = vmatpush1.bf16.msra.mxu0 0
    %401 = vmatprep.subr.bf16.mxu0 0
    %402 = vmatpush1.bf16.msra.mxu0 0
    %403 = vmatprep.mubr.bf16.mxu0 0
    %404 = vmatmul.mubr.bf16.gmra.mrb[0].mxu0 %v321
    %v405 = vpop.f32.mrb[0].mxu0
    %v406 = vadd.f32 %v313, %v405
    %v407 = vpop.f32.mrb[0].mxu0
    %v408 = vpop.f32.mrb[0].mxu0
    %v409 = vpop.f32.mrb[0].mxu0
    %410 = vdwg.mxu0
    %vm411 = vcmask 74752
    %412 = vst.msk [vmem:[#allocation2] sm:$0x3] %vm411, %v406
    // Predicated region
    $region22: #{maxvit_finetune_forward.7} parent=1 // pred_check
      _
    $region23: #{maxvit_finetune_forward.7} parent=1 // pred_check_branch
      %414 = sbr.rel (0) target = $region25
    $region24: #{maxvit_finetune_forward.7} parent=1 // pred_region
      %s416 = ssub.s32 32, 32
      %417 = vsyncadd [#allocation3], %s416
      %s419 = sshll.u32 [#allocation2], 4
      %s420 = int_to_ptr.vmem [resolvable:$true] %s419
      %422 = dma.vmem_to_hbm [thread:$0]  %s420, 32, %s5, [#allocation3]
    $region25: #{maxvit_finetune_forward.7} parent=1 // pred_fallthru
      _
    // Predicated region
    $region26: #{maxvit_finetune_forward.7} parent=1 // pred_check
      _
    $region27: #{maxvit_finetune_forward.7} parent=1 // pred_check_branch
      %424 = sbr.rel (0) target = $region29
    $region28: #{maxvit_finetune_forward.7} parent=1 // pred_region
      %425 = dma.done [#allocation3], 32
    $region29: #{maxvit_finetune_forward.7} parent=1 // pred_fallthru
      _
    %426 = vsyncpa [#allocation3], 1

// kernel: maxvit_finetune_forward.5
$region0: #{maxvit_finetune_forward.5}
  #allocation0 [shape = 'u32[]', space=smem, size = 0x4, offset = 0x4, fixed_abs, tag = 'smem constant byte address 0x4 - core index']
  #allocation1 [shape = 'u32[144,128]{1,0:T(1,128)}', space=vmem, size = 0x12000, scoped, tag = 'internal scratch']
  %s0 = inlined_call_operand.vmem [shape: f32[8,16,128], index: 0, kind: input, shape index: {}]
  %s1 = inlined_call_operand.vmem [shape: f32[1,128], index: 1, kind: input, shape index: {}, may-alias: {1,7}]
  %s2 = inlined_call_operand.vmem [shape: f32[1,128], index: 2, kind: input, shape index: {}, may-alias: {2,6,8,12}]
  %s3 = inlined_call_operand.vmem [shape: bf16[128,384], index: 3, kind: input, shape index: {}]
  %s4 = inlined_call_operand.vmem [shape: f32[1,384], index: 4, kind: input, shape index: {}]
  %s5 = inlined_call_operand.vmem [shape: bf16[128,128], index: 5, kind: input, shape index: {}]
  %s6 = inlined_call_operand.vmem [shape: f32[1,128], index: 6, kind: input, shape index: {}, may-alias: {2,6,8,12}]
  %s7 = inlined_call_operand.vmem [shape: f32[1,128], index: 7, kind: input, shape index: {}, may-alias: {1,7}]
  %s8 = inlined_call_operand.vmem [shape: f32[1,128], index: 8, kind: input, shape index: {}, may-alias: {2,6,8,12}]
  %s9 = inlined_call_operand.vmem [shape: bf16[128,512], index: 9, kind: input, shape index: {}]
  %s10 = inlined_call_operand.vmem [shape: f32[1,512], index: 10, kind: input, shape index: {}]
  %s11 = inlined_call_operand.vmem [shape: bf16[512,128], index: 11, kind: input, shape index: {}]
  %s12 = inlined_call_operand.vmem [shape: f32[1,128], index: 12, kind: input, shape index: {}, may-alias: {2,6,8,12}]
  %s13 = inlined_call_operand.vmem [shape: f32[8,16,128], index: 13, kind: output, shape index: {}]
  %s14 = sld [smem:[#allocation0]]
  $region85: #{maxvit_finetune_forward.5} parent=0
    _
  %s16 = ssub.s32 1, %s14
  %s17 = scalar_select 0, %s16, %s14
  loop: start=0, step=1, limit=4
  $region2: #{maxvit_finetune_forward.5} parent=0 // loop_pre_header
    _
  $region3: #{maxvit_finetune_forward.5} parent=0 // loop_header
    %s19 = sphi 0, %s23
    %p20 = scmp.ge.s32.totalorder %s19, 4
    %s29 = sphi 0, %s31
    %s32 = sphi 0, %s29
    %s33 = sphi 0, %s32
    %s49 = sphi 0, %s33
    %s53 = sphi 0, %s53
    %s55 = sphi 0, %s53
    %s56 = sphi 0, %s55
    %s70 = sphi 0, %s56
    %s74 = sphi 0, %s74
    %s76 = sphi 0, %s74
    %s77 = sphi 0, %s76
    %s91 = sphi 0, %s77
    %s95 = sphi 0, %s95
    %s97 = sphi 0, %s95
    %s98 = sphi 0, %s97
    %s112 = sphi 0, %s98
    %s116 = sphi 0, %s116
    %s118 = sphi 0, %s116
    %s119 = sphi 0, %s118
    %s133 = sphi 0, %s119
    %s137 = sphi 0, %s137
    %s139 = sphi 0, %s137
    %s140 = sphi 0, %s139
    %s154 = sphi 0, %s140
    %s158 = sphi 0, %s158
    %s160 = sphi 0, %s158
    %s161 = sphi 0, %s160
    %s175 = sphi 0, %s161
    %s179 = sphi 0, %s179
    %s181 = sphi 0, %s179
    %s182 = sphi 0, %s181
    %s196 = sphi 0, %s182
    %s200 = sphi 0, %s200
    %s202 = sphi 0, %s200
    %s203 = sphi 0, %s202
    %s217 = sphi 0, %s203
    %s221 = sphi 0, %s221
    %s223 = sphi 0, %s221
    %s224 = sphi 0, %s223
    %s238 = sphi 0, %s224
    %s242 = sphi 0, %s242
    %s244 = sphi 0, %s242
    %s245 = sphi 0, %s244
    %s259 = sphi 0, %s245
    %s263 = sphi 0, %s263
    %s265 = sphi 0, %s263
    %s266 = sphi 0, %s265
    %s280 = sphi 0, %s266
    %s284 = sphi 0, %s284
    %s286 = sphi 0, %s284
    %s287 = sphi 0, %s286
    %s301 = sphi 0, %s287
    %s307 = sphi 0, %s309
    %s310 = sphi 0, %s307
    %s311 = sphi 0, %s310
    %s327 = sphi 0, %s311
  $region4: #{maxvit_finetune_forward.5} parent=0 // loop_header_branch
    %22 = sbr.rel (%p20) target = $region8
  $region5: #{maxvit_finetune_forward.5} parent=0 // loop_body
    %s24 = ssub.s32 %s19, 1
    %s25 = ssub.s32 %s19, 2
    %s26 = sadd.s32 %s19, 1
    %s27 = ssub.s32 %s19, %s26
    %p28 = scmp.eq.s32.totalorder %s27, 0
    %s30 = sadd.s32 %s29, 1
    %s31 = scalar_select %p28, %s29, %s30
    %p34 = pneg %p28
    %p35 = scmp.eq.s32.totalorder %s19, 1
    %p36 = por %p34, %p35
    %p37 = scmp.ne.s32.totalorder %s29, %s32
    %p38 = scmp.eq.s32.totalorder %s19, 0
    %p39 = por %p37, %p38
    %p40 = scmp.ne.s32.totalorder %s29, %s32
    %p41 = scmp.eq.s32.totalorder %s24, 1
    %p42 = por %p40, %p41
    %p43 = scmp.ne.s32.totalorder %s32, %s33
    %p44 = scmp.eq.s32.totalorder %s24, 0
    %p45 = por %p43, %p44
    %p46 = scmp.ne.s32.totalorder %s32, %s33
    %p47 = scmp.eq.s32.totalorder %s25, 1
    %p48 = por %p46, %p47
    %p50 = scmp.ne.s32.totalorder %s33, %s49
    %p51 = scmp.eq.s32.totalorder %s25, 0
    %p52 = por %p50, %p51
    %s54 = sadd.s32 %s53, 1
    %p57 = scmp.eq.s32.totalorder %s19, 1
    %p58 = scmp.ne.s32.totalorder %s53, %s55
    %p59 = scmp.eq.s32.totalorder %s19, 0
    %p60 = por %p58, %p59
    %p61 = scmp.ne.s32.totalorder %s53, %s55
    %p62 = scmp.eq.s32.totalorder %s24, 1
    %p63 = por %p61, %p62
    %p64 = scmp.ne.s32.totalorder %s55, %s56
    %p65 = scmp.eq.s32.totalorder %s24, 0
    %p66 = por %p64, %p65
    %p67 = scmp.ne.s32.totalorder %s55, %s56
    %p68 = scmp.eq.s32.totalorder %s25, 1
    %p69 = por %p67, %p68
    %p71 = scmp.ne.s32.totalorder %s56, %s70
    %p72 = scmp.eq.s32.totalorder %s25, 0
    %p73 = por %p71, %p72
    %s75 = sadd.s32 %s74, 1
    %p78 = scmp.eq.s32.totalorder %s19, 1
    %p79 = scmp.ne.s32.totalorder %s74, %s76
    %p80 = scmp.eq.s32.totalorder %s19, 0
    %p81 = por %p79, %p80
    %p82 = scmp.ne.s32.totalorder %s74, %s76
    %p83 = scmp.eq.s32.totalorder %s24, 1
    %p84 = por %p82, %p83
    %p85 = scmp.ne.s32.totalorder %s76, %s77
    %p86 = scmp.eq.s32.totalorder %s24, 0
    %p87 = por %p85, %p86
    %p88 = scmp.ne.s32.totalorder %s76, %s77
    %p89 = scmp.eq.s32.totalorder %s25, 1
    %p90 = por %p88, %p89
    %p92 = scmp.ne.s32.totalorder %s77, %s91
    %p93 = scmp.eq.s32.totalorder %s25, 0
    %p94 = por %p92, %p93
    %s96 = sadd.s32 %s95, 1
    %p99 = scmp.eq.s32.totalorder %s19, 1
    %p100 = scmp.ne.s32.totalorder %s95, %s97
    %p101 = scmp.eq.s32.totalorder %s19, 0
    %p102 = por %p100, %p101
    %p103 = scmp.ne.s32.totalorder %s95, %s97
    %p104 = scmp.eq.s32.totalorder %s24, 1
    %p105 = por %p103, %p104
    %p106 = scmp.ne.s32.totalorder %s97, %s98
    %p107 = scmp.eq.s32.totalorder %s24, 0
    %p108 = por %p106, %p107
    %p109 = scmp.ne.s32.totalorder %s97, %s98
    %p110 = scmp.eq.s32.totalorder %s25, 1
    %p111 = por %p109, %p110
    %p113 = scmp.ne.s32.totalorder %s98, %s112
    %p114 = scmp.eq.s32.totalorder %s25, 0
    %p115 = por %p113, %p114
    %s117 = sadd.s32 %s116, 1
    %p120 = scmp.eq.s32.totalorder %s19, 1
    %p121 = scmp.ne.s32.totalorder %s116, %s118
    %p122 = scmp.eq.s32.totalorder %s19, 0
    %p123 = por %p121, %p122
    %p124 = scmp.ne.s32.totalorder %s116, %s118
    %p125 = scmp.eq.s32.totalorder %s24, 1
    %p126 = por %p124, %p125
    %p127 = scmp.ne.s32.totalorder %s118, %s119
    %p128 = scmp.eq.s32.totalorder %s24, 0
    %p129 = por %p127, %p128
    %p130 = scmp.ne.s32.totalorder %s118, %s119
    %p131 = scmp.eq.s32.totalorder %s25, 1
    %p132 = por %p130, %p131
    %p134 = scmp.ne.s32.totalorder %s119, %s133
    %p135 = scmp.eq.s32.totalorder %s25, 0
    %p136 = por %p134, %p135
    %s138 = sadd.s32 %s137, 1
    %p141 = scmp.eq.s32.totalorder %s19, 1
    %p142 = scmp.ne.s32.totalorder %s137, %s139
    %p143 = scmp.eq.s32.totalorder %s19, 0
    %p144 = por %p142, %p143
    %p145 = scmp.ne.s32.totalorder %s137, %s139
    %p146 = scmp.eq.s32.totalorder %s24, 1
    %p147 = por %p145, %p146
    %p148 = scmp.ne.s32.totalorder %s139, %s140
    %p149 = scmp.eq.s32.totalorder %s24, 0
    %p150 = por %p148, %p149
    %p151 = scmp.ne.s32.totalorder %s139, %s140
    %p152 = scmp.eq.s32.totalorder %s25, 1
    %p153 = por %p151, %p152
    %p155 = scmp.ne.s32.totalorder %s140, %s154
    %p156 = scmp.eq.s32.totalorder %s25, 0
    %p157 = por %p155, %p156
    %s159 = sadd.s32 %s158, 1
    %p162 = scmp.eq.s32.totalorder %s19, 1
    %p163 = scmp.ne.s32.totalorder %s158, %s160
    %p164 = scmp.eq.s32.totalorder %s19, 0
    %p165 = por %p163, %p164
    %p166 = scmp.ne.s32.totalorder %s158, %s160
    %p167 = scmp.eq.s32.totalorder %s24, 1
    %p168 = por %p166, %p167
    %p169 = scmp.ne.s32.totalorder %s160, %s161
    %p170 = scmp.eq.s32.totalorder %s24, 0
    %p171 = por %p169, %p170
    %p172 = scmp.ne.s32.totalorder %s160, %s161
    %p173 = scmp.eq.s32.totalorder %s25, 1
    %p174 = por %p172, %p173
    %p176 = scmp.ne.s32.totalorder %s161, %s175
    %p177 = scmp.eq.s32.totalorder %s25, 0
    %p178 = por %p176, %p177
    %s180 = sadd.s32 %s179, 1
    %p183 = scmp.eq.s32.totalorder %s19, 1
    %p184 = scmp.ne.s32.totalorder %s179, %s181
    %p185 = scmp.eq.s32.totalorder %s19, 0
    %p186 = por %p184, %p185
    %p187 = scmp.ne.s32.totalorder %s179, %s181
    %p188 = scmp.eq.s32.totalorder %s24, 1
    %p189 = por %p187, %p188
    %p190 = scmp.ne.s32.totalorder %s181, %s182
    %p191 = scmp.eq.s32.totalorder %s24, 0
    %p192 = por %p190, %p191
    %p193 = scmp.ne.s32.totalorder %s181, %s182
    %p194 = scmp.eq.s32.totalorder %s25, 1
    %p195 = por %p193, %p194
    %p197 = scmp.ne.s32.totalorder %s182, %s196
    %p198 = scmp.eq.s32.totalorder %s25, 0
    %p199 = por %p197, %p198
    %s201 = sadd.s32 %s200, 1
    %p204 = scmp.eq.s32.totalorder %s19, 1
    %p205 = scmp.ne.s32.totalorder %s200, %s202
    %p206 = scmp.eq.s32.totalorder %s19, 0
    %p207 = por %p205, %p206
    %p208 = scmp.ne.s32.totalorder %s200, %s202
    %p209 = scmp.eq.s32.totalorder %s24, 1
    %p210 = por %p208, %p209
    %p211 = scmp.ne.s32.totalorder %s202, %s203
    %p212 = scmp.eq.s32.totalorder %s24, 0
    %p213 = por %p211, %p212
    %p214 = scmp.ne.s32.totalorder %s202, %s203
    %p215 = scmp.eq.s32.totalorder %s25, 1
    %p216 = por %p214, %p215
    %p218 = scmp.ne.s32.totalorder %s203, %s217
    %p219 = scmp.eq.s32.totalorder %s25, 0
    %p220 = por %p218, %p219
    %s222 = sadd.s32 %s221, 1
    %p225 = scmp.eq.s32.totalorder %s19, 1
    %p226 = scmp.ne.s32.totalorder %s221, %s223
    %p227 = scmp.eq.s32.totalorder %s19, 0
    %p228 = por %p226, %p227
    %p229 = scmp.ne.s32.totalorder %s221, %s223
    %p230 = scmp.eq.s32.totalorder %s24, 1
    %p231 = por %p229, %p230
    %p232 = scmp.ne.s32.totalorder %s223, %s224
    %p233 = scmp.eq.s32.totalorder %s24, 0
    %p234 = por %p232, %p233
    %p235 = scmp.ne.s32.totalorder %s223, %s224
    %p236 = scmp.eq.s32.totalorder %s25, 1
    %p237 = por %p235, %p236
    %p239 = scmp.ne.s32.totalorder %s224, %s238
    %p240 = scmp.eq.s32.totalorder %s25, 0
    %p241 = por %p239, %p240
    %s243 = sadd.s32 %s242, 1
    %p246 = scmp.eq.s32.totalorder %s19, 1
    %p247 = scmp.ne.s32.totalorder %s242, %s244
    %p248 = scmp.eq.s32.totalorder %s19, 0
    %p249 = por %p247, %p248
    %p250 = scmp.ne.s32.totalorder %s242, %s244
    %p251 = scmp.eq.s32.totalorder %s24, 1
    %p252 = por %p250, %p251
    %p253 = scmp.ne.s32.totalorder %s244, %s245
    %p254 = scmp.eq.s32.totalorder %s24, 0
    %p255 = por %p253, %p254
    %p256 = scmp.ne.s32.totalorder %s244, %s245
    %p257 = scmp.eq.s32.totalorder %s25, 1
    %p258 = por %p256, %p257
    %p260 = scmp.ne.s32.totalorder %s245, %s259
    %p261 = scmp.eq.s32.totalorder %s25, 0
    %p262 = por %p260, %p261
    %s264 = sadd.s32 %s263, 1
    %p267 = scmp.eq.s32.totalorder %s19, 1
    %p268 = scmp.ne.s32.totalorder %s263, %s265
    %p269 = scmp.eq.s32.totalorder %s19, 0
    %p270 = por %p268, %p269
    %p271 = scmp.ne.s32.totalorder %s263, %s265
    %p272 = scmp.eq.s32.totalorder %s24, 1
    %p273 = por %p271, %p272
    %p274 = scmp.ne.s32.totalorder %s265, %s266
    %p275 = scmp.eq.s32.totalorder %s24, 0
    %p276 = por %p274, %p275
    %p277 = scmp.ne.s32.totalorder %s265, %s266
    %p278 = scmp.eq.s32.totalorder %s25, 1
    %p279 = por %p277, %p278
    %p281 = scmp.ne.s32.totalorder %s266, %s280
    %p282 = scmp.eq.s32.totalorder %s25, 0
    %p283 = por %p281, %p282
    %s285 = sadd.s32 %s284, 1
    %p288 = scmp.eq.s32.totalorder %s19, 1
    %p289 = scmp.ne.s32.totalorder %s284, %s286
    %p290 = scmp.eq.s32.totalorder %s19, 0
    %p291 = por %p289, %p290
    %p292 = scmp.ne.s32.totalorder %s284, %s286
    %p293 = scmp.eq.s32.totalorder %s24, 1
    %p294 = por %p292, %p293
    %p295 = scmp.ne.s32.totalorder %s286, %s287
    %p296 = scmp.eq.s32.totalorder %s24, 0
    %p297 = por %p295, %p296
    %p298 = scmp.ne.s32.totalorder %s286, %s287
    %p299 = scmp.eq.s32.totalorder %s25, 1
    %p300 = por %p298, %p299
    %p302 = scmp.ne.s32.totalorder %s287, %s301
    %p303 = scmp.eq.s32.totalorder %s25, 0
    %p304 = por %p302, %p303
    %s305 = ssub.s32 %s19, %s26
    %p306 = scmp.eq.s32.totalorder %s305, 0
    %s308 = sadd.s32 %s307, 1
    %s309 = scalar_select %p306, %s307, %s308
    %p312 = pneg %p306
    %p313 = scmp.eq.s32.totalorder %s19, 1
    %p314 = por %p312, %p313
    %p315 = scmp.ne.s32.totalorder %s307, %s310
    %p316 = scmp.eq.s32.totalorder %s19, 0
    %p317 = por %p315, %p316
    %p318 = scmp.ne.s32.totalorder %s307, %s310
    %p319 = scmp.eq.s32.totalorder %s24, 1
    %p320 = por %p318, %p319
    %p321 = scmp.ne.s32.totalorder %s310, %s311
    %p322 = scmp.eq.s32.totalorder %s24, 0
    %p323 = por %p321, %p322
    %p324 = scmp.ne.s32.totalorder %s310, %s311
    %p325 = scmp.eq.s32.totalorder %s25, 1
    %p326 = por %p324, %p325
    %p328 = scmp.ne.s32.totalorder %s311, %s327
    %p329 = scmp.eq.s32.totalorder %s25, 0
    %p330 = por %p328, %p329
    %p331 = scmp.le.s32.totalorder 1, %s19
    %p332 = scmp.lt.s32.totalorder %s19, 3
    %p333 = pnand %p331, %p332
    %p334 = pneg %p333
    // Predicated region
    $region9: #{maxvit_finetune_forward.5} parent=5 // pred_check
      _
    $region10: #{maxvit_finetune_forward.5} parent=5 // pred_check_branch
      %336 = sbr.rel (%p333) target = $region12
    $region11: #{maxvit_finetune_forward.5} parent=5 // pred_region
      %s337 = ssub.s32 %s19, 1
      // Predicated region
      $region13: #{maxvit_finetune_forward.5} parent=11 // pred_check
        %p338 = pneg %p66
      $region14: #{maxvit_finetune_forward.5} parent=11 // pred_check_branch
        %340 = sbr.rel (%p338) target = $region16
      $region15: #{maxvit_finetune_forward.5} parent=11 // pred_region
        _
      $region16: #{maxvit_finetune_forward.5} parent=11 // pred_fallthru
        _
      // Predicated region
      $region17: #{maxvit_finetune_forward.5} parent=11 // pred_check
        %p341 = pneg %p87
      $region18: #{maxvit_finetune_forward.5} parent=11 // pred_check_branch
        %343 = sbr.rel (%p341) target = $region20
      $region19: #{maxvit_finetune_forward.5} parent=11 // pred_region
        _
      $region20: #{maxvit_finetune_forward.5} parent=11 // pred_fallthru
        _
      // Predicated region
      $region21: #{maxvit_finetune_forward.5} parent=11 // pred_check
        %p344 = pneg %p108
      $region22: #{maxvit_finetune_forward.5} parent=11 // pred_check_branch
        %346 = sbr.rel (%p344) target = $region24
      $region23: #{maxvit_finetune_forward.5} parent=11 // pred_region
        _
      $region24: #{maxvit_finetune_forward.5} parent=11 // pred_fallthru
        _
      // Predicated region
      $region25: #{maxvit_finetune_forward.5} parent=11 // pred_check
        %p347 = pneg %p129
      $region26: #{maxvit_finetune_forward.5} parent=11 // pred_check_branch
        %349 = sbr.rel (%p347) target = $region28
      $region27: #{maxvit_finetune_forward.5} parent=11 // pred_region
        _
      $region28: #{maxvit_finetune_forward.5} parent=11 // pred_fallthru
        _
      // Predicated region
      $region29: #{maxvit_finetune_forward.5} parent=11 // pred_check
        %p350 = pneg %p150
      $region30: #{maxvit_finetune_forward.5} parent=11 // pred_check_branch
        %352 = sbr.rel (%p350) target = $region32
      $region31: #{maxvit_finetune_forward.5} parent=11 // pred_region
        _
      $region32: #{maxvit_finetune_forward.5} parent=11 // pred_fallthru
        _
      // Predicated region
      $region33: #{maxvit_finetune_forward.5} parent=11 // pred_check
        %p353 = pneg %p171
      $region34: #{maxvit_finetune_forward.5} parent=11 // pred_check_branch
        %355 = sbr.rel (%p353) target = $region36
      $region35: #{maxvit_finetune_forward.5} parent=11 // pred_region
        _
      $region36: #{maxvit_finetune_forward.5} parent=11 // pred_fallthru
        _
      // Predicated region
      $region37: #{maxvit_finetune_forward.5} parent=11 // pred_check
        %p356 = pneg %p192
      $region38: #{maxvit_finetune_forward.5} parent=11 // pred_check_branch
        %358 = sbr.rel (%p356) target = $region40
      $region39: #{maxvit_finetune_forward.5} parent=11 // pred_region
        _
      $region40: #{maxvit_finetune_forward.5} parent=11 // pred_fallthru
        _
      // Predicated region
      $region41: #{maxvit_finetune_forward.5} parent=11 // pred_check
        %p359 = pneg %p213
      $region42: #{maxvit_finetune_forward.5} parent=11 // pred_check_branch
        %361 = sbr.rel (%p359) target = $region44
      $region43: #{maxvit_finetune_forward.5} parent=11 // pred_region
        _
      $region44: #{maxvit_finetune_forward.5} parent=11 // pred_fallthru
        _
      // Predicated region
      $region45: #{maxvit_finetune_forward.5} parent=11 // pred_check
        %p362 = pneg %p234
      $region46: #{maxvit_finetune_forward.5} parent=11 // pred_check_branch
        %364 = sbr.rel (%p362) target = $region48
      $region47: #{maxvit_finetune_forward.5} parent=11 // pred_region
        _
      $region48: #{maxvit_finetune_forward.5} parent=11 // pred_fallthru
        _
      // Predicated region
      $region49: #{maxvit_finetune_forward.5} parent=11 // pred_check
        %p365 = pneg %p255
      $region50: #{maxvit_finetune_forward.5} parent=11 // pred_check_branch
        %367 = sbr.rel (%p365) target = $region52
      $region51: #{maxvit_finetune_forward.5} parent=11 // pred_region
        _
      $region52: #{maxvit_finetune_forward.5} parent=11 // pred_fallthru
        _
      // Predicated region
      $region53: #{maxvit_finetune_forward.5} parent=11 // pred_check
        %p368 = pneg %p276
      $region54: #{maxvit_finetune_forward.5} parent=11 // pred_check_branch
        %370 = sbr.rel (%p368) target = $region56
      $region55: #{maxvit_finetune_forward.5} parent=11 // pred_region
        _
      $region56: #{maxvit_finetune_forward.5} parent=11 // pred_fallthru
        _
      // Predicated region
      $region57: #{maxvit_finetune_forward.5} parent=11 // pred_check
        %p371 = pneg %p297
      $region58: #{maxvit_finetune_forward.5} parent=11 // pred_check_branch
        %373 = sbr.rel (%p371) target = $region60
      $region59: #{maxvit_finetune_forward.5} parent=11 // pred_region
        _
      $region60: #{maxvit_finetune_forward.5} parent=11 // pred_fallthru
        _
    $region12: #{maxvit_finetune_forward.5} parent=5 // pred_fallthru
      _
    %p374 = scmp.lt.s32.totalorder %s19, 2
    // Predicated region
    $region61: #{maxvit_finetune_forward.5} parent=5 // pred_check
      %p375 = pneg %p374
    $region62: #{maxvit_finetune_forward.5} parent=5 // pred_check_branch
      %377 = sbr.rel (%p375) target = $region64
    $region63: #{maxvit_finetune_forward.5} parent=5 // pred_region
      // Predicated region
      $region65: #{maxvit_finetune_forward.5} parent=63 // pred_check
        %p378 = pneg %p39
      $region66: #{maxvit_finetune_forward.5} parent=63 // pred_check_branch
        %380 = sbr.rel (%p378) target = $region68
      $region67: #{maxvit_finetune_forward.5} parent=63 // pred_region
        %s381 = smul.u32 4, %s19
        %p382 = scmp.lt.s32.totalorder %s381, 7
        %s383 = scalar_select %p382, %s381, 7
        %s384 = smul.addr %s383, 2
        %s385 = smul.addr %s384, 8
        %s386 = scalar_lea.vmem %s0, %s385
        %s387 = smul.u32 4, %s19
      $region68: #{maxvit_finetune_forward.5} parent=63 // pred_fallthru
        _
    $region64: #{maxvit_finetune_forward.5} parent=5 // pred_fallthru
      _
    %p388 = scmp.le.s32.totalorder 1, %s19
    %p389 = scmp.lt.s32.totalorder %s19, 3
    %p390 = pnand %p388, %p389
    %p391 = pneg %p390
    // Predicated region
    $region69: #{maxvit_finetune_forward.5} parent=5 // pred_check
      _
    $region70: #{maxvit_finetune_forward.5} parent=5 // pred_check_branch
      %393 = sbr.rel (%p390) target = $region72
    $region71: #{maxvit_finetune_forward.5} parent=5 // pred_region
      %s394 = ssub.s32 %s19, 1
      %s395 = smul.u32 4, %s24
      %p396 = scmp.lt.s32.totalorder %s395, 7
      %s397 = scalar_select %p396, %s395, 7
      %s398 = smul.addr %s397, 2
      %s399 = smul.addr %s398, 8
      %s400 = scalar_lea.vmem %s0, %s399
      %p401 = pneg %p45
      %p402 = pneg %p42
      %p403 = pneg %p66
      %p404 = pneg %p63
      %p405 = pneg %p87
      %p406 = pneg %p84
      %p407 = pneg %p108
      %p408 = pneg %p105
      %p409 = pneg %p129
      %p410 = pneg %p126
      %p411 = pneg %p150
      %p412 = pneg %p147
      %p413 = pneg %p171
      %p414 = pneg %p168
      %p415 = pneg %p192
      %p416 = pneg %p189
      %p417 = pneg %p213
      %p418 = pneg %p210
      %p419 = pneg %p234
      %p420 = pneg %p231
      %p421 = pneg %p255
      %p422 = pneg %p252
      %p423 = pneg %p276
      %p424 = pneg %p273
      %p425 = pneg %p297
      %p426 = pneg %p294
      %p427 = pneg %p323
      %p428 = pneg %p320
      %s429 = smul.u32 4, %s24
      %p430 = scmp.lt.s32.totalorder %s429, 7
      %s431 = scalar_select %p430, %s429, 7
      %s432 = smul.addr %s431, 2
      %s433 = smul.addr %s432, 8
      %s434 = scalar_lea.vmem %s13, %s433
      %s435 = smul.u32 4, %s24
      %p436 = scmp.lt.s32.totalorder %s435, 7
      %s437 = scalar_select %p436, %s435, 7
      %s438 = smul.addr %s437, 2
      %s439 = smul.addr %s438, 8
      %s440 = scalar_lea.vmem %s0, %s439
      %s441 = smul.u32 4, %s24
      %s442 = smul.u32 4, %s24
      %p443 = scmp.lt.s32.totalorder %s442, 7
      %s444 = scalar_select %p443, %s442, 7
      %s445 = smul.addr %s444, 2
      %s446 = smul.addr %s445, 8
      %s447 = scalar_lea.vmem %s13, %s446
      %s448 = smul.u32 4, %s24
      %v450 = vld [vmem:[%s440] sm:$0xff]
      %v451 = vld [vmem:[%s440 + $0x8] sm:$0xff]
      %v452 = vld [vmem:[%s440 + $0x10] sm:$0xff]
      %v453 = vld [vmem:[%s440 + $0x18] sm:$0xff]
      %v454 = vld [vmem:[%s440 + $0x20] sm:$0xff]
      %v455 = vld [vmem:[%s440 + $0x28] sm:$0xff]
      %v456 = vld [vmem:[%s440 + $0x30] sm:$0xff]
      %v457 = vld [vmem:[%s440 + $0x38] sm:$0xff]
      %v458 = vld [vmem:[%s1] sm:$0x1]
      %v459 = vld [vmem:[%s2] sm:$0x1]
      %460 = vadd.xlane.f32.xlu0 %v450
      %v461 = vpop.xlane.xlu0 %460
      %462 = vadd.xlane.f32.xlu0 %v451
      %v463 = vpop.xlane.xlu0 %462
      %464 = vadd.xlane.f32.xlu0 %v452
      %v465 = vpop.xlane.xlu0 %464
      %466 = vadd.xlane.f32.xlu0 %v453
      %v467 = vpop.xlane.xlu0 %466
      %468 = vadd.xlane.f32.xlu0 %v454
      %v469 = vpop.xlane.xlu0 %468
      %470 = vadd.xlane.f32.xlu0 %v455
      %v471 = vpop.xlane.xlu0 %470
      %472 = vadd.xlane.f32.xlu0 %v456
      %v473 = vpop.xlane.xlu0 %472
      %474 = vadd.xlane.f32.xlu0 %v457
      %v475 = vpop.xlane.xlu0 %474
      %v476 = vrcp.pop 128.0
      %v477 = vmul.f32 %v461, %v476
      %v478 = vmul.f32 %v463, %v476
      %v479 = vmul.f32 %v465, %v476
      %v480 = vmul.f32 %v467, %v476
      %v481 = vmul.f32 %v469, %v476
      %v482 = vmul.f32 %v471, %v476
      %v483 = vmul.f32 %v473, %v476
      %v484 = vmul.f32 %v475, %v476
      %v485 = vsub.f32 %v450, %v477
      %v486 = vsub.f32 %v451, %v478
      %v487 = vsub.f32 %v452, %v479
      %v488 = vsub.f32 %v453, %v480
      %v489 = vsub.f32 %v454, %v481
      %v490 = vsub.f32 %v455, %v482
      %v491 = vsub.f32 %v456, %v483
      %v492 = vsub.f32 %v457, %v484
      %v493 = vmul.f32 %v485, %v485
      %v494 = vmul.f32 %v486, %v486
      %v495 = vmul.f32 %v487, %v487
      %v496 = vmul.f32 %v488, %v488
      %v497 = vmul.f32 %v489, %v489
      %v498 = vmul.f32 %v490, %v490
      %v499 = vmul.f32 %v491, %v491
      %v500 = vmul.f32 %v492, %v492
      %501 = vadd.xlane.f32.xlu0 %v493
      %v502 = vpop.xlane.xlu0 %501
      %503 = vadd.xlane.f32.xlu0 %v494
      %v504 = vpop.xlane.xlu0 %503
      %505 = vadd.xlane.f32.xlu0 %v495
      %v506 = vpop.xlane.xlu0 %505
      %507 = vadd.xlane.f32.xlu0 %v496
      %v508 = vpop.xlane.xlu0 %507
      %509 = vadd.xlane.f32.xlu0 %v497
      %v510 = vpop.xlane.xlu0 %509
      %511 = vadd.xlane.f32.xlu0 %v498
      %v512 = vpop.xlane.xlu0 %511
      %513 = vadd.xlane.f32.xlu0 %v499
      %v514 = vpop.xlane.xlu0 %513
      %515 = vadd.xlane.f32.xlu0 %v500
      %v516 = vpop.xlane.xlu0 %515
      %v517 = vmul.f32 %v502, %v476
      %v518 = vmul.f32 %v504, %v476
      %v519 = vmul.f32 %v506, %v476
      %v520 = vmul.f32 %v508, %v476
      %v521 = vmul.f32 %v510, %v476
      %v522 = vmul.f32 %v512, %v476
      %v523 = vmul.f32 %v514, %v476
      %v524 = vmul.f32 %v516, %v476
      %v525 = vadd.f32 %v517, 1e-05
      %v526 = vadd.f32 %v518, 1e-05
      %v527 = vadd.f32 %v519, 1e-05
      %v528 = vadd.f32 %v520, 1e-05
      %v529 = vadd.f32 %v521, 1e-05
      %v530 = vadd.f32 %v522, 1e-05
      %v531 = vadd.f32 %v523, 1e-05
      %v532 = vadd.f32 %v524, 1e-05
      %v533 = vrsqrt.pop %v525
      %v534 = vrsqrt.pop %v526
      %v535 = vrsqrt.pop %v527
      %v536 = vrsqrt.pop %v528
      %v537 = vrsqrt.pop %v529
      %v538 = vrsqrt.pop %v530
      %v539 = vrsqrt.pop %v531
      %v540 = vrsqrt.pop %v532
      %v541 = vmul.f32 %v485, %v533
      %v542 = vmul.f32 %v486, %v534
      %v543 = vmul.f32 %v487, %v535
      %v544 = vmul.f32 %v488, %v536
      %v545 = vmul.f32 %v489, %v537
      %v546 = vmul.f32 %v490, %v538
      %v547 = vmul.f32 %v491, %v539
      %v548 = vmul.f32 %v492, %v540
      %v550 = vlaneseq
      %v551 = vshrl.u32 %v550, 7
      %v552 = vsub.s32 0, %v551
      %v553 = vrot.slane %v458, %v552
      %v555 = vmul.f32 %v541, %v553
      %v556 = vmul.f32 %v542, %v553
      %v557 = vmul.f32 %v543, %v553
      %v558 = vmul.f32 %v544, %v553
      %v559 = vmul.f32 %v545, %v553
      %v560 = vmul.f32 %v546, %v553
      %v561 = vmul.f32 %v547, %v553
      %v562 = vmul.f32 %v548, %v553
      %v564 = vlaneseq
      %v565 = vshrl.u32 %v564, 7
      %v566 = vsub.s32 0, %v565
      %v567 = vrot.slane %v459, %v566
      %v569 = vadd.f32 %v555, %v567
      %v570 = vadd.f32 %v556, %v567
      %v571 = vadd.f32 %v557, %v567
      %v572 = vadd.f32 %v558, %v567
      %v573 = vadd.f32 %v559, %v567
      %v574 = vadd.f32 %v560, %v567
      %v575 = vadd.f32 %v561, %v567
      %v576 = vadd.f32 %v562, %v567
      %v577 = vpack.c.bf16 %v570, %v569
      %v578 = vpack.c.bf16 %v572, %v571
      %v579 = vpack.c.bf16 %v574, %v573
      %v580 = vpack.c.bf16 %v576, %v575
      %v581 = vld [vmem:[%s3] sm:$0xff]
      %v582 = vld [vmem:[%s3 + $0x8] sm:$0xf]
      %v583 = vld [vmem:[%s3 + $0xc] sm:$0xff]
      %v584 = vld [vmem:[%s3 + $0x14] sm:$0xf]
      %v585 = vld [vmem:[%s3 + $0x18] sm:$0xff]
      %v586 = vld [vmem:[%s3 + $0x20] sm:$0xf]
      %v587 = vld [vmem:[%s3 + $0x24] sm:$0xff]
      %v588 = vld [vmem:[%s3 + $0x2c] sm:$0xf]
      %v589 = vld [vmem:[%s3 + $0x30] sm:$0xff]
      %v590 = vld [vmem:[%s3 + $0x38] sm:$0xf]
      %v591 = vld [vmem:[%s3 + $0x3c] sm:$0xff]
      %v592 = vld [vmem:[%s3 + $0x44] sm:$0xf]
      %v593 = vld [vmem:[%s3 + $0x48] sm:$0xff]
      %v594 = vld [vmem:[%s3 + $0x50] sm:$0xf]
      %v595 = vld [vmem:[%s3 + $0x54] sm:$0xff]
      %v596 = vld [vmem:[%s3 + $0x5c] sm:$0xf]
      %v597 = vld [vmem:[%s3 + $0x60] sm:$0xff]
      %v598 = vld [vmem:[%s3 + $0x68] sm:$0xf]
      %v599 = vld [vmem:[%s3 + $0x6c] sm:$0xff]
      %v600 = vld [vmem:[%s3 + $0x74] sm:$0xf]
      %v601 = vld [vmem:[%s3 + $0x78] sm:$0xff]
      %v602 = vld [vmem:[%s3 + $0x80] sm:$0xf]
      %v603 = vld [vmem:[%s3 + $0x84] sm:$0xff]
      %v604 = vld [vmem:[%s3 + $0x8c] sm:$0xf]
      %v605 = vld [vmem:[%s3 + $0x90] sm:$0xff]
      %v606 = vld [vmem:[%s3 + $0x98] sm:$0xf]
      %v607 = vld [vmem:[%s3 + $0x9c] sm:$0xff]
      %v608 = vld [vmem:[%s3 + $0xa4] sm:$0xf]
      %v609 = vld [vmem:[%s3 + $0xa8] sm:$0xff]
      %v610 = vld [vmem:[%s3 + $0xb0] sm:$0xf]
      %v611 = vld [vmem:[%s3 + $0xb4] sm:$0xff]
      %v612 = vld [vmem:[%s3 + $0xbc] sm:$0xf]
      %v613 = vld [vmem:[%s4] sm:$0x7]
      %v615 = vlaneseq
      %v616 = vshrl.u32 %v615, 7
      %v617 = vsub.s32 0, %v616
      %v618 = vrot.slane %v613, %v617
      %v619 = vlaneseq
      %v620 = vshrl.u32 %v619, 7
      %v621 = vsub.s32 1, %v620
      %v622 = vrot.slane %v613, %v621
      %v623 = vlaneseq
      %v624 = vshrl.u32 %v623, 7
      %v625 = vsub.s32 2, %v624
      %v626 = vrot.slane %v613, %v625
      %v662 = vunpack.c.l.b16 %v581
      %v663 = vunpack.c.h.b16 %v581
      %v664 = vunpack.c.l.b16 %v582
      %v665 = vunpack.c.l.b16 %v583
      %v666 = vunpack.c.h.b16 %v583
      %v667 = vunpack.c.l.b16 %v584
      %v668 = vunpack.c.l.b16 %v585
      %v669 = vunpack.c.h.b16 %v585
      %v670 = vunpack.c.l.b16 %v586
      %v671 = vunpack.c.l.b16 %v587
      %v672 = vunpack.c.h.b16 %v587
      %v673 = vunpack.c.l.b16 %v588
      %v674 = vunpack.c.l.b16 %v589
      %v675 = vunpack.c.h.b16 %v589
      %v676 = vunpack.c.l.b16 %v590
      %v677 = vunpack.c.l.b16 %v591
      %v678 = vunpack.c.h.b16 %v591
      %v679 = vunpack.c.l.b16 %v592
      %v680 = vunpack.c.l.b16 %v593
      %v681 = vunpack.c.h.b16 %v593
      %v682 = vunpack.c.l.b16 %v594
      %v683 = vunpack.c.l.b16 %v595
      %v684 = vunpack.c.h.b16 %v595
      %v685 = vunpack.c.l.b16 %v596
      %v686 = vunpack.c.l.b16 %v597
      %v687 = vunpack.c.h.b16 %v597
      %v688 = vunpack.c.l.b16 %v598
      %v689 = vunpack.c.l.b16 %v599
      %v690 = vunpack.c.h.b16 %v599
      %v691 = vunpack.c.l.b16 %v600
      %v692 = vunpack.c.l.b16 %v601
      %v693 = vunpack.c.h.b16 %v601
      %v694 = vunpack.c.l.b16 %v602
      %v695 = vunpack.c.l.b16 %v603
      %v696 = vunpack.c.h.b16 %v603
      %v697 = vunpack.c.l.b16 %v604
      %v698 = vunpack.c.l.b16 %v605
      %v699 = vunpack.c.h.b16 %v605
      %v700 = vunpack.c.l.b16 %v606
      %v701 = vunpack.c.l.b16 %v607
      %v702 = vunpack.c.h.b16 %v607
      %v703 = vunpack.c.l.b16 %v608
      %v704 = vunpack.c.l.b16 %v609
      %v705 = vunpack.c.h.b16 %v609
      %v706 = vunpack.c.l.b16 %v610
      %v707 = vunpack.c.l.b16 %v611
      %v708 = vunpack.c.h.b16 %v611
      %v709 = vunpack.c.l.b16 %v612
      %v710 = vpack.c.b16 %v665, %v662
      %v711 = vpack.c.b16 %v666, %v663
      %v712 = vpack.c.b16 %v667, %v664
      %v713 = vpack.c.b16 %v671, %v668
      %v714 = vpack.c.b16 %v672, %v669
      %v715 = vpack.c.b16 %v673, %v670
      %v716 = vpack.c.b16 %v677, %v674
      %v717 = vpack.c.b16 %v678, %v675
      %v718 = vpack.c.b16 %v679, %v676
      %v719 = vpack.c.b16 %v683, %v680
      %v720 = vpack.c.b16 %v684, %v681
      %v721 = vpack.c.b16 %v685, %v682
      %v722 = vpack.c.b16 %v689, %v686
      %v723 = vpack.c.b16 %v690, %v687
      %v724 = vpack.c.b16 %v691, %v688
      %v725 = vpack.c.b16 %v695, %v692
      %v726 = vpack.c.b16 %v696, %v693
      %v727 = vpack.c.b16 %v697, %v694
      %v728 = vpack.c.b16 %v701, %v698
      %v729 = vpack.c.b16 %v702, %v699
      %v730 = vpack.c.b16 %v703, %v700
      %v731 = vpack.c.b16 %v707, %v704
      %v732 = vpack.c.b16 %v708, %v705
      %v733 = vpack.c.b16 %v709, %v706
      %758 = vmatprep.subr.bf16.mxu0 %v711
      %759 = vmatpush1.bf16.msra.mxu0 %v710
      %760 = vmatprep.subr.bf16.mxu0 %v714
      %761 = vmatpush1.bf16.msra.mxu0 %v713
      %762 = vmatprep.subr.bf16.mxu0 %v717
      %763 = vmatpush1.bf16.msra.mxu0 %v716
      %764 = vmatprep.subr.bf16.mxu0 %v720
      %765 = vmatpush1.bf16.msra.mxu0 %v719
      %766 = vmatprep.subr.bf16.mxu0 %v723
      %767 = vmatpush1.bf16.msra.mxu0 %v722
      %768 = vmatprep.subr.bf16.mxu0 %v726
      %769 = vmatpush1.bf16.msra.mxu0 %v725
      %770 = vmatprep.subr.bf16.mxu0 %v729
      %771 = vmatpush1.bf16.msra.mxu0 %v728
      %772 = vmatprep.subr.bf16.mxu0 %v732
      %773 = vmatpush1.bf16.msra.mxu0 %v731
      %774 = vmatprep.subr.bf16.mxu0 0
      %775 = vmatpush1.bf16.msra.mxu0 0
      %776 = vmatprep.subr.bf16.mxu0 0
      %777 = vmatpush1.bf16.msra.mxu0 0
      %778 = vmatprep.subr.bf16.mxu0 0
      %779 = vmatpush1.bf16.msra.mxu0 0
      %780 = vmatprep.subr.bf16.mxu0 0
      %781 = vmatpush1.bf16.msra.mxu0 0
      %782 = vmatprep.subr.bf16.mxu0 0
      %783 = vmatpush1.bf16.msra.mxu0 0
      %784 = vmatprep.subr.bf16.mxu0 0
      %785 = vmatpush1.bf16.msra.mxu0 0
      %786 = vmatprep.subr.bf16.mxu0 0
      %787 = vmatpush1.bf16.msra.mxu0 0
      %788 = vmatprep.subr.bf16.mxu0 0
      %789 = vmatpush1.bf16.msra.mxu0 0
      %790 = vmatprep.mubr.bf16.mxu0 0
      %791 = vmatmul.mubr.bf16.gmra.mrb[0].mxu0 %v577
      %v792 = vpop.f32.mrb[0].mxu0
      %v793 = vadd.f32 %v618, %v792
      %v794 = vpop.f32.mrb[0].mxu0
      %v795 = vadd.f32 %v622, %v794
      %v796 = vpop.f32.mrb[0].mxu0
      %v797 = vadd.f32 %v618, %v796
      %v798 = vpop.f32.mrb[0].mxu0
      %v799 = vadd.f32 %v622, %v798
      %800 = vmatprep.mubr.bf16.mxu0 0
      %801 = vmatmul.mubr.bf16.gmra.mrb[0].mxu0 %v578
      %v802 = vpop.f32.mrb[0].mxu0
      %v803 = vadd.f32 %v618, %v802
      %v804 = vpop.f32.mrb[0].mxu0
      %v805 = vadd.f32 %v622, %v804
      %v806 = vpop.f32.mrb[0].mxu0
      %v807 = vadd.f32 %v618, %v806
      %v808 = vpop.f32.mrb[0].mxu0
      %v809 = vadd.f32 %v622, %v808
      %810 = vmatprep.mubr.bf16.mxu0 0
      %811 = vmatmul.mubr.bf16.gmra.mrb[0].mxu0 %v579
      %v812 = vpop.f32.mrb[0].mxu0
      %v813 = vadd.f32 %v618, %v812
      %v814 = vpop.f32.mrb[0].mxu0
      %v815 = vadd.f32 %v622, %v814
      %v816 = vpop.f32.mrb[0].mxu0
      %v817 = vadd.f32 %v618, %v816
      %v818 = vpop.f32.mrb[0].mxu0
      %v819 = vadd.f32 %v622, %v818
      %820 = vmatprep.mubr.bf16.mxu0 0
      %821 = vmatmul.mubr.bf16.gmra.mrb[0].mxu0 %v580
      %v822 = vpop.f32.mrb[0].mxu0
      %v823 = vadd.f32 %v618, %v822
      %v824 = vpop.f32.mrb[0].mxu0
      %v825 = vadd.f32 %v622, %v824
      %v826 = vpop.f32.mrb[0].mxu0
      %v827 = vadd.f32 %v618, %v826
      %v828 = vpop.f32.mrb[0].mxu0
      %v829 = vadd.f32 %v622, %v828
      %830 = vdwg.mxu0
      %831 = vmatprep.subr.bf16.mxu0 0
      %832 = vmatpush1.bf16.msra.mxu0 %v712
      %833 = vmatprep.subr.bf16.mxu0 0
      %834 = vmatpush1.bf16.msra.mxu0 %v715
      %835 = vmatprep.subr.bf16.mxu0 0
      %836 = vmatpush1.bf16.msra.mxu0 %v718
      %837 = vmatprep.subr.bf16.mxu0 0
      %838 = vmatpush1.bf16.msra.mxu0 %v721
      %839 = vmatprep.subr.bf16.mxu0 0
      %840 = vmatpush1.bf16.msra.mxu0 %v724
      %841 = vmatprep.subr.bf16.mxu0 0
      %842 = vmatpush1.bf16.msra.mxu0 %v727
      %843 = vmatprep.subr.bf16.mxu0 0
      %844 = vmatpush1.bf16.msra.mxu0 %v730
      %845 = vmatprep.subr.bf16.mxu0 0
      %846 = vmatpush1.bf16.msra.mxu0 %v733
      %847 = vmatprep.subr.bf16.mxu0 0
      %848 = vmatpush1.bf16.msra.mxu0 0
      %849 = vmatprep.subr.bf16.mxu0 0
      %850 = vmatpush1.bf16.msra.mxu0 0
      %851 = vmatprep.subr.bf16.mxu0 0
      %852 = vmatpush1.bf16.msra.mxu0 0
      %853 = vmatprep.subr.bf16.mxu0 0
      %854 = vmatpush1.bf16.msra.mxu0 0
      %855 = vmatprep.subr.bf16.mxu0 0
      %856 = vmatpush1.bf16.msra.mxu0 0
      %857 = vmatprep.subr.bf16.mxu0 0
      %858 = vmatpush1.bf16.msra.mxu0 0
      %859 = vmatprep.subr.bf16.mxu0 0
      %860 = vmatpush1.bf16.msra.mxu0 0
      %861 = vmatprep.subr.bf16.mxu0 0
      %862 = vmatpush1.bf16.msra.mxu0 0
      %863 = vmatprep.mubr.bf16.mxu0 0
      %864 = vmatmul.mubr.bf16.gmra.mrb[0].mxu0 %v577
      %v865 = vpop.f32.mrb[0].mxu0
      %v866 = vadd.f32 %v626, %v865
      %v867 = vpop.f32.mrb[0].mxu0
      %v868 = vpop.f32.mrb[0].mxu0
      %v869 = vadd.f32 %v626, %v868
      %v870 = vpop.f32.mrb[0].mxu0
      %871 = vmatprep.mubr.bf16.mxu0 0
      %872 = vmatmul.mubr.bf16.gmra.mrb[0].mxu0 %v578
      %v873 = vpop.f32.mrb[0].mxu0
      %v874 = vadd.f32 %v626, %v873
      %v875 = vpop.f32.mrb[0].mxu0
      %v876 = vpop.f32.mrb[0].mxu0
      %v877 = vadd.f32 %v626, %v876
      %v878 = vpop.f32.mrb[0].mxu0
      %879 = vmatprep.mubr.bf16.mxu0 0
      %880 = vmatmul.mubr.bf16.gmra.mrb[0].mxu0 %v579
      %v881 = vpop.f32.mrb[0].mxu0
      %v882 = vadd.f32 %v626, %v881
      %v883 = vpop.f32.mrb[0].mxu0
      %v884 = vpop.f32.mrb[0].mxu0
      %v885 = vadd.f32 %v626, %v884
      %v886 = vpop.f32.mrb[0].mxu0
      %887 = vmatprep.mubr.bf16.mxu0 0
      %888 = vmatmul.mubr.bf16.gmra.mrb[0].mxu0 %v580
      %v889 = vpop.f32.mrb[0].mxu0
      %v890 = vadd.f32 %v626, %v889
      %v891 = vpop.f32.mrb[0].mxu0
      %v892 = vpop.f32.mrb[0].mxu0
      %v893 = vadd.f32 %v626, %v892
      %v894 = vpop.f32.mrb[0].mxu0
      %895 = vdwg.mxu0
      %v896 = vpack.c.bf16 %v799, %v795
      %v897 = vpack.c.bf16 %v809, %v805
      %v898 = vpack.c.bf16 %v819, %v815
      %v899 = vpack.c.bf16 %v829, %v825
      %v900 = vlaneseq
      %v901 = vand.u32 %v900, 127
      %vm902 = vcmp.ge.s32.totalorder %v901, 0
      %vm903 = vcmp.lt.s32.totalorder %v901, 64
      %vm904 = vmand %vm902, %vm903
      %v905 = vsel %vm904, 1, 0
      %v906 = vcvt.s32.f32 %v905
      %v907 = vmul.f32 %v793, %v906
      %v908 = vmul.f32 %v797, %v906
      %v909 = vmul.f32 %v803, %v906
      %v910 = vmul.f32 %v807, %v906
      %v911 = vmul.f32 %v813, %v906
      %v912 = vmul.f32 %v817, %v906
      %v913 = vmul.f32 %v823, %v906
      %v914 = vmul.f32 %v827, %v906
      %v915 = vpack.c.bf16 %v908, %v907
      %v916 = vpack.c.bf16 %v910, %v909
      %v917 = vpack.c.bf16 %v912, %v911
      %v918 = vpack.c.bf16 %v914, %v913
      %919 = vmatprep.subr.bf16.mxu0 0
      %920 = vmatpush1.bf16.xpose.msra.mxu0 %v896
      %921 = vmatprep.subr.bf16.mxu0 0
      %922 = vmatpush1.bf16.xpose.msra.mxu0 0
      %923 = vmatprep.subr.bf16.mxu0 0
      %924 = vmatpush1.bf16.xpose.msra.mxu0 0
      %925 = vmatprep.subr.bf16.mxu0 0
      %926 = vmatpush1.bf16.xpose.msra.mxu0 0
      %927 = vmatprep.subr.bf16.mxu0 0
      %928 = vmatpush1.bf16.xpose.msra.mxu0 0
      %929 = vmatprep.subr.bf16.mxu0 0
      %930 = vmatpush1.bf16.xpose.msra.mxu0 0
      %931 = vmatprep.subr.bf16.mxu0 0
      %932 = vmatpush1.bf16.xpose.msra.mxu0 0
      %933 = vmatprep.subr.bf16.mxu0 0
      %934 = vmatpush1.bf16.xpose.msra.mxu0 0
      %935 = vmatprep.subr.bf16.mxu0 0
      %936 = vmatpush1.bf16.xpose.msra.mxu0 0
      %937 = vmatprep.subr.bf16.mxu0 0
      %938 = vmatpush1.bf16.xpose.msra.mxu0 0
      %939 = vmatprep.subr.bf16.mxu0 0
      %940 = vmatpush1.bf16.xpose.msra.mxu0 0
      %941 = vmatprep.subr.bf16.mxu0 0
      %942 = vmatpush1.bf16.xpose.msra.mxu0 0
      %943 = vmatprep.subr.bf16.mxu0 0
      %944 = vmatpush1.bf16.xpose.msra.mxu0 0
      %945 = vmatprep.subr.bf16.mxu0 0
      %946 = vmatpush1.bf16.xpose.msra.mxu0 0
      %947 = vmatprep.subr.bf16.mxu0 0
      %948 = vmatpush1.bf16.xpose.msra.mxu0 0
      %949 = vmatprep.subr.bf16.mxu0 0
      %950 = vmatpush1.bf16.xpose.msra.mxu0 0
      %951 = vmatprep.mubr.bf16.mxu0 0
      %952 = vmatmul.mubr.bf16.gmra.mrb[0].mxu0 %v915
      %v953 = vpop.f32.mrb[0].mxu0
      %v954 = vadd.f32 0.0, %v953
      %v955 = vpop.f32.mrb[0].mxu0
      %v956 = vpop.f32.mrb[0].mxu0
      %v957 = vadd.f32 0.0, %v956
      %v958 = vpop.f32.mrb[0].mxu0
      %959 = vdwg.mxu0
      %960 = vmatprep.subr.bf16.mxu0 0
      %961 = vmatpush1.bf16.xpose.msra.mxu0 %v897
      %962 = vmatprep.subr.bf16.mxu0 0
      %963 = vmatpush1.bf16.xpose.msra.mxu0 0
      %964 = vmatprep.subr.bf16.mxu0 0
      %965 = vmatpush1.bf16.xpose.msra.mxu0 0
      %966 = vmatprep.subr.bf16.mxu0 0
      %967 = vmatpush1.bf16.xpose.msra.mxu0 0
      %968 = vmatprep.subr.bf16.mxu0 0
      %969 = vmatpush1.bf16.xpose.msra.mxu0 0
      %970 = vmatprep.subr.bf16.mxu0 0
      %971 = vmatpush1.bf16.xpose.msra.mxu0 0
      %972 = vmatprep.subr.bf16.mxu0 0
      %973 = vmatpush1.bf16.xpose.msra.mxu0 0
      %974 = vmatprep.subr.bf16.mxu0 0
      %975 = vmatpush1.bf16.xpose.msra.mxu0 0
      %976 = vmatprep.subr.bf16.mxu0 0
      %977 = vmatpush1.bf16.xpose.msra.mxu0 0
      %978 = vmatprep.subr.bf16.mxu0 0
      %979 = vmatpush1.bf16.xpose.msra.mxu0 0
      %980 = vmatprep.subr.bf16.mxu0 0
      %981 = vmatpush1.bf16.xpose.msra.mxu0 0
      %982 = vmatprep.subr.bf16.mxu0 0
      %983 = vmatpush1.bf16.xpose.msra.mxu0 0
      %984 = vmatprep.subr.bf16.mxu0 0
      %985 = vmatpush1.bf16.xpose.msra.mxu0 0
      %986 = vmatprep.subr.bf16.mxu0 0
      %987 = vmatpush1.bf16.xpose.msra.mxu0 0
      %988 = vmatprep.subr.bf16.mxu0 0
      %989 = vmatpush1.bf16.xpose.msra.mxu0 0
      %990 = vmatprep.subr.bf16.mxu0 0
      %991 = vmatpush1.bf16.xpose.msra.mxu0 0
      %992 = vmatprep.mubr.bf16.mxu0 0
      %993 = vmatmul.mubr.bf16.gmra.mrb[0].mxu0 %v916
      %v994 = vpop.f32.mrb[0].mxu0
      %v995 = vadd.f32 0.0, %v994
      %v996 = vpop.f32.mrb[0].mxu0
      %v997 = vpop.f32.mrb[0].mxu0
      %v998 = vadd.f32 0.0, %v997
      %v999 = vpop.f32.mrb[0].mxu0
      %1000 = vdwg.mxu0
      %1001 = vmatprep.subr.bf16.mxu0 0
      %1002 = vmatpush1.bf16.xpose.msra.mxu0 %v898
      %1003 = vmatprep.subr.bf16.mxu0 0
      %1004 = vmatpush1.bf16.xpose.msra.mxu0 0
      %1005 = vmatprep.subr.bf16.mxu0 0
      %1006 = vmatpush1.bf16.xpose.msra.mxu0 0
      %1007 = vmatprep.subr.bf16.mxu0 0
      %1008 = vmatpush1.bf16.xpose.msra.mxu0 0
      %1009 = vmatprep.subr.bf16.mxu0 0
      %1010 = vmatpush1.bf16.xpose.msra.mxu0 0
      %1011 = vmatprep.subr.bf16.mxu0 0
      %1012 = vmatpush1.bf16.xpose.msra.mxu0 0
      %1013 = vmatprep.subr.bf16.mxu0 0
      %1014 = vmatpush1.bf16.xpose.msra.mxu0 0
      %1015 = vmatprep.subr.bf16.mxu0 0
      %1016 = vmatpush1.bf16.xpose.msra.mxu0 0
      %1017 = vmatprep.subr.bf16.mxu0 0
      %1018 = vmatpush1.bf16.xpose.msra.mxu0 0
      %1019 = vmatprep.subr.bf16.mxu0 0
      %1020 = vmatpush1.bf16.xpose.msra.mxu0 0
      %1021 = vmatprep.subr.bf16.mxu0 0
      %1022 = vmatpush1.bf16.xpose.msra.mxu0 0
      %1023 = vmatprep.subr.bf16.mxu0 0
      %1024 = vmatpush1.bf16.xpose.msra.mxu0 0
      %1025 = vmatprep.subr.bf16.mxu0 0
      %1026 = vmatpush1.bf16.xpose.msra.mxu0 0
      %1027 = vmatprep.subr.bf16.mxu0 0
      %1028 = vmatpush1.bf16.xpose.msra.mxu0 0
      %1029 = vmatprep.subr.bf16.mxu0 0
      %1030 = vmatpush1.bf16.xpose.msra.mxu0 0
      %1031 = vmatprep.subr.bf16.mxu0 0
      %1032 = vmatpush1.bf16.xpose.msra.mxu0 0
      %1033 = vmatprep.mubr.bf16.mxu0 0
      %1034 = vmatmul.mubr.bf16.gmra.mrb[0].mxu0 %v917
      %v1035 = vpop.f32.mrb[0].mxu0
      %v1036 = vadd.f32 0.0, %v1035
      %v1037 = vpop.f32.mrb[0].mxu0
      %v1038 = vpop.f32.mrb[0].mxu0
      %v1039 = vadd.f32 0.0, %v1038
      %v1040 = vpop.f32.mrb[0].mxu0
      %1041 = vdwg.mxu0
      %1042 = vmatprep.subr.bf16.mxu0 0
      %1043 = vmatpush1.bf16.xpose.msra.mxu0 %v899
      %1044 = vmatprep.subr.bf16.mxu0 0
      %1045 = vmatpush1.bf16.xpose.msra.mxu0 0
      %1046 = vmatprep.subr.bf16.mxu0 0
      %1047 = vmatpush1.bf16.xpose.msra.mxu0 0
      %1048 = vmatprep.subr.bf16.mxu0 0
      %1049 = vmatpush1.bf16.xpose.msra.mxu0 0
      %1050 = vmatprep.subr.bf16.mxu0 0
      %1051 = vmatpush1.bf16.xpose.msra.mxu0 0
      %1052 = vmatprep.subr.bf16.mxu0 0
      %1053 = vmatpush1.bf16.xpose.msra.mxu0 0
      %1054 = vmatprep.subr.bf16.mxu0 0
      %1055 = vmatpush1.bf16.xpose.msra.mxu0 0
      %1056 = vmatprep.subr.bf16.mxu0 0
      %1057 = vmatpush1.bf16.xpose.msra.mxu0 0
      %1058 = vmatprep.subr.bf16.mxu0 0
      %1059 = vmatpush1.bf16.xpose.msra.mxu0 0
      %1060 = vmatprep.subr.bf16.mxu0 0
      %1061 = vmatpush1.bf16.xpose.msra.mxu0 0
      %1062 = vmatprep.subr.bf16.mxu0 0
      %1063 = vmatpush1.bf16.xpose.msra.mxu0 0
      %1064 = vmatprep.subr.bf16.mxu0 0
      %1065 = vmatpush1.bf16.xpose.msra.mxu0 0
      %1066 = vmatprep.subr.bf16.mxu0 0
      %1067 = vmatpush1.bf16.xpose.msra.mxu0 0
      %1068 = vmatprep.subr.bf16.mxu0 0
      %1069 = vmatpush1.bf16.xpose.msra.mxu0 0
      %1070 = vmatprep.subr.bf16.mxu0 0
      %1071 = vmatpush1.bf16.xpose.msra.mxu0 0
      %1072 = vmatprep.subr.bf16.mxu0 0
      %1073 = vmatpush1.bf16.xpose.msra.mxu0 0
      %1074 = vmatprep.mubr.bf16.mxu0 0
      %1075 = vmatmul.mubr.bf16.gmra.mrb[0].mxu0 %v918
      %v1076 = vpop.f32.mrb[0].mxu0
      %v1077 = vadd.f32 0.0, %v1076
      %v1078 = vpop.f32.mrb[0].mxu0
      %v1079 = vpop.f32.mrb[0].mxu0
      %v1080 = vadd.f32 0.0, %v1079
      %v1081 = vpop.f32.mrb[0].mxu0
      %1082 = vdwg.mxu0
      %v1083 = vmul.f32 %v954, 0.125
      %v1084 = vmul.f32 %v957, 0.125
      %v1085 = vmul.f32 %v995, 0.125
      %v1086 = vmul.f32 %v998, 0.125
      %v1087 = vmul.f32 %v1036, 0.125
      %v1088 = vmul.f32 %v1039, 0.125
      %v1089 = vmul.f32 %v1077, 0.125
      %v1090 = vmul.f32 %v1080, 0.125
      %vm1091 = vcmask 130048
      %v1092 = vsel %vm1091, %v1083, -inf
      %1093 = vmax.xlane.f32.xlu0 %v1092
      %v1094 = vpop.xlane.xlu0 %1093
      %v1095 = vsel %vm1091, %v1084, -inf
      %1096 = vmax.xlane.f32.xlu0 %v1095
      %v1097 = vpop.xlane.xlu0 %1096
      %v1098 = vsel %vm1091, %v1085, -inf
      %1099 = vmax.xlane.f32.xlu0 %v1098
      %v1100 = vpop.xlane.xlu0 %1099
      %v1101 = vsel %vm1091, %v1086, -inf
      %1102 = vmax.xlane.f32.xlu0 %v1101
      %v1103 = vpop.xlane.xlu0 %1102
      %v1104 = vsel %vm1091, %v1087, -inf
      %1105 = vmax.xlane.f32.xlu0 %v1104
      %v1106 = vpop.xlane.xlu0 %1105
      %v1107 = vsel %vm1091, %v1088, -inf
      %1108 = vmax.xlane.f32.xlu0 %v1107
      %v1109 = vpop.xlane.xlu0 %1108
      %v1110 = vsel %vm1091, %v1089, -inf
      %1111 = vmax.xlane.f32.xlu0 %v1110
      %v1112 = vpop.xlane.xlu0 %1111
      %v1113 = vsel %vm1091, %v1090, -inf
      %1114 = vmax.xlane.f32.xlu0 %v1113
      %v1115 = vpop.xlane.xlu0 %1114
      %v1116 = vsub.f32 %v1083, %v1094
      %v1117 = vsub.f32 %v1084, %v1097
      %v1118 = vsub.f32 %v1085, %v1100
      %v1119 = vsub.f32 %v1086, %v1103
      %v1120 = vsub.f32 %v1087, %v1106
      %v1121 = vsub.f32 %v1088, %v1109
      %v1122 = vsub.f32 %v1089, %v1112
      %v1123 = vsub.f32 %v1090, %v1115
      %v1124 = vmul.f32 %v1116, 1.442695
      %v1125 = vpow.pop %v1124
      %v1126 = vmul.f32 %v1117, 1.442695
      %v1127 = vpow.pop %v1126
      %v1128 = vmul.f32 %v1118, 1.442695
      %v1129 = vpow.pop %v1128
      %v1130 = vmul.f32 %v1119, 1.442695
      %v1131 = vpow.pop %v1130
      %v1132 = vmul.f32 %v1120, 1.442695
      %v1133 = vpow.pop %v1132
      %v1134 = vmul.f32 %v1121, 1.442695
      %v1135 = vpow.pop %v1134
      %v1136 = vmul.f32 %v1122, 1.442695
      %v1137 = vpow.pop %v1136
      %v1138 = vmul.f32 %v1123, 1.442695
      %v1139 = vpow.pop %v1138
      %v1140 = vsel %vm1091, %v1125, 0.0
      %1141 = vadd.xlane.f32.xlu0 %v1140
      %v1142 = vpop.xlane.xlu0 %1141
      %v1143 = vsel %vm1091, %v1127, 0.0
      %1144 = vadd.xlane.f32.xlu0 %v1143
      %v1145 = vpop.xlane.xlu0 %1144
      %v1146 = vsel %vm1091, %v1129, 0.0
      %1147 = vadd.xlane.f32.xlu0 %v1146
      %v1148 = vpop.xlane.xlu0 %1147
      %v1149 = vsel %vm1091, %v1131, 0.0
      %1150 = vadd.xlane.f32.xlu0 %v1149
      %v1151 = vpop.xlane.xlu0 %1150
      %v1152 = vsel %vm1091, %v1133, 0.0
      %1153 = vadd.xlane.f32.xlu0 %v1152
      %v1154 = vpop.xlane.xlu0 %1153
      %v1155 = vsel %vm1091, %v1135, 0.0
      %1156 = vadd.xlane.f32.xlu0 %v1155
      %v1157 = vpop.xlane.xlu0 %1156
      %v1158 = vsel %vm1091, %v1137, 0.0
      %1159 = vadd.xlane.f32.xlu0 %v1158
      %v1160 = vpop.xlane.xlu0 %1159
      %v1161 = vsel %vm1091, %v1139, 0.0
      %1162 = vadd.xlane.f32.xlu0 %v1161
      %v1163 = vpop.xlane.xlu0 %1162
      %v1164 = vrcp.pop %v1142
      %v1165 = vrcp.pop %v1145
      %v1166 = vrcp.pop %v1148
      %v1167 = vrcp.pop %v1151
      %v1168 = vrcp.pop %v1154
      %v1169 = vrcp.pop %v1157
      %v1170 = vrcp.pop %v1160
      %v1171 = vrcp.pop %v1163
      %v1172 = vmul.f32 %v1125, %v1164
      %v1173 = vmul.f32 %v1127, %v1165
      %v1174 = vmul.f32 %v1129, %v1166
      %v1175 = vmul.f32 %v1131, %v1167
      %v1176 = vmul.f32 %v1133, %v1168
      %v1177 = vmul.f32 %v1135, %v1169
      %v1178 = vmul.f32 %v1137, %v1170
      %v1179 = vmul.f32 %v1139, %v1171
      %v1180 = vpack.c.bf16 %v1173, %v1172
      %v1181 = vpack.c.bf16 %v1175, %v1174
      %v1182 = vpack.c.bf16 %v1177, %v1176
      %v1183 = vpack.c.bf16 %v1179, %v1178
      %v1184 = vmul.f32 %v866, %v906
      %v1185 = vmul.f32 %v869, %v906
      %v1186 = vmul.f32 %v874, %v906
      %v1187 = vmul.f32 %v877, %v906
      %v1188 = vmul.f32 %v882, %v906
      %v1189 = vmul.f32 %v885, %v906
      %v1190 = vmul.f32 %v890, %v906
      %v1191 = vmul.f32 %v893, %v906
      %v1192 = vpack.c.bf16 %v1185, %v1184
      %v1193 = vpack.c.bf16 %v1187, %v1186
      %v1194 = vpack.c.bf16 %v1189, %v1188
      %v1195 = vpack.c.bf16 %v1191, %v1190
      %vm1196 = vcmp.ge.s32.totalorder %v901, 64
      %vm1197 = vcmp.lt.s32.totalorder %v901, 128
      %vm1198 = vmand %vm1196, %vm1197
      %v1199 = vsel %vm1198, 1, 0
      %v1200 = vcvt.s32.f32 %v1199
      %v1201 = vmul.f32 %v793, %v1200
      %v1202 = vmul.f32 %v797, %v1200
      %v1203 = vmul.f32 %v803, %v1200
      %v1204 = vmul.f32 %v807, %v1200
      %v1205 = vmul.f32 %v813, %v1200
      %v1206 = vmul.f32 %v817, %v1200
      %v1207 = vmul.f32 %v823, %v1200
      %v1208 = vmul.f32 %v827, %v1200
      %v1209 = vpack.c.bf16 %v1202, %v1201
      %v1210 = vpack.c.bf16 %v1204, %v1203
      %v1211 = vpack.c.bf16 %v1206, %v1205
      %v1212 = vpack.c.bf16 %v1208, %v1207
      %1213 = vmatprep.subr.bf16.mxu0 0
      %1214 = vmatpush1.bf16.xpose.msra.mxu0 %v896
      %1215 = vmatprep.subr.bf16.mxu0 0
      %1216 = vmatpush1.bf16.xpose.msra.mxu0 0
      %1217 = vmatprep.subr.bf16.mxu0 0
      %1218 = vmatpush1.bf16.xpose.msra.mxu0 0
      %1219 = vmatprep.subr.bf16.mxu0 0
      %1220 = vmatpush1.bf16.xpose.msra.mxu0 0
      %1221 = vmatprep.subr.bf16.mxu0 0
      %1222 = vmatpush1.bf16.xpose.msra.mxu0 0
      %1223 = vmatprep.subr.bf16.mxu0 0
      %1224 = vmatpush1.bf16.xpose.msra.mxu0 0
      %1225 = vmatprep.subr.bf16.mxu0 0
      %1226 = vmatpush1.bf16.xpose.msra.mxu0 0
      %1227 = vmatprep.subr.bf16.mxu0 0
      %1228 = vmatpush1.bf16.xpose.msra.mxu0 0
      %1229 = vmatprep.subr.bf16.mxu0 0
      %1230 = vmatpush1.bf16.xpose.msra.mxu0 0
      %1231 = vmatprep.subr.bf16.mxu0 0
      %1232 = vmatpush1.bf16.xpose.msra.mxu0 0
      %1233 = vmatprep.subr.bf16.mxu0 0
      %1234 = vmatpush1.bf16.xpose.msra.mxu0 0
      %1235 = vmatprep.subr.bf16.mxu0 0
      %1236 = vmatpush1.bf16.xpose.msra.mxu0 0
      %1237 = vmatprep.subr.bf16.mxu0 0
      %1238 = vmatpush1.bf16.xpose.msra.mxu0 0
      %1239 = vmatprep.subr.bf16.mxu0 0
      %1240 = vmatpush1.bf16.xpose.msra.mxu0 0
      %1241 = vmatprep.subr.bf16.mxu0 0
      %1242 = vmatpush1.bf16.xpose.msra.mxu0 0
      %1243 = vmatprep.subr.bf16.mxu0 0
      %1244 = vmatpush1.bf16.xpose.msra.mxu0 0
      %1245 = vmatprep.mubr.bf16.mxu0 0
      %1246 = vmatmul.mubr.bf16.gmra.mrb[0].mxu0 %v1209
      %v1247 = vpop.f32.mrb[0].mxu0
      %v1248 = vadd.f32 0.0, %v1247
      %v1249 = vpop.f32.mrb[0].mxu0
      %v1250 = vpop.f32.mrb[0].mxu0
      %v1251 = vadd.f32 0.0, %v1250
      %v1252 = vpop.f32.mrb[0].mxu0
      %1253 = vdwg.mxu0
      %1254 = vmatprep.subr.bf16.mxu0 0
      %1255 = vmatpush1.bf16.xpose.msra.mxu0 %v897
      %1256 = vmatprep.subr.bf16.mxu0 0
      %1257 = vmatpush1.bf16.xpose.msra.mxu0 0
      %1258 = vmatprep.subr.bf16.mxu0 0
      %1259 = vmatpush1.bf16.xpose.msra.mxu0 0
      %1260 = vmatprep.subr.bf16.mxu0 0
      %1261 = vmatpush1.bf16.xpose.msra.mxu0 0
      %1262 = vmatprep.subr.bf16.mxu0 0
      %1263 = vmatpush1.bf16.xpose.msra.mxu0 0
      %1264 = vmatprep.subr.bf16.mxu0 0
      %1265 = vmatpush1.bf16.xpose.msra.mxu0 0
      %1266 = vmatprep.subr.bf16.mxu0 0
      %1267 = vmatpush1.bf16.xpose.msra.mxu0 0
      %1268 = vmatprep.subr.bf16.mxu0 0
      %1269 = vmatpush1.bf16.xpose.msra.mxu0 0
      %1270 = vmatprep.subr.bf16.mxu0 0
      %1271 = vmatpush1.bf16.xpose.msra.mxu0 0
      %1272 = vmatprep.subr.bf16.mxu0 0
      %1273 = vmatpush1.bf16.xpose.msra.mxu0 0
      %1274 = vmatprep.subr.bf16.mxu0 0
      %1275 = vmatpush1.bf16.xpose.msra.mxu0 0
      %1276 = vmatprep.subr.bf16.mxu0 0
      %1277 = vmatpush1.bf16.xpose.msra.mxu0 0
      %1278 = vmatprep.subr.bf16.mxu0 0
      %1279 = vmatpush1.bf16.xpose.msra.mxu0 0
      %1280 = vmatprep.subr.bf16.mxu0 0
      %1281 = vmatpush1.bf16.xpose.msra.mxu0 0
      %1282 = vmatprep.subr.bf16.mxu0 0
      %1283 = vmatpush1.bf16.xpose.msra.mxu0 0
      %1284 = vmatprep.subr.bf16.mxu0 0
      %1285 = vmatpush1.bf16.xpose.msra.mxu0 0
      %1286 = vmatprep.mubr.bf16.mxu0 0
      %1287 = vmatmul.mubr.bf16.gmra.mrb[0].mxu0 %v1210
      %v1288 = vpop.f32.mrb[0].mxu0
      %v1289 = vadd.f32 0.0, %v1288
      %v1290 = vpop.f32.mrb[0].mxu0
      %v1291 = vpop.f32.mrb[0].mxu0
      %v1292 = vadd.f32 0.0, %v1291
      %v1293 = vpop.f32.mrb[0].mxu0
      %1294 = vdwg.mxu0
      %1295 = vmatprep.subr.bf16.mxu0 0
      %1296 = vmatpush1.bf16.xpose.msra.mxu0 %v898
      %1297 = vmatprep.subr.bf16.mxu0 0
      %1298 = vmatpush1.bf16.xpose.msra.mxu0 0
      %1299 = vmatprep.subr.bf16.mxu0 0
      %1300 = vmatpush1.bf16.xpose.msra.mxu0 0
      %1301 = vmatprep.subr.bf16.mxu0 0
      %1302 = vmatpush1.bf16.xpose.msra.mxu0 0
      %1303 = vmatprep.subr.bf16.mxu0 0
      %1304 = vmatpush1.bf16.xpose.msra.mxu0 0
      %1305 = vmatprep.subr.bf16.mxu0 0
      %1306 = vmatpush1.bf16.xpose.msra.mxu0 0
      %1307 = vmatprep.subr.bf16.mxu0 0
      %1308 = vmatpush1.bf16.xpose.msra.mxu0 0
      %1309 = vmatprep.subr.bf16.mxu0 0
      %1310 = vmatpush1.bf16.xpose.msra.mxu0 0
      %1311 = vmatprep.subr.bf16.mxu0 0
      %1312 = vmatpush1.bf16.xpose.msra.mxu0 0
      %1313 = vmatprep.subr.bf16.mxu0 0
      %1314 = vmatpush1.bf16.xpose.msra.mxu0 0
      %1315 = vmatprep.subr.bf16.mxu0 0
      %1316 = vmatpush1.bf16.xpose.msra.mxu0 0
      %1317 = vmatprep.subr.bf16.mxu0 0
      %1318 = vmatpush1.bf16.xpose.msra.mxu0 0
      %1319 = vmatprep.subr.bf16.mxu0 0
      %1320 = vmatpush1.bf16.xpose.msra.mxu0 0
      %1321 = vmatprep.subr.bf16.mxu0 0
      %1322 = vmatpush1.bf16.xpose.msra.mxu0 0
      %1323 = vmatprep.subr.bf16.mxu0 0
      %1324 = vmatpush1.bf16.xpose.msra.mxu0 0
      %1325 = vmatprep.subr.bf16.mxu0 0
      %1326 = vmatpush1.bf16.xpose.msra.mxu0 0
      %1327 = vmatprep.mubr.bf16.mxu0 0
      %1328 = vmatmul.mubr.bf16.gmra.mrb[0].mxu0 %v1211
      %v1329 = vpop.f32.mrb[0].mxu0
      %v1330 = vadd.f32 0.0, %v1329
      %v1331 = vpop.f32.mrb[0].mxu0
      %v1332 = vpop.f32.mrb[0].mxu0
      %v1333 = vadd.f32 0.0, %v1332
      %v1334 = vpop.f32.mrb[0].mxu0
      %1335 = vdwg.mxu0
      %1336 = vmatprep.subr.bf16.mxu0 0
      %1337 = vmatpush1.bf16.xpose.msra.mxu0 %v899
      %1338 = vmatprep.subr.bf16.mxu0 0
      %1339 = vmatpush1.bf16.xpose.msra.mxu0 0
      %1340 = vmatprep.subr.bf16.mxu0 0
      %1341 = vmatpush1.bf16.xpose.msra.mxu0 0
      %1342 = vmatprep.subr.bf16.mxu0 0
      %1343 = vmatpush1.bf16.xpose.msra.mxu0 0
      %1344 = vmatprep.subr.bf16.mxu0 0
      %1345 = vmatpush1.bf16.xpose.msra.mxu0 0
      %1346 = vmatprep.subr.bf16.mxu0 0
      %1347 = vmatpush1.bf16.xpose.msra.mxu0 0
      %1348 = vmatprep.subr.bf16.mxu0 0
      %1349 = vmatpush1.bf16.xpose.msra.mxu0 0
      %1350 = vmatprep.subr.bf16.mxu0 0
      %1351 = vmatpush1.bf16.xpose.msra.mxu0 0
      %1352 = vmatprep.subr.bf16.mxu0 0
      %1353 = vmatpush1.bf16.xpose.msra.mxu0 0
      %1354 = vmatprep.subr.bf16.mxu0 0
      %1355 = vmatpush1.bf16.xpose.msra.mxu0 0
      %1356 = vmatprep.subr.bf16.mxu0 0
      %1357 = vmatpush1.bf16.xpose.msra.mxu0 0
      %1358 = vmatprep.subr.bf16.mxu0 0
      %1359 = vmatpush1.bf16.xpose.msra.mxu0 0
      %1360 = vmatprep.subr.bf16.mxu0 0
      %1361 = vmatpush1.bf16.xpose.msra.mxu0 0
      %1362 = vmatprep.subr.bf16.mxu0 0
      %1363 = vmatpush1.bf16.xpose.msra.mxu0 0
      %1364 = vmatprep.subr.bf16.mxu0 0
      %1365 = vmatpush1.bf16.xpose.msra.mxu0 0
      %1366 = vmatprep.subr.bf16.mxu0 0
      %1367 = vmatpush1.bf16.xpose.msra.mxu0 0
      %1368 = vmatprep.mubr.bf16.mxu0 0
      %1369 = vmatmul.mubr.bf16.gmra.mrb[0].mxu0 %v1212
      %v1370 = vpop.f32.mrb[0].mxu0
      %v1371 = vadd.f32 0.0, %v1370
      %v1372 = vpop.f32.mrb[0].mxu0
      %v1373 = vpop.f32.mrb[0].mxu0
      %v1374 = vadd.f32 0.0, %v1373
      %v1375 = vpop.f32.mrb[0].mxu0
      %1376 = vdwg.mxu0
      %v1377 = vmul.f32 %v1248, 0.125
      %v1378 = vmul.f32 %v1251, 0.125
      %v1379 = vmul.f32 %v1289, 0.125
      %v1380 = vmul.f32 %v1292, 0.125
      %v1381 = vmul.f32 %v1330, 0.125
      %v1382 = vmul.f32 %v1333, 0.125
      %v1383 = vmul.f32 %v1371, 0.125
      %v1384 = vmul.f32 %v1374, 0.125
      %v1385 = vsel %vm1091, %v1377, -inf
      %1386 = vmax.xlane.f32.xlu0 %v1385
      %v1387 = vpop.xlane.xlu0 %1386
      %v1388 = vsel %vm1091, %v1378, -inf
      %1389 = vmax.xlane.f32.xlu0 %v1388
      %v1390 = vpop.xlane.xlu0 %1389
      %v1391 = vsel %vm1091, %v1379, -inf
      %1392 = vmax.xlane.f32.xlu0 %v1391
      %v1393 = vpop.xlane.xlu0 %1392
      %v1394 = vsel %vm1091, %v1380, -inf
      %1395 = vmax.xlane.f32.xlu0 %v1394
      %v1396 = vpop.xlane.xlu0 %1395
      %v1397 = vsel %vm1091, %v1381, -inf
      %1398 = vmax.xlane.f32.xlu0 %v1397
      %v1399 = vpop.xlane.xlu0 %1398
      %v1400 = vsel %vm1091, %v1382, -inf
      %1401 = vmax.xlane.f32.xlu0 %v1400
      %v1402 = vpop.xlane.xlu0 %1401
      %v1403 = vsel %vm1091, %v1383, -inf
      %1404 = vmax.xlane.f32.xlu0 %v1403
      %v1405 = vpop.xlane.xlu0 %1404
      %v1406 = vsel %vm1091, %v1384, -inf
      %1407 = vmax.xlane.f32.xlu0 %v1406
      %v1408 = vpop.xlane.xlu0 %1407
      %v1409 = vsub.f32 %v1377, %v1387
      %v1410 = vsub.f32 %v1378, %v1390
      %v1411 = vsub.f32 %v1379, %v1393
      %v1412 = vsub.f32 %v1380, %v1396
      %v1413 = vsub.f32 %v1381, %v1399
      %v1414 = vsub.f32 %v1382, %v1402
      %v1415 = vsub.f32 %v1383, %v1405
      %v1416 = vsub.f32 %v1384, %v1408
      %v1417 = vmul.f32 %v1409, 1.442695
      %v1418 = vpow.pop %v1417
      %v1419 = vmul.f32 %v1410, 1.442695
      %v1420 = vpow.pop %v1419
      %v1421 = vmul.f32 %v1411, 1.442695
      %v1422 = vpow.pop %v1421
      %v1423 = vmul.f32 %v1412, 1.442695
      %v1424 = vpow.pop %v1423
      %v1425 = vmul.f32 %v1413, 1.442695
      %v1426 = vpow.pop %v1425
      %v1427 = vmul.f32 %v1414, 1.442695
      %v1428 = vpow.pop %v1427
      %v1429 = vmul.f32 %v1415, 1.442695
      %v1430 = vpow.pop %v1429
      %v1431 = vmul.f32 %v1416, 1.442695
      %v1432 = vpow.pop %v1431
      %v1433 = vsel %vm1091, %v1418, 0.0
      %1434 = vadd.xlane.f32.xlu0 %v1433
      %v1435 = vpop.xlane.xlu0 %1434
      %v1436 = vsel %vm1091, %v1420, 0.0
      %1437 = vadd.xlane.f32.xlu0 %v1436
      %v1438 = vpop.xlane.xlu0 %1437
      %v1439 = vsel %vm1091, %v1422, 0.0
      %1440 = vadd.xlane.f32.xlu0 %v1439
      %v1441 = vpop.xlane.xlu0 %1440
      %v1442 = vsel %vm1091, %v1424, 0.0
      %1443 = vadd.xlane.f32.xlu0 %v1442
      %v1444 = vpop.xlane.xlu0 %1443
      %v1445 = vsel %vm1091, %v1426, 0.0
      %1446 = vadd.xlane.f32.xlu0 %v1445
      %v1447 = vpop.xlane.xlu0 %1446
      %v1448 = vsel %vm1091, %v1428, 0.0
      %1449 = vadd.xlane.f32.xlu0 %v1448
      %v1450 = vpop.xlane.xlu0 %1449
      %v1451 = vsel %vm1091, %v1430, 0.0
      %1452 = vadd.xlane.f32.xlu0 %v1451
      %v1453 = vpop.xlane.xlu0 %1452
      %v1454 = vsel %vm1091, %v1432, 0.0
      %1455 = vadd.xlane.f32.xlu0 %v1454
      %v1456 = vpop.xlane.xlu0 %1455
      %v1457 = vrcp.pop %v1435
      %v1458 = vrcp.pop %v1438
      %v1459 = vrcp.pop %v1441
      %v1460 = vrcp.pop %v1444
      %v1461 = vrcp.pop %v1447
      %v1462 = vrcp.pop %v1450
      %v1463 = vrcp.pop %v1453
      %v1464 = vrcp.pop %v1456
      %v1465 = vmul.f32 %v1418, %v1457
      %v1466 = vmul.f32 %v1420, %v1458
      %v1467 = vmul.f32 %v1422, %v1459
      %v1468 = vmul.f32 %v1424, %v1460
      %v1469 = vmul.f32 %v1426, %v1461
      %v1470 = vmul.f32 %v1428, %v1462
      %v1471 = vmul.f32 %v1430, %v1463
      %v1472 = vmul.f32 %v1432, %v1464
      %v1473 = vpack.c.bf16 %v1466, %v1465
      %v1474 = vpack.c.bf16 %v1468, %v1467
      %v1475 = vpack.c.bf16 %v1470, %v1469
      %v1476 = vpack.c.bf16 %v1472, %v1471
      %v1477 = vmul.f32 %v866, %v1200
      %v1478 = vmul.f32 %v869, %v1200
      %v1479 = vmul.f32 %v874, %v1200
      %v1480 = vmul.f32 %v877, %v1200
      %v1481 = vmul.f32 %v882, %v1200
      %v1482 = vmul.f32 %v885, %v1200
      %v1483 = vmul.f32 %v890, %v1200
      %v1484 = vmul.f32 %v893, %v1200
      %v1485 = vpack.c.bf16 %v1478, %v1477
      %v1486 = vpack.c.bf16 %v1480, %v1479
      %v1487 = vpack.c.bf16 %v1482, %v1481
      %v1488 = vpack.c.bf16 %v1484, %v1483
      %v1490 = vsel %vm1091, %v1473, 0
      %1492 = vmatprep.subr.bf16.mxu0 0
      %1493 = vmatpush1.bf16.msra.mxu0 %v1485
      %1494 = vmatprep.subr.bf16.mxu0 0
      %1495 = vmatpush1.bf16.msra.mxu0 0
      %1496 = vmatprep.subr.bf16.mxu0 0
      %1497 = vmatpush1.bf16.msra.mxu0 0
      %1498 = vmatprep.subr.bf16.mxu0 0
      %1499 = vmatpush1.bf16.msra.mxu0 0
      %1500 = vmatprep.subr.bf16.mxu0 0
      %1501 = vmatpush1.bf16.msra.mxu0 0
      %1502 = vmatprep.subr.bf16.mxu0 0
      %1503 = vmatpush1.bf16.msra.mxu0 0
      %1504 = vmatprep.subr.bf16.mxu0 0
      %1505 = vmatpush1.bf16.msra.mxu0 0
      %1506 = vmatprep.subr.bf16.mxu0 0
      %1507 = vmatpush1.bf16.msra.mxu0 0
      %1508 = vmatprep.subr.bf16.mxu0 0
      %1509 = vmatpush1.bf16.msra.mxu0 0
      %1510 = vmatprep.subr.bf16.mxu0 0
      %1511 = vmatpush1.bf16.msra.mxu0 0
      %1512 = vmatprep.subr.bf16.mxu0 0
      %1513 = vmatpush1.bf16.msra.mxu0 0
      %1514 = vmatprep.subr.bf16.mxu0 0
      %1515 = vmatpush1.bf16.msra.mxu0 0
      %1516 = vmatprep.subr.bf16.mxu0 0
      %1517 = vmatpush1.bf16.msra.mxu0 0
      %1518 = vmatprep.subr.bf16.mxu0 0
      %1519 = vmatpush1.bf16.msra.mxu0 0
      %1520 = vmatprep.subr.bf16.mxu0 0
      %1521 = vmatpush1.bf16.msra.mxu0 0
      %1522 = vmatprep.subr.bf16.mxu0 0
      %1523 = vmatpush1.bf16.msra.mxu0 0
      %1524 = vmatprep.mubr.bf16.mxu0 0
      %1525 = vmatmul.mubr.bf16.gmra.mrb[0].mxu0 %v1490
      %v1526 = vpop.f32.mrb[0].mxu0
      %v1527 = vadd.f32 0.0, %v1526
      %v1528 = vpop.f32.mrb[0].mxu0
      %v1529 = vpop.f32.mrb[0].mxu0
      %v1530 = vadd.f32 0.0, %v1529
      %v1531 = vpop.f32.mrb[0].mxu0
      %1532 = vdwg.mxu0
      %v1534 = vsel %vm1091, %v1474, 0
      %1536 = vmatprep.subr.bf16.mxu0 0
      %1537 = vmatpush1.bf16.msra.mxu0 %v1486
      %1538 = vmatprep.subr.bf16.mxu0 0
      %1539 = vmatpush1.bf16.msra.mxu0 0
      %1540 = vmatprep.subr.bf16.mxu0 0
      %1541 = vmatpush1.bf16.msra.mxu0 0
      %1542 = vmatprep.subr.bf16.mxu0 0
      %1543 = vmatpush1.bf16.msra.mxu0 0
      %1544 = vmatprep.subr.bf16.mxu0 0
      %1545 = vmatpush1.bf16.msra.mxu0 0
      %1546 = vmatprep.subr.bf16.mxu0 0
      %1547 = vmatpush1.bf16.msra.mxu0 0
      %1548 = vmatprep.subr.bf16.mxu0 0
      %1549 = vmatpush1.bf16.msra.mxu0 0
      %1550 = vmatprep.subr.bf16.mxu0 0
      %1551 = vmatpush1.bf16.msra.mxu0 0
      %1552 = vmatprep.subr.bf16.mxu0 0
      %1553 = vmatpush1.bf16.msra.mxu0 0
      %1554 = vmatprep.subr.bf16.mxu0 0
      %1555 = vmatpush1.bf16.msra.mxu0 0
      %1556 = vmatprep.subr.bf16.mxu0 0
      %1557 = vmatpush1.bf16.msra.mxu0 0
      %1558 = vmatprep.subr.bf16.mxu0 0
      %1559 = vmatpush1.bf16.msra.mxu0 0
      %1560 = vmatprep.subr.bf16.mxu0 0
      %1561 = vmatpush1.bf16.msra.mxu0 0
      %1562 = vmatprep.subr.bf16.mxu0 0
      %1563 = vmatpush1.bf16.msra.mxu0 0
      %1564 = vmatprep.subr.bf16.mxu0 0
      %1565 = vmatpush1.bf16.msra.mxu0 0
      %1566 = vmatprep.subr.bf16.mxu0 0
      %1567 = vmatpush1.bf16.msra.mxu0 0
      %1568 = vmatprep.mubr.bf16.mxu0 0
      %1569 = vmatmul.mubr.bf16.gmra.mrb[0].mxu0 %v1534
      %v1570 = vpop.f32.mrb[0].mxu0
      %v1571 = vadd.f32 0.0, %v1570
      %v1572 = vpop.f32.mrb[0].mxu0
      %v1573 = vpop.f32.mrb[0].mxu0
      %v1574 = vadd.f32 0.0, %v1573
      %v1575 = vpop.f32.mrb[0].mxu0
      %1576 = vdwg.mxu0
      %v1578 = vsel %vm1091, %v1475, 0
      %1580 = vmatprep.subr.bf16.mxu0 0
      %1581 = vmatpush1.bf16.msra.mxu0 %v1487
      %1582 = vmatprep.subr.bf16.mxu0 0
      %1583 = vmatpush1.bf16.msra.mxu0 0
      %1584 = vmatprep.subr.bf16.mxu0 0
      %1585 = vmatpush1.bf16.msra.mxu0 0
      %1586 = vmatprep.subr.bf16.mxu0 0
      %1587 = vmatpush1.bf16.msra.mxu0 0
      %1588 = vmatprep.subr.bf16.mxu0 0
      %1589 = vmatpush1.bf16.msra.mxu0 0
      %1590 = vmatprep.subr.bf16.mxu0 0
      %1591 = vmatpush1.bf16.msra.mxu0 0
      %1592 = vmatprep.subr.bf16.mxu0 0
      %1593 = vmatpush1.bf16.msra.mxu0 0
      %1594 = vmatprep.subr.bf16.mxu0 0
      %1595 = vmatpush1.bf16.msra.mxu0 0
      %1596 = vmatprep.subr.bf16.mxu0 0
      %1597 = vmatpush1.bf16.msra.mxu0 0
      %1598 = vmatprep.subr.bf16.mxu0 0
      %1599 = vmatpush1.bf16.msra.mxu0 0
      %1600 = vmatprep.subr.bf16.mxu0 0
      %1601 = vmatpush1.bf16.msra.mxu0 0
      %1602 = vmatprep.subr.bf16.mxu0 0
      %1603 = vmatpush1.bf16.msra.mxu0 0
      %1604 = vmatprep.subr.bf16.mxu0 0
      %1605 = vmatpush1.bf16.msra.mxu0 0
      %1606 = vmatprep.subr.bf16.mxu0 0
      %1607 = vmatpush1.bf16.msra.mxu0 0
      %1608 = vmatprep.subr.bf16.mxu0 0
      %1609 = vmatpush1.bf16.msra.mxu0 0
      %1610 = vmatprep.subr.bf16.mxu0 0
      %1611 = vmatpush1.bf16.msra.mxu0 0
      %1612 = vmatprep.mubr.bf16.mxu0 0
      %1613 = vmatmul.mubr.bf16.gmra.mrb[0].mxu0 %v1578
      %v1614 = vpop.f32.mrb[0].mxu0
      %v1615 = vadd.f32 0.0, %v1614
      %v1616 = vpop.f32.mrb[0].mxu0
      %v1617 = vpop.f32.mrb[0].mxu0
      %v1618 = vadd.f32 0.0, %v1617
      %v1619 = vpop.f32.mrb[0].mxu0
      %1620 = vdwg.mxu0
      %v1622 = vsel %vm1091, %v1476, 0
      %1624 = vmatprep.subr.bf16.mxu0 0
      %1625 = vmatpush1.bf16.msra.mxu0 %v1488
      %1626 = vmatprep.subr.bf16.mxu0 0
      %1627 = vmatpush1.bf16.msra.mxu0 0
      %1628 = vmatprep.subr.bf16.mxu0 0
      %1629 = vmatpush1.bf16.msra.mxu0 0
      %1630 = vmatprep.subr.bf16.mxu0 0
      %1631 = vmatpush1.bf16.msra.mxu0 0
      %1632 = vmatprep.subr.bf16.mxu0 0
      %1633 = vmatpush1.bf16.msra.mxu0 0
      %1634 = vmatprep.subr.bf16.mxu0 0
      %1635 = vmatpush1.bf16.msra.mxu0 0
      %1636 = vmatprep.subr.bf16.mxu0 0
      %1637 = vmatpush1.bf16.msra.mxu0 0
      %1638 = vmatprep.subr.bf16.mxu0 0
      %1639 = vmatpush1.bf16.msra.mxu0 0
      %1640 = vmatprep.subr.bf16.mxu0 0
      %1641 = vmatpush1.bf16.msra.mxu0 0
      %1642 = vmatprep.subr.bf16.mxu0 0
      %1643 = vmatpush1.bf16.msra.mxu0 0
      %1644 = vmatprep.subr.bf16.mxu0 0
      %1645 = vmatpush1.bf16.msra.mxu0 0
      %1646 = vmatprep.subr.bf16.mxu0 0
      %1647 = vmatpush1.bf16.msra.mxu0 0
      %1648 = vmatprep.subr.bf16.mxu0 0
      %1649 = vmatpush1.bf16.msra.mxu0 0
      %1650 = vmatprep.subr.bf16.mxu0 0
      %1651 = vmatpush1.bf16.msra.mxu0 0
      %1652 = vmatprep.subr.bf16.mxu0 0
      %1653 = vmatpush1.bf16.msra.mxu0 0
      %1654 = vmatprep.subr.bf16.mxu0 0
      %1655 = vmatpush1.bf16.msra.mxu0 0
      %1656 = vmatprep.mubr.bf16.mxu0 0
      %1657 = vmatmul.mubr.bf16.gmra.mrb[0].mxu0 %v1622
      %v1658 = vpop.f32.mrb[0].mxu0
      %v1659 = vadd.f32 0.0, %v1658
      %v1660 = vpop.f32.mrb[0].mxu0
      %v1661 = vpop.f32.mrb[0].mxu0
      %v1662 = vadd.f32 0.0, %v1661
      %v1663 = vpop.f32.mrb[0].mxu0
      %1664 = vdwg.mxu0
      %v1666 = vsel %vm1091, %v1180, 0
      %1668 = vmatprep.subr.bf16.mxu0 0
      %1669 = vmatpush1.bf16.msra.mxu0 %v1192
      %1670 = vmatprep.subr.bf16.mxu0 0
      %1671 = vmatpush1.bf16.msra.mxu0 0
      %1672 = vmatprep.subr.bf16.mxu0 0
      %1673 = vmatpush1.bf16.msra.mxu0 0
      %1674 = vmatprep.subr.bf16.mxu0 0
      %1675 = vmatpush1.bf16.msra.mxu0 0
      %1676 = vmatprep.subr.bf16.mxu0 0
      %1677 = vmatpush1.bf16.msra.mxu0 0
      %1678 = vmatprep.subr.bf16.mxu0 0
      %1679 = vmatpush1.bf16.msra.mxu0 0
      %1680 = vmatprep.subr.bf16.mxu0 0
      %1681 = vmatpush1.bf16.msra.mxu0 0
      %1682 = vmatprep.subr.bf16.mxu0 0
      %1683 = vmatpush1.bf16.msra.mxu0 0
      %1684 = vmatprep.subr.bf16.mxu0 0
      %1685 = vmatpush1.bf16.msra.mxu0 0
      %1686 = vmatprep.subr.bf16.mxu0 0
      %1687 = vmatpush1.bf16.msra.mxu0 0
      %1688 = vmatprep.subr.bf16.mxu0 0
      %1689 = vmatpush1.bf16.msra.mxu0 0
      %1690 = vmatprep.subr.bf16.mxu0 0
      %1691 = vmatpush1.bf16.msra.mxu0 0
      %1692 = vmatprep.subr.bf16.mxu0 0
      %1693 = vmatpush1.bf16.msra.mxu0 0
      %1694 = vmatprep.subr.bf16.mxu0 0
      %1695 = vmatpush1.bf16.msra.mxu0 0
      %1696 = vmatprep.subr.bf16.mxu0 0
      %1697 = vmatpush1.bf16.msra.mxu0 0
      %1698 = vmatprep.subr.bf16.mxu0 0
      %1699 = vmatpush1.bf16.msra.mxu0 0
      %1700 = vmatprep.mubr.bf16.mxu0 0
      %1701 = vmatmul.mubr.bf16.gmra.mrb[0].mxu0 %v1666
      %v1702 = vpop.f32.mrb[0].mxu0
      %v1703 = vadd.f32 %v1527, %v1702
      %v1704 = vpop.f32.mrb[0].mxu0
      %v1705 = vpop.f32.mrb[0].mxu0
      %v1706 = vadd.f32 %v1530, %v1705
      %v1707 = vpop.f32.mrb[0].mxu0
      %1708 = vdwg.mxu0
      %v1710 = vsel %vm1091, %v1181, 0
      %1712 = vmatprep.subr.bf16.mxu0 0
      %1713 = vmatpush1.bf16.msra.mxu0 %v1193
      %1714 = vmatprep.subr.bf16.mxu0 0
      %1715 = vmatpush1.bf16.msra.mxu0 0
      %1716 = vmatprep.subr.bf16.mxu0 0
      %1717 = vmatpush1.bf16.msra.mxu0 0
      %1718 = vmatprep.subr.bf16.mxu0 0
      %1719 = vmatpush1.bf16.msra.mxu0 0
      %1720 = vmatprep.subr.bf16.mxu0 0
      %1721 = vmatpush1.bf16.msra.mxu0 0
      %1722 = vmatprep.subr.bf16.mxu0 0
      %1723 = vmatpush1.bf16.msra.mxu0 0
      %1724 = vmatprep.subr.bf16.mxu0 0
      %1725 = vmatpush1.bf16.msra.mxu0 0
      %1726 = vmatprep.subr.bf16.mxu0 0
      %1727 = vmatpush1.bf16.msra.mxu0 0
      %1728 = vmatprep.subr.bf16.mxu0 0
      %1729 = vmatpush1.bf16.msra.mxu0 0
      %1730 = vmatprep.subr.bf16.mxu0 0
      %1731 = vmatpush1.bf16.msra.mxu0 0
      %1732 = vmatprep.subr.bf16.mxu0 0
      %1733 = vmatpush1.bf16.msra.mxu0 0
      %1734 = vmatprep.subr.bf16.mxu0 0
      %1735 = vmatpush1.bf16.msra.mxu0 0
      %1736 = vmatprep.subr.bf16.mxu0 0
      %1737 = vmatpush1.bf16.msra.mxu0 0
      %1738 = vmatprep.subr.bf16.mxu0 0
      %1739 = vmatpush1.bf16.msra.mxu0 0
      %1740 = vmatprep.subr.bf16.mxu0 0
      %1741 = vmatpush1.bf16.msra.mxu0 0
      %1742 = vmatprep.subr.bf16.mxu0 0
      %1743 = vmatpush1.bf16.msra.mxu0 0
      %1744 = vmatprep.mubr.bf16.mxu0 0
      %1745 = vmatmul.mubr.bf16.gmra.mrb[0].mxu0 %v1710
      %v1746 = vpop.f32.mrb[0].mxu0
      %v1747 = vadd.f32 %v1571, %v1746
      %v1748 = vpop.f32.mrb[0].mxu0
      %v1749 = vpop.f32.mrb[0].mxu0
      %v1750 = vadd.f32 %v1574, %v1749
      %v1751 = vpop.f32.mrb[0].mxu0
      %1752 = vdwg.mxu0
      %v1754 = vsel %vm1091, %v1182, 0
      %1756 = vmatprep.subr.bf16.mxu0 0
      %1757 = vmatpush1.bf16.msra.mxu0 %v1194
      %1758 = vmatprep.subr.bf16.mxu0 0
      %1759 = vmatpush1.bf16.msra.mxu0 0
      %1760 = vmatprep.subr.bf16.mxu0 0
      %1761 = vmatpush1.bf16.msra.mxu0 0
      %1762 = vmatprep.subr.bf16.mxu0 0
      %1763 = vmatpush1.bf16.msra.mxu0 0
      %1764 = vmatprep.subr.bf16.mxu0 0
      %1765 = vmatpush1.bf16.msra.mxu0 0
      %1766 = vmatprep.subr.bf16.mxu0 0
      %1767 = vmatpush1.bf16.msra.mxu0 0
      %1768 = vmatprep.subr.bf16.mxu0 0
      %1769 = vmatpush1.bf16.msra.mxu0 0
      %1770 = vmatprep.subr.bf16.mxu0 0
      %1771 = vmatpush1.bf16.msra.mxu0 0
      %1772 = vmatprep.subr.bf16.mxu0 0
      %1773 = vmatpush1.bf16.msra.mxu0 0
      %1774 = vmatprep.subr.bf16.mxu0 0
      %1775 = vmatpush1.bf16.msra.mxu0 0
      %1776 = vmatprep.subr.bf16.mxu0 0
      %1777 = vmatpush1.bf16.msra.mxu0 0
      %1778 = vmatprep.subr.bf16.mxu0 0
      %1779 = vmatpush1.bf16.msra.mxu0 0
      %1780 = vmatprep.subr.bf16.mxu0 0
      %1781 = vmatpush1.bf16.msra.mxu0 0
      %1782 = vmatprep.subr.bf16.mxu0 0
      %1783 = vmatpush1.bf16.msra.mxu0 0
      %1784 = vmatprep.subr.bf16.mxu0 0
      %1785 = vmatpush1.bf16.msra.mxu0 0
      %1786 = vmatprep.subr.bf16.mxu0 0
      %1787 = vmatpush1.bf16.msra.mxu0 0
      %1788 = vmatprep.mubr.bf16.mxu0 0
      %1789 = vmatmul.mubr.bf16.gmra.mrb[0].mxu0 %v1754
      %v1790 = vpop.f32.mrb[0].mxu0
      %v1791 = vadd.f32 %v1615, %v1790
      %v1792 = vpop.f32.mrb[0].mxu0
      %v1793 = vpop.f32.mrb[0].mxu0
      %v1794 = vadd.f32 %v1618, %v1793
      %v1795 = vpop.f32.mrb[0].mxu0
      %1796 = vdwg.mxu0
      %v1798 = vsel %vm1091, %v1183, 0
      %1800 = vmatprep.subr.bf16.mxu0 0
      %1801 = vmatpush1.bf16.msra.mxu0 %v1195
      %1802 = vmatprep.subr.bf16.mxu0 0
      %1803 = vmatpush1.bf16.msra.mxu0 0
      %1804 = vmatprep.subr.bf16.mxu0 0
      %1805 = vmatpush1.bf16.msra.mxu0 0
      %1806 = vmatprep.subr.bf16.mxu0 0
      %1807 = vmatpush1.bf16.msra.mxu0 0
      %1808 = vmatprep.subr.bf16.mxu0 0
      %1809 = vmatpush1.bf16.msra.mxu0 0
      %1810 = vmatprep.subr.bf16.mxu0 0
      %1811 = vmatpush1.bf16.msra.mxu0 0
      %1812 = vmatprep.subr.bf16.mxu0 0
      %1813 = vmatpush1.bf16.msra.mxu0 0
      %1814 = vmatprep.subr.bf16.mxu0 0
      %1815 = vmatpush1.bf16.msra.mxu0 0
      %1816 = vmatprep.subr.bf16.mxu0 0
      %1817 = vmatpush1.bf16.msra.mxu0 0
      %1818 = vmatprep.subr.bf16.mxu0 0
      %1819 = vmatpush1.bf16.msra.mxu0 0
      %1820 = vmatprep.subr.bf16.mxu0 0
      %1821 = vmatpush1.bf16.msra.mxu0 0
      %1822 = vmatprep.subr.bf16.mxu0 0
      %1823 = vmatpush1.bf16.msra.mxu0 0
      %1824 = vmatprep.subr.bf16.mxu0 0
      %1825 = vmatpush1.bf16.msra.mxu0 0
      %1826 = vmatprep.subr.bf16.mxu0 0
      %1827 = vmatpush1.bf16.msra.mxu0 0
      %1828 = vmatprep.subr.bf16.mxu0 0
      %1829 = vmatpush1.bf16.msra.mxu0 0
      %1830 = vmatprep.subr.bf16.mxu0 0
      %1831 = vmatpush1.bf16.msra.mxu0 0
      %1832 = vmatprep.mubr.bf16.mxu0 0
      %1833 = vmatmul.mubr.bf16.gmra.mrb[0].mxu0 %v1798
      %v1834 = vpop.f32.mrb[0].mxu0
      %v1835 = vadd.f32 %v1659, %v1834
      %v1836 = vpop.f32.mrb[0].mxu0
      %v1837 = vpop.f32.mrb[0].mxu0
      %v1838 = vadd.f32 %v1662, %v1837
      %v1839 = vpop.f32.mrb[0].mxu0
      %1840 = vdwg.mxu0
      %v1841 = vpack.c.bf16 %v1706, %v1703
      %v1842 = vpack.c.bf16 %v1750, %v1747
      %v1843 = vpack.c.bf16 %v1794, %v1791
      %v1844 = vpack.c.bf16 %v1838, %v1835
      %v1845 = vld [vmem:[%s5] sm:$0xf]
      %v1846 = vld [vmem:[%s5 + $0x4] sm:$0xf]
      %v1847 = vld [vmem:[%s5 + $0x8] sm:$0xf]
      %v1848 = vld [vmem:[%s5 + $0xc] sm:$0xf]
      %v1849 = vld [vmem:[%s5 + $0x10] sm:$0xf]
      %v1850 = vld [vmem:[%s5 + $0x14] sm:$0xf]
      %v1851 = vld [vmem:[%s5 + $0x18] sm:$0xf]
      %v1852 = vld [vmem:[%s5 + $0x1c] sm:$0xf]
      %v1853 = vld [vmem:[%s5 + $0x20] sm:$0xf]
      %v1854 = vld [vmem:[%s5 + $0x24] sm:$0xf]
      %v1855 = vld [vmem:[%s5 + $0x28] sm:$0xf]
      %v1856 = vld [vmem:[%s5 + $0x2c] sm:$0xf]
      %v1857 = vld [vmem:[%s5 + $0x30] sm:$0xf]
      %v1858 = vld [vmem:[%s5 + $0x34] sm:$0xf]
      %v1859 = vld [vmem:[%s5 + $0x38] sm:$0xf]
      %v1860 = vld [vmem:[%s5 + $0x3c] sm:$0xf]
      %v1861 = vld [vmem:[%s6] sm:$0x1]
      %v1863 = vlaneseq
      %v1864 = vshrl.u32 %v1863, 7
      %v1865 = vsub.s32 0, %v1864
      %v1866 = vrot.slane %v1861, %v1865
      %v1884 = vunpack.c.l.b16 %v1845
      %v1885 = vunpack.c.l.b16 %v1846
      %v1886 = vunpack.c.l.b16 %v1847
      %v1887 = vunpack.c.l.b16 %v1848
      %v1888 = vunpack.c.l.b16 %v1849
      %v1889 = vunpack.c.l.b16 %v1850
      %v1890 = vunpack.c.l.b16 %v1851
      %v1891 = vunpack.c.l.b16 %v1852
      %v1892 = vunpack.c.l.b16 %v1853
      %v1893 = vunpack.c.l.b16 %v1854
      %v1894 = vunpack.c.l.b16 %v1855
      %v1895 = vunpack.c.l.b16 %v1856
      %v1896 = vunpack.c.l.b16 %v1857
      %v1897 = vunpack.c.l.b16 %v1858
      %v1898 = vunpack.c.l.b16 %v1859
      %v1899 = vunpack.c.l.b16 %v1860
      %v1900 = vpack.c.b16 %v1885, %v1884
      %v1901 = vpack.c.b16 %v1887, %v1886
      %v1902 = vpack.c.b16 %v1889, %v1888
      %v1903 = vpack.c.b16 %v1891, %v1890
      %v1904 = vpack.c.b16 %v1893, %v1892
      %v1905 = vpack.c.b16 %v1895, %v1894
      %v1906 = vpack.c.b16 %v1897, %v1896
      %v1907 = vpack.c.b16 %v1899, %v1898
      %1916 = vmatprep.subr.bf16.mxu0 0
      %1917 = vmatpush1.bf16.msra.mxu0 %v1900
      %1918 = vmatprep.subr.bf16.mxu0 0
      %1919 = vmatpush1.bf16.msra.mxu0 %v1901
      %1920 = vmatprep.subr.bf16.mxu0 0
      %1921 = vmatpush1.bf16.msra.mxu0 %v1902
      %1922 = vmatprep.subr.bf16.mxu0 0
      %1923 = vmatpush1.bf16.msra.mxu0 %v1903
      %1924 = vmatprep.subr.bf16.mxu0 0
      %1925 = vmatpush1.bf16.msra.mxu0 %v1904
      %1926 = vmatprep.subr.bf16.mxu0 0
      %1927 = vmatpush1.bf16.msra.mxu0 %v1905
      %1928 = vmatprep.subr.bf16.mxu0 0
      %1929 = vmatpush1.bf16.msra.mxu0 %v1906
      %1930 = vmatprep.subr.bf16.mxu0 0
      %1931 = vmatpush1.bf16.msra.mxu0 %v1907
      %1932 = vmatprep.subr.bf16.mxu0 0
      %1933 = vmatpush1.bf16.msra.mxu0 0
      %1934 = vmatprep.subr.bf16.mxu0 0
      %1935 = vmatpush1.bf16.msra.mxu0 0
      %1936 = vmatprep.subr.bf16.mxu0 0
      %1937 = vmatpush1.bf16.msra.mxu0 0
      %1938 = vmatprep.subr.bf16.mxu0 0
      %1939 = vmatpush1.bf16.msra.mxu0 0
      %1940 = vmatprep.subr.bf16.mxu0 0
      %1941 = vmatpush1.bf16.msra.mxu0 0
      %1942 = vmatprep.subr.bf16.mxu0 0
      %1943 = vmatpush1.bf16.msra.mxu0 0
      %1944 = vmatprep.subr.bf16.mxu0 0
      %1945 = vmatpush1.bf16.msra.mxu0 0
      %1946 = vmatprep.subr.bf16.mxu0 0
      %1947 = vmatpush1.bf16.msra.mxu0 0
      %1948 = vmatprep.mubr.bf16.mxu0 0
      %1949 = vmatmul.mubr.bf16.gmra.mrb[0].mxu0 %v1841
      %v1950 = vpop.f32.mrb[0].mxu0
      %v1951 = vadd.f32 %v1866, %v1950
      %v1952 = vpop.f32.mrb[0].mxu0
      %v1953 = vpop.f32.mrb[0].mxu0
      %v1954 = vadd.f32 %v1866, %v1953
      %v1955 = vpop.f32.mrb[0].mxu0
      %1956 = vmatprep.mubr.bf16.mxu0 0
      %1957 = vmatmul.mubr.bf16.gmra.mrb[0].mxu0 %v1842
      %v1958 = vpop.f32.mrb[0].mxu0
      %v1959 = vadd.f32 %v1866, %v1958
      %v1960 = vpop.f32.mrb[0].mxu0
      %v1961 = vpop.f32.mrb[0].mxu0
      %v1962 = vadd.f32 %v1866, %v1961
      %v1963 = vpop.f32.mrb[0].mxu0
      %1964 = vmatprep.mubr.bf16.mxu0 0
      %1965 = vmatmul.mubr.bf16.gmra.mrb[0].mxu0 %v1843
      %v1966 = vpop.f32.mrb[0].mxu0
      %v1967 = vadd.f32 %v1866, %v1966
      %v1968 = vpop.f32.mrb[0].mxu0
      %v1969 = vpop.f32.mrb[0].mxu0
      %v1970 = vadd.f32 %v1866, %v1969
      %v1971 = vpop.f32.mrb[0].mxu0
      %1972 = vmatprep.mubr.bf16.mxu0 0
      %1973 = vmatmul.mubr.bf16.gmra.mrb[0].mxu0 %v1844
      %v1974 = vpop.f32.mrb[0].mxu0
      %v1975 = vadd.f32 %v1866, %v1974
      %v1976 = vpop.f32.mrb[0].mxu0
      %v1977 = vpop.f32.mrb[0].mxu0
      %v1978 = vadd.f32 %v1866, %v1977
      %v1979 = vpop.f32.mrb[0].mxu0
      %1980 = vdwg.mxu0
      %v1981 = vadd.f32 %v450, %v1951
      %v1982 = vadd.f32 %v451, %v1954
      %v1983 = vadd.f32 %v452, %v1959
      %v1984 = vadd.f32 %v453, %v1962
      %v1985 = vadd.f32 %v454, %v1967
      %v1986 = vadd.f32 %v455, %v1970
      %v1987 = vadd.f32 %v456, %v1975
      %v1988 = vadd.f32 %v457, %v1978
      %v1989 = vld [vmem:[%s7] sm:$0x1]
      %v1990 = vld [vmem:[%s8] sm:$0x1]
      %1991 = vadd.xlane.f32.xlu0 %v1981
      %v1992 = vpop.xlane.xlu0 %1991
      %1993 = vadd.xlane.f32.xlu0 %v1982
      %v1994 = vpop.xlane.xlu0 %1993
      %1995 = vadd.xlane.f32.xlu0 %v1983
      %v1996 = vpop.xlane.xlu0 %1995
      %1997 = vadd.xlane.f32.xlu0 %v1984
      %v1998 = vpop.xlane.xlu0 %1997
      %1999 = vadd.xlane.f32.xlu0 %v1985
      %v2000 = vpop.xlane.xlu0 %1999
      %2001 = vadd.xlane.f32.xlu0 %v1986
      %v2002 = vpop.xlane.xlu0 %2001
      %2003 = vadd.xlane.f32.xlu0 %v1987
      %v2004 = vpop.xlane.xlu0 %2003
      %2005 = vadd.xlane.f32.xlu0 %v1988
      %v2006 = vpop.xlane.xlu0 %2005
      %v2007 = vmul.f32 %v1992, %v476
      %v2008 = vmul.f32 %v1994, %v476
      %v2009 = vmul.f32 %v1996, %v476
      %v2010 = vmul.f32 %v1998, %v476
      %v2011 = vmul.f32 %v2000, %v476
      %v2012 = vmul.f32 %v2002, %v476
      %v2013 = vmul.f32 %v2004, %v476
      %v2014 = vmul.f32 %v2006, %v476
      %v2015 = vsub.f32 %v1981, %v2007
      %v2016 = vsub.f32 %v1982, %v2008
      %v2017 = vsub.f32 %v1983, %v2009
      %v2018 = vsub.f32 %v1984, %v2010
      %v2019 = vsub.f32 %v1985, %v2011
      %v2020 = vsub.f32 %v1986, %v2012
      %v2021 = vsub.f32 %v1987, %v2013
      %v2022 = vsub.f32 %v1988, %v2014
      %v2023 = vmul.f32 %v2015, %v2015
      %v2024 = vmul.f32 %v2016, %v2016
      %v2025 = vmul.f32 %v2017, %v2017
      %v2026 = vmul.f32 %v2018, %v2018
      %v2027 = vmul.f32 %v2019, %v2019
      %v2028 = vmul.f32 %v2020, %v2020
      %v2029 = vmul.f32 %v2021, %v2021
      %v2030 = vmul.f32 %v2022, %v2022
      %2031 = vadd.xlane.f32.xlu0 %v2023
      %v2032 = vpop.xlane.xlu0 %2031
      %2033 = vadd.xlane.f32.xlu0 %v2024
      %v2034 = vpop.xlane.xlu0 %2033
      %2035 = vadd.xlane.f32.xlu0 %v2025
      %v2036 = vpop.xlane.xlu0 %2035
      %2037 = vadd.xlane.f32.xlu0 %v2026
      %v2038 = vpop.xlane.xlu0 %2037
      %2039 = vadd.xlane.f32.xlu0 %v2027
      %v2040 = vpop.xlane.xlu0 %2039
      %2041 = vadd.xlane.f32.xlu0 %v2028
      %v2042 = vpop.xlane.xlu0 %2041
      %2043 = vadd.xlane.f32.xlu0 %v2029
      %v2044 = vpop.xlane.xlu0 %2043
      %2045 = vadd.xlane.f32.xlu0 %v2030
      %v2046 = vpop.xlane.xlu0 %2045
      %v2047 = vmul.f32 %v2032, %v476
      %v2048 = vmul.f32 %v2034, %v476
      %v2049 = vmul.f32 %v2036, %v476
      %v2050 = vmul.f32 %v2038, %v476
      %v2051 = vmul.f32 %v2040, %v476
      %v2052 = vmul.f32 %v2042, %v476
      %v2053 = vmul.f32 %v2044, %v476
      %v2054 = vmul.f32 %v2046, %v476
      %v2055 = vadd.f32 %v2047, 1e-05
      %v2056 = vadd.f32 %v2048, 1e-05
      %v2057 = vadd.f32 %v2049, 1e-05
      %v2058 = vadd.f32 %v2050, 1e-05
      %v2059 = vadd.f32 %v2051, 1e-05
      %v2060 = vadd.f32 %v2052, 1e-05
      %v2061 = vadd.f32 %v2053, 1e-05
      %v2062 = vadd.f32 %v2054, 1e-05
      %v2063 = vrsqrt.pop %v2055
      %v2064 = vrsqrt.pop %v2056
      %v2065 = vrsqrt.pop %v2057
      %v2066 = vrsqrt.pop %v2058
      %v2067 = vrsqrt.pop %v2059
      %v2068 = vrsqrt.pop %v2060
      %v2069 = vrsqrt.pop %v2061
      %v2070 = vrsqrt.pop %v2062
      %v2071 = vmul.f32 %v2015, %v2063
      %v2072 = vmul.f32 %v2016, %v2064
      %v2073 = vmul.f32 %v2017, %v2065
      %v2074 = vmul.f32 %v2018, %v2066
      %v2075 = vmul.f32 %v2019, %v2067
      %v2076 = vmul.f32 %v2020, %v2068
      %v2077 = vmul.f32 %v2021, %v2069
      %v2078 = vmul.f32 %v2022, %v2070
      %v2080 = vlaneseq
      %v2081 = vshrl.u32 %v2080, 7
      %v2082 = vsub.s32 0, %v2081
      %v2083 = vrot.slane %v1989, %v2082
      %v2085 = vmul.f32 %v2071, %v2083
      %v2086 = vmul.f32 %v2072, %v2083
      %v2087 = vmul.f32 %v2073, %v2083
      %v2088 = vmul.f32 %v2074, %v2083
      %v2089 = vmul.f32 %v2075, %v2083
      %v2090 = vmul.f32 %v2076, %v2083
      %v2091 = vmul.f32 %v2077, %v2083
      %v2092 = vmul.f32 %v2078, %v2083
      %v2094 = vlaneseq
      %v2095 = vshrl.u32 %v2094, 7
      %v2096 = vsub.s32 0, %v2095
      %v2097 = vrot.slane %v1990, %v2096
      %v2099 = vadd.f32 %v2085, %v2097
      %v2100 = vadd.f32 %v2086, %v2097
      %v2101 = vadd.f32 %v2087, %v2097
      %v2102 = vadd.f32 %v2088, %v2097
      %v2103 = vadd.f32 %v2089, %v2097
      %v2104 = vadd.f32 %v2090, %v2097
      %v2105 = vadd.f32 %v2091, %v2097
      %v2106 = vadd.f32 %v2092, %v2097
      %v2107 = vpack.c.bf16 %v2100, %v2099
      %v2108 = vpack.c.bf16 %v2102, %v2101
      %v2109 = vpack.c.bf16 %v2104, %v2103
      %v2110 = vpack.c.bf16 %v2106, %v2105
      %v2111 = vld [vmem:[%s9] sm:$0xff]
      %v2112 = vld [vmem:[%s9 + $0x8] sm:$0xff]
      %v2113 = vld [vmem:[%s9 + $0x10] sm:$0xff]
      %v2114 = vld [vmem:[%s9 + $0x18] sm:$0xff]
      %v2115 = vld [vmem:[%s9 + $0x20] sm:$0xff]
      %v2116 = vld [vmem:[%s9 + $0x28] sm:$0xff]
      %v2117 = vld [vmem:[%s9 + $0x30] sm:$0xff]
      %v2118 = vld [vmem:[%s9 + $0x38] sm:$0xff]
      %v2119 = vld [vmem:[%s9 + $0x40] sm:$0xff]
      %v2120 = vld [vmem:[%s9 + $0x48] sm:$0xff]
      %v2121 = vld [vmem:[%s9 + $0x50] sm:$0xff]
      %v2122 = vld [vmem:[%s9 + $0x58] sm:$0xff]
      %v2123 = vld [vmem:[%s9 + $0x60] sm:$0xff]
      %v2124 = vld [vmem:[%s9 + $0x68] sm:$0xff]
      %v2125 = vld [vmem:[%s9 + $0x70] sm:$0xff]
      %v2126 = vld [vmem:[%s9 + $0x78] sm:$0xff]
      %v2127 = vld [vmem:[%s9 + $0x80] sm:$0xff]
      %v2128 = vld [vmem:[%s9 + $0x88] sm:$0xff]
      %v2129 = vld [vmem:[%s9 + $0x90] sm:$0xff]
      %v2130 = vld [vmem:[%s9 + $0x98] sm:$0xff]
      %v2131 = vld [vmem:[%s9 + $0xa0] sm:$0xff]
      %v2132 = vld [vmem:[%s9 + $0xa8] sm:$0xff]
      %v2133 = vld [vmem:[%s9 + $0xb0] sm:$0xff]
      %v2134 = vld [vmem:[%s9 + $0xb8] sm:$0xff]
      %v2135 = vld [vmem:[%s9 + $0xc0] sm:$0xff]
      %v2136 = vld [vmem:[%s9 + $0xc8] sm:$0xff]
      %v2137 = vld [vmem:[%s9 + $0xd0] sm:$0xff]
      %v2138 = vld [vmem:[%s9 + $0xd8] sm:$0xff]
      %v2139 = vld [vmem:[%s9 + $0xe0] sm:$0xff]
      %v2140 = vld [vmem:[%s9 + $0xe8] sm:$0xff]
      %v2141 = vld [vmem:[%s9 + $0xf0] sm:$0xff]
      %v2142 = vld [vmem:[%s9 + $0xf8] sm:$0xff]
      %v2143 = vld [vmem:[%s10] sm:$0xf]
      %v2145 = vlaneseq
      %v2146 = vshrl.u32 %v2145, 7
      %v2147 = vsub.s32 0, %v2146
      %v2148 = vrot.slane %v2143, %v2147
      %v2149 = vlaneseq
      %v2150 = vshrl.u32 %v2149, 7
      %v2151 = vsub.s32 1, %v2150
      %v2152 = vrot.slane %v2143, %v2151
      %v2153 = vlaneseq
      %v2154 = vshrl.u32 %v2153, 7
      %v2155 = vsub.s32 2, %v2154
      %v2156 = vrot.slane %v2143, %v2155
      %v2157 = vlaneseq
      %v2158 = vshrl.u32 %v2157, 7
      %v2159 = vsub.s32 3, %v2158
      %v2160 = vrot.slane %v2143, %v2159
      %v2197 = vunpack.c.l.b16 %v2111
      %v2198 = vunpack.c.h.b16 %v2111
      %v2199 = vunpack.c.l.b16 %v2112
      %v2200 = vunpack.c.h.b16 %v2112
      %v2201 = vunpack.c.l.b16 %v2113
      %v2202 = vunpack.c.h.b16 %v2113
      %v2203 = vunpack.c.l.b16 %v2114
      %v2204 = vunpack.c.h.b16 %v2114
      %v2205 = vunpack.c.l.b16 %v2115
      %v2206 = vunpack.c.h.b16 %v2115
      %v2207 = vunpack.c.l.b16 %v2116
      %v2208 = vunpack.c.h.b16 %v2116
      %v2209 = vunpack.c.l.b16 %v2117
      %v2210 = vunpack.c.h.b16 %v2117
      %v2211 = vunpack.c.l.b16 %v2118
      %v2212 = vunpack.c.h.b16 %v2118
      %v2213 = vunpack.c.l.b16 %v2119
      %v2214 = vunpack.c.h.b16 %v2119
      %v2215 = vunpack.c.l.b16 %v2120
      %v2216 = vunpack.c.h.b16 %v2120
      %v2217 = vunpack.c.l.b16 %v2121
      %v2218 = vunpack.c.h.b16 %v2121
      %v2219 = vunpack.c.l.b16 %v2122
      %v2220 = vunpack.c.h.b16 %v2122
      %v2221 = vunpack.c.l.b16 %v2123
      %v2222 = vunpack.c.h.b16 %v2123
      %v2223 = vunpack.c.l.b16 %v2124
      %v2224 = vunpack.c.h.b16 %v2124
      %v2225 = vunpack.c.l.b16 %v2125
      %v2226 = vunpack.c.h.b16 %v2125
      %v2227 = vunpack.c.l.b16 %v2126
      %v2228 = vunpack.c.h.b16 %v2126
      %v2229 = vunpack.c.l.b16 %v2127
      %v2230 = vunpack.c.h.b16 %v2127
      %v2231 = vunpack.c.l.b16 %v2128
      %v2232 = vunpack.c.h.b16 %v2128
      %v2233 = vunpack.c.l.b16 %v2129
      %v2234 = vunpack.c.h.b16 %v2129
      %v2235 = vunpack.c.l.b16 %v2130
      %v2236 = vunpack.c.h.b16 %v2130
      %v2237 = vunpack.c.l.b16 %v2131
      %v2238 = vunpack.c.h.b16 %v2131
      %v2239 = vunpack.c.l.b16 %v2132
      %v2240 = vunpack.c.h.b16 %v2132
      %v2241 = vunpack.c.l.b16 %v2133
      %v2242 = vunpack.c.h.b16 %v2133
      %v2243 = vunpack.c.l.b16 %v2134
      %v2244 = vunpack.c.h.b16 %v2134
      %v2245 = vunpack.c.l.b16 %v2135
      %v2246 = vunpack.c.h.b16 %v2135
      %v2247 = vunpack.c.l.b16 %v2136
      %v2248 = vunpack.c.h.b16 %v2136
      %v2249 = vunpack.c.l.b16 %v2137
      %v2250 = vunpack.c.h.b16 %v2137
      %v2251 = vunpack.c.l.b16 %v2138
      %v2252 = vunpack.c.h.b16 %v2138
      %v2253 = vunpack.c.l.b16 %v2139
      %v2254 = vunpack.c.h.b16 %v2139
      %v2255 = vunpack.c.l.b16 %v2140
      %v2256 = vunpack.c.h.b16 %v2140
      %v2257 = vunpack.c.l.b16 %v2141
      %v2258 = vunpack.c.h.b16 %v2141
      %v2259 = vunpack.c.l.b16 %v2142
      %v2260 = vunpack.c.h.b16 %v2142
      %v2261 = vpack.c.b16 %v2201, %v2197
      %v2262 = vpack.c.b16 %v2202, %v2198
      %v2263 = vpack.c.b16 %v2203, %v2199
      %v2264 = vpack.c.b16 %v2204, %v2200
      %v2265 = vpack.c.b16 %v2209, %v2205
      %v2266 = vpack.c.b16 %v2210, %v2206
      %v2267 = vpack.c.b16 %v2211, %v2207
      %v2268 = vpack.c.b16 %v2212, %v2208
      %v2269 = vpack.c.b16 %v2217, %v2213
      %v2270 = vpack.c.b16 %v2218, %v2214
      %v2271 = vpack.c.b16 %v2219, %v2215
      %v2272 = vpack.c.b16 %v2220, %v2216
      %v2273 = vpack.c.b16 %v2225, %v2221
      %v2274 = vpack.c.b16 %v2226, %v2222
      %v2275 = vpack.c.b16 %v2227, %v2223
      %v2276 = vpack.c.b16 %v2228, %v2224
      %v2277 = vpack.c.b16 %v2233, %v2229
      %v2278 = vpack.c.b16 %v2234, %v2230
      %v2279 = vpack.c.b16 %v2235, %v2231
      %v2280 = vpack.c.b16 %v2236, %v2232
      %v2281 = vpack.c.b16 %v2241, %v2237
      %v2282 = vpack.c.b16 %v2242, %v2238
      %v2283 = vpack.c.b16 %v2243, %v2239
      %v2284 = vpack.c.b16 %v2244, %v2240
      %v2285 = vpack.c.b16 %v2249, %v2245
      %v2286 = vpack.c.b16 %v2250, %v2246
      %v2287 = vpack.c.b16 %v2251, %v2247
      %v2288 = vpack.c.b16 %v2252, %v2248
      %v2289 = vpack.c.b16 %v2257, %v2253
      %v2290 = vpack.c.b16 %v2258, %v2254
      %v2291 = vpack.c.b16 %v2259, %v2255
      %v2292 = vpack.c.b16 %v2260, %v2256
      %2325 = vmatprep.subr.bf16.mxu0 %v2262
      %2326 = vmatpush1.bf16.msra.mxu0 %v2261
      %2327 = vmatprep.subr.bf16.mxu0 %v2266
      %2328 = vmatpush1.bf16.msra.mxu0 %v2265
      %2329 = vmatprep.subr.bf16.mxu0 %v2270
      %2330 = vmatpush1.bf16.msra.mxu0 %v2269
      %2331 = vmatprep.subr.bf16.mxu0 %v2274
      %2332 = vmatpush1.bf16.msra.mxu0 %v2273
      %2333 = vmatprep.subr.bf16.mxu0 %v2278
      %2334 = vmatpush1.bf16.msra.mxu0 %v2277
      %2335 = vmatprep.subr.bf16.mxu0 %v2282
      %2336 = vmatpush1.bf16.msra.mxu0 %v2281
      %2337 = vmatprep.subr.bf16.mxu0 %v2286
      %2338 = vmatpush1.bf16.msra.mxu0 %v2285
      %2339 = vmatprep.subr.bf16.mxu0 %v2290
      %2340 = vmatpush1.bf16.msra.mxu0 %v2289
      %2341 = vmatprep.subr.bf16.mxu0 0
      %2342 = vmatpush1.bf16.msra.mxu0 0
      %2343 = vmatprep.subr.bf16.mxu0 0
      %2344 = vmatpush1.bf16.msra.mxu0 0
      %2345 = vmatprep.subr.bf16.mxu0 0
      %2346 = vmatpush1.bf16.msra.mxu0 0
      %2347 = vmatprep.subr.bf16.mxu0 0
      %2348 = vmatpush1.bf16.msra.mxu0 0
      %2349 = vmatprep.subr.bf16.mxu0 0
      %2350 = vmatpush1.bf16.msra.mxu0 0
      %2351 = vmatprep.subr.bf16.mxu0 0
      %2352 = vmatpush1.bf16.msra.mxu0 0
      %2353 = vmatprep.subr.bf16.mxu0 0
      %2354 = vmatpush1.bf16.msra.mxu0 0
      %2355 = vmatprep.subr.bf16.mxu0 0
      %2356 = vmatpush1.bf16.msra.mxu0 0
      %2357 = vmatprep.mubr.bf16.mxu0 0
      %2358 = vmatmul.mubr.bf16.gmra.mrb[0].mxu0 %v2107
      %v2359 = vpop.f32.mrb[0].mxu0
      %v2360 = vadd.f32 %v2148, %v2359
      %v2361 = vpop.f32.mrb[0].mxu0
      %v2362 = vadd.f32 %v2152, %v2361
      %v2363 = vpop.f32.mrb[0].mxu0
      %v2364 = vadd.f32 %v2148, %v2363
      %v2365 = vpop.f32.mrb[0].mxu0
      %v2366 = vadd.f32 %v2152, %v2365
      %2367 = vmatprep.mubr.bf16.mxu0 0
      %2368 = vmatmul.mubr.bf16.gmra.mrb[0].mxu0 %v2108
      %v2369 = vpop.f32.mrb[0].mxu0
      %v2370 = vadd.f32 %v2148, %v2369
      %v2371 = vpop.f32.mrb[0].mxu0
      %v2372 = vadd.f32 %v2152, %v2371
      %v2373 = vpop.f32.mrb[0].mxu0
      %v2374 = vadd.f32 %v2148, %v2373
      %v2375 = vpop.f32.mrb[0].mxu0
      %v2376 = vadd.f32 %v2152, %v2375
      %2377 = vmatprep.mubr.bf16.mxu0 0
      %2378 = vmatmul.mubr.bf16.gmra.mrb[0].mxu0 %v2109
      %v2379 = vpop.f32.mrb[0].mxu0
      %v2380 = vadd.f32 %v2148, %v2379
      %v2381 = vpop.f32.mrb[0].mxu0
      %v2382 = vadd.f32 %v2152, %v2381
      %v2383 = vpop.f32.mrb[0].mxu0
      %v2384 = vadd.f32 %v2148, %v2383
      %v2385 = vpop.f32.mrb[0].mxu0
      %v2386 = vadd.f32 %v2152, %v2385
      %2387 = vmatprep.mubr.bf16.mxu0 0
      %2388 = vmatmul.mubr.bf16.gmra.mrb[0].mxu0 %v2110
      %v2389 = vpop.f32.mrb[0].mxu0
      %v2390 = vadd.f32 %v2148, %v2389
      %v2391 = vpop.f32.mrb[0].mxu0
      %v2392 = vadd.f32 %v2152, %v2391
      %v2393 = vpop.f32.mrb[0].mxu0
      %v2394 = vadd.f32 %v2148, %v2393
      %v2395 = vpop.f32.mrb[0].mxu0
      %v2396 = vadd.f32 %v2152, %v2395
      %2397 = vdwg.mxu0
      %2398 = vmatprep.subr.bf16.mxu0 %v2264
      %2399 = vmatpush1.bf16.msra.mxu0 %v2263
      %2400 = vmatprep.subr.bf16.mxu0 %v2268
      %2401 = vmatpush1.bf16.msra.mxu0 %v2267
      %2402 = vmatprep.subr.bf16.mxu0 %v2272
      %2403 = vmatpush1.bf16.msra.mxu0 %v2271
      %2404 = vmatprep.subr.bf16.mxu0 %v2276
      %2405 = vmatpush1.bf16.msra.mxu0 %v2275
      %2406 = vmatprep.subr.bf16.mxu0 %v2280
      %2407 = vmatpush1.bf16.msra.mxu0 %v2279
      %2408 = vmatprep.subr.bf16.mxu0 %v2284
      %2409 = vmatpush1.bf16.msra.mxu0 %v2283
      %2410 = vmatprep.subr.bf16.mxu0 %v2288
      %2411 = vmatpush1.bf16.msra.mxu0 %v2287
      %2412 = vmatprep.subr.bf16.mxu0 %v2292
      %2413 = vmatpush1.bf16.msra.mxu0 %v2291
      %2414 = vmatprep.subr.bf16.mxu0 0
      %2415 = vmatpush1.bf16.msra.mxu0 0
      %2416 = vmatprep.subr.bf16.mxu0 0
      %2417 = vmatpush1.bf16.msra.mxu0 0
      %2418 = vmatprep.subr.bf16.mxu0 0
      %2419 = vmatpush1.bf16.msra.mxu0 0
      %2420 = vmatprep.subr.bf16.mxu0 0
      %2421 = vmatpush1.bf16.msra.mxu0 0
      %2422 = vmatprep.subr.bf16.mxu0 0
      %2423 = vmatpush1.bf16.msra.mxu0 0
      %2424 = vmatprep.subr.bf16.mxu0 0
      %2425 = vmatpush1.bf16.msra.mxu0 0
      %2426 = vmatprep.subr.bf16.mxu0 0
      %2427 = vmatpush1.bf16.msra.mxu0 0
      %2428 = vmatprep.subr.bf16.mxu0 0
      %2429 = vmatpush1.bf16.msra.mxu0 0
      %2430 = vmatprep.mubr.bf16.mxu0 0
      %2431 = vmatmul.mubr.bf16.gmra.mrb[0].mxu0 %v2107
      %v2432 = vpop.f32.mrb[0].mxu0
      %v2433 = vadd.f32 %v2156, %v2432
      %v2434 = vpop.f32.mrb[0].mxu0
      %v2435 = vadd.f32 %v2160, %v2434
      %v2436 = vpop.f32.mrb[0].mxu0
      %v2437 = vadd.f32 %v2156, %v2436
      %v2438 = vpop.f32.mrb[0].mxu0
      %v2439 = vadd.f32 %v2160, %v2438
      %2440 = vmatprep.mubr.bf16.mxu0 0
      %2441 = vmatmul.mubr.bf16.gmra.mrb[0].mxu0 %v2108
      %v2442 = vpop.f32.mrb[0].mxu0
      %v2443 = vadd.f32 %v2156, %v2442
      %v2444 = vpop.f32.mrb[0].mxu0
      %v2445 = vadd.f32 %v2160, %v2444
      %v2446 = vpop.f32.mrb[0].mxu0
      %v2447 = vadd.f32 %v2156, %v2446
      %v2448 = vpop.f32.mrb[0].mxu0
      %v2449 = vadd.f32 %v2160, %v2448
      %2450 = vmatprep.mubr.bf16.mxu0 0
      %2451 = vmatmul.mubr.bf16.gmra.mrb[0].mxu0 %v2109
      %v2452 = vpop.f32.mrb[0].mxu0
      %v2453 = vadd.f32 %v2156, %v2452
      %v2454 = vpop.f32.mrb[0].mxu0
      %v2455 = vadd.f32 %v2160, %v2454
      %v2456 = vpop.f32.mrb[0].mxu0
      %v2457 = vadd.f32 %v2156, %v2456
      %v2458 = vpop.f32.mrb[0].mxu0
      %v2459 = vadd.f32 %v2160, %v2458
      %2460 = vmatprep.mubr.bf16.mxu0 0
      %2461 = vmatmul.mubr.bf16.gmra.mrb[0].mxu0 %v2110
      %v2462 = vpop.f32.mrb[0].mxu0
      %v2463 = vadd.f32 %v2156, %v2462
      %v2464 = vpop.f32.mrb[0].mxu0
      %v2465 = vadd.f32 %v2160, %v2464
      %v2466 = vpop.f32.mrb[0].mxu0
      %v2467 = vadd.f32 %v2156, %v2466
      %v2468 = vpop.f32.mrb[0].mxu0
      %v2469 = vadd.f32 %v2160, %v2468
      %2470 = vdwg.mxu0
      %v2471 = vmul.f32 %v2360, %v2360
      %v2472 = vmul.f32 %v2362, %v2362
      %v2473 = vmul.f32 %v2433, %v2433
      %v2474 = vmul.f32 %v2435, %v2435
      %v2475 = vmul.f32 %v2364, %v2364
      %v2476 = vmul.f32 %v2366, %v2366
      %v2477 = vmul.f32 %v2437, %v2437
      %v2478 = vmul.f32 %v2439, %v2439
      %v2479 = vmul.f32 %v2370, %v2370
      %v2480 = vmul.f32 %v2372, %v2372
      %v2481 = vmul.f32 %v2443, %v2443
      %v2482 = vmul.f32 %v2445, %v2445
      %v2483 = vmul.f32 %v2374, %v2374
      %v2484 = vmul.f32 %v2376, %v2376
      %v2485 = vmul.f32 %v2447, %v2447
      %v2486 = vmul.f32 %v2449, %v2449
      %v2487 = vmul.f32 %v2380, %v2380
      %v2488 = vmul.f32 %v2382, %v2382
      %v2489 = vmul.f32 %v2453, %v2453
      %v2490 = vmul.f32 %v2455, %v2455
      %v2491 = vmul.f32 %v2384, %v2384
      %v2492 = vmul.f32 %v2386, %v2386
      %v2493 = vmul.f32 %v2457, %v2457
      %v2494 = vmul.f32 %v2459, %v2459
      %v2495 = vmul.f32 %v2390, %v2390
      %v2496 = vmul.f32 %v2392, %v2392
      %v2497 = vmul.f32 %v2463, %v2463
      %v2498 = vmul.f32 %v2465, %v2465
      %v2499 = vmul.f32 %v2394, %v2394
      %v2500 = vmul.f32 %v2396, %v2396
      %v2501 = vmul.f32 %v2467, %v2467
      %v2502 = vmul.f32 %v2469, %v2469
      %v2503 = vmul.f32 %v2360, %v2471
      %v2504 = vmul.f32 %v2362, %v2472
      %v2505 = vmul.f32 %v2433, %v2473
      %v2506 = vmul.f32 %v2435, %v2474
      %v2507 = vmul.f32 %v2364, %v2475
      %v2508 = vmul.f32 %v2366, %v2476
      %v2509 = vmul.f32 %v2437, %v2477
      %v2510 = vmul.f32 %v2439, %v2478
      %v2511 = vmul.f32 %v2370, %v2479
      %v2512 = vmul.f32 %v2372, %v2480
      %v2513 = vmul.f32 %v2443, %v2481
      %v2514 = vmul.f32 %v2445, %v2482
      %v2515 = vmul.f32 %v2374, %v2483
      %v2516 = vmul.f32 %v2376, %v2484
      %v2517 = vmul.f32 %v2447, %v2485
      %v2518 = vmul.f32 %v2449, %v2486
      %v2519 = vmul.f32 %v2380, %v2487
      %v2520 = vmul.f32 %v2382, %v2488
      %v2521 = vmul.f32 %v2453, %v2489
      %v2522 = vmul.f32 %v2455, %v2490
      %v2523 = vmul.f32 %v2384, %v2491
      %v2524 = vmul.f32 %v2386, %v2492
      %v2525 = vmul.f32 %v2457, %v2493
      %v2526 = vmul.f32 %v2459, %v2494
      %v2527 = vmul.f32 %v2390, %v2495
      %v2528 = vmul.f32 %v2392, %v2496
      %v2529 = vmul.f32 %v2463, %v2497
      %v2530 = vmul.f32 %v2465, %v2498
      %v2531 = vmul.f32 %v2394, %v2499
      %v2532 = vmul.f32 %v2396, %v2500
      %v2533 = vmul.f32 %v2467, %v2501
      %v2534 = vmul.f32 %v2469, %v2502
      %v2535 = vmul.f32 %v2503, 0.044715
      %v2536 = vmul.f32 %v2504, 0.044715
      %v2537 = vmul.f32 %v2505, 0.044715
      %v2538 = vmul.f32 %v2506, 0.044715
      %v2539 = vmul.f32 %v2507, 0.044715
      %v2540 = vmul.f32 %v2508, 0.044715
      %v2541 = vmul.f32 %v2509, 0.044715
      %v2542 = vmul.f32 %v2510, 0.044715
      %v2543 = vmul.f32 %v2511, 0.044715
      %v2544 = vmul.f32 %v2512, 0.044715
      %v2545 = vmul.f32 %v2513, 0.044715
      %v2546 = vmul.f32 %v2514, 0.044715
      %v2547 = vmul.f32 %v2515, 0.044715
      %v2548 = vmul.f32 %v2516, 0.044715
      %v2549 = vmul.f32 %v2517, 0.044715
      %v2550 = vmul.f32 %v2518, 0.044715
      %v2551 = vmul.f32 %v2519, 0.044715
      %v2552 = vmul.f32 %v2520, 0.044715
      %v2553 = vmul.f32 %v2521, 0.044715
      %v2554 = vmul.f32 %v2522, 0.044715
      %v2555 = vmul.f32 %v2523, 0.044715
      %v2556 = vmul.f32 %v2524, 0.044715
      %v2557 = vmul.f32 %v2525, 0.044715
      %v2558 = vmul.f32 %v2526, 0.044715
      %v2559 = vmul.f32 %v2527, 0.044715
      %v2560 = vmul.f32 %v2528, 0.044715
      %v2561 = vmul.f32 %v2529, 0.044715
      %v2562 = vmul.f32 %v2530, 0.044715
      %v2563 = vmul.f32 %v2531, 0.044715
      %v2564 = vmul.f32 %v2532, 0.044715
      %v2565 = vmul.f32 %v2533, 0.044715
      %v2566 = vmul.f32 %v2534, 0.044715
      %v2567 = vadd.f32 %v2360, %v2535
      %v2568 = vadd.f32 %v2362, %v2536
      %v2569 = vadd.f32 %v2433, %v2537
      %v2570 = vadd.f32 %v2435, %v2538
      %v2571 = vadd.f32 %v2364, %v2539
      %v2572 = vadd.f32 %v2366, %v2540
      %v2573 = vadd.f32 %v2437, %v2541
      %v2574 = vadd.f32 %v2439, %v2542
      %v2575 = vadd.f32 %v2370, %v2543
      %v2576 = vadd.f32 %v2372, %v2544
      %v2577 = vadd.f32 %v2443, %v2545
      %v2578 = vadd.f32 %v2445, %v2546
      %v2579 = vadd.f32 %v2374, %v2547
      %v2580 = vadd.f32 %v2376, %v2548
      %v2581 = vadd.f32 %v2447, %v2549
      %v2582 = vadd.f32 %v2449, %v2550
      %v2583 = vadd.f32 %v2380, %v2551
      %v2584 = vadd.f32 %v2382, %v2552
      %v2585 = vadd.f32 %v2453, %v2553
      %v2586 = vadd.f32 %v2455, %v2554
      %v2587 = vadd.f32 %v2384, %v2555
      %v2588 = vadd.f32 %v2386, %v2556
      %v2589 = vadd.f32 %v2457, %v2557
      %v2590 = vadd.f32 %v2459, %v2558
      %v2591 = vadd.f32 %v2390, %v2559
      %v2592 = vadd.f32 %v2392, %v2560
      %v2593 = vadd.f32 %v2463, %v2561
      %v2594 = vadd.f32 %v2465, %v2562
      %v2595 = vadd.f32 %v2394, %v2563
      %v2596 = vadd.f32 %v2396, %v2564
      %v2597 = vadd.f32 %v2467, %v2565
      %v2598 = vadd.f32 %v2469, %v2566
      %v2599 = vmul.f32 %v2567, 0.7978846
      %v2600 = vmul.f32 %v2568, 0.7978846
      %v2601 = vmul.f32 %v2569, 0.7978846
      %v2602 = vmul.f32 %v2570, 0.7978846
      %v2603 = vmul.f32 %v2571, 0.7978846
      %v2604 = vmul.f32 %v2572, 0.7978846
      %v2605 = vmul.f32 %v2573, 0.7978846
      %v2606 = vmul.f32 %v2574, 0.7978846
      %v2607 = vmul.f32 %v2575, 0.7978846
      %v2608 = vmul.f32 %v2576, 0.7978846
      %v2609 = vmul.f32 %v2577, 0.7978846
      %v2610 = vmul.f32 %v2578, 0.7978846
      %v2611 = vmul.f32 %v2579, 0.7978846
      %v2612 = vmul.f32 %v2580, 0.7978846
      %v2613 = vmul.f32 %v2581, 0.7978846
      %v2614 = vmul.f32 %v2582, 0.7978846
      %v2615 = vmul.f32 %v2583, 0.7978846
      %v2616 = vmul.f32 %v2584, 0.7978846
      %v2617 = vmul.f32 %v2585, 0.7978846
      %v2618 = vmul.f32 %v2586, 0.7978846
      %v2619 = vmul.f32 %v2587, 0.7978846
      %v2620 = vmul.f32 %v2588, 0.7978846
      %v2621 = vmul.f32 %v2589, 0.7978846
      %v2622 = vmul.f32 %v2590, 0.7978846
      %v2623 = vmul.f32 %v2591, 0.7978846
      %v2624 = vmul.f32 %v2592, 0.7978846
      %v2625 = vmul.f32 %v2593, 0.7978846
      %v2626 = vmul.f32 %v2594, 0.7978846
      %v2627 = vmul.f32 %v2595, 0.7978846
      %v2628 = vmul.f32 %v2596, 0.7978846
      %v2629 = vmul.f32 %v2597, 0.7978846
      %v2630 = vmul.f32 %v2598, 0.7978846
      %v2631 = vtanh.pop %v2599
      %v2632 = vtanh.pop %v2600
      %v2633 = vtanh.pop %v2601
      %v2634 = vtanh.pop %v2602
      %v2635 = vtanh.pop %v2603
      %v2636 = vtanh.pop %v2604
      %v2637 = vtanh.pop %v2605
      %v2638 = vtanh.pop %v2606
      %v2639 = vtanh.pop %v2607
      %v2640 = vtanh.pop %v2608
      %v2641 = vtanh.pop %v2609
      %v2642 = vtanh.pop %v2610
      %v2643 = vtanh.pop %v2611
      %v2644 = vtanh.pop %v2612
      %v2645 = vtanh.pop %v2613
      %v2646 = vtanh.pop %v2614
      %v2647 = vtanh.pop %v2615
      %v2648 = vtanh.pop %v2616
      %v2649 = vtanh.pop %v2617
      %v2650 = vtanh.pop %v2618
      %v2651 = vtanh.pop %v2619
      %v2652 = vtanh.pop %v2620
      %v2653 = vtanh.pop %v2621
      %v2654 = vtanh.pop %v2622
      %v2655 = vtanh.pop %v2623
      %v2656 = vtanh.pop %v2624
      %v2657 = vtanh.pop %v2625
      %v2658 = vtanh.pop %v2626
      %v2659 = vtanh.pop %v2627
      %v2660 = vtanh.pop %v2628
      %v2661 = vtanh.pop %v2629
      %v2662 = vtanh.pop %v2630
      %v2663 = vadd.f32 %v2631, 1.0
      %v2664 = vadd.f32 %v2632, 1.0
      %v2665 = vadd.f32 %v2633, 1.0
      %v2666 = vadd.f32 %v2634, 1.0
      %v2667 = vadd.f32 %v2635, 1.0
      %v2668 = vadd.f32 %v2636, 1.0
      %v2669 = vadd.f32 %v2637, 1.0
      %v2670 = vadd.f32 %v2638, 1.0
      %v2671 = vadd.f32 %v2639, 1.0
      %v2672 = vadd.f32 %v2640, 1.0
      %v2673 = vadd.f32 %v2641, 1.0
      %v2674 = vadd.f32 %v2642, 1.0
      %v2675 = vadd.f32 %v2643, 1.0
      %v2676 = vadd.f32 %v2644, 1.0
      %v2677 = vadd.f32 %v2645, 1.0
      %v2678 = vadd.f32 %v2646, 1.0
      %v2679 = vadd.f32 %v2647, 1.0
      %v2680 = vadd.f32 %v2648, 1.0
      %v2681 = vadd.f32 %v2649, 1.0
      %v2682 = vadd.f32 %v2650, 1.0
      %v2683 = vadd.f32 %v2651, 1.0
      %v2684 = vadd.f32 %v2652, 1.0
      %v2685 = vadd.f32 %v2653, 1.0
      %v2686 = vadd.f32 %v2654, 1.0
      %v2687 = vadd.f32 %v2655, 1.0
      %v2688 = vadd.f32 %v2656, 1.0
      %v2689 = vadd.f32 %v2657, 1.0
      %v2690 = vadd.f32 %v2658, 1.0
      %v2691 = vadd.f32 %v2659, 1.0
      %v2692 = vadd.f32 %v2660, 1.0
      %v2693 = vadd.f32 %v2661, 1.0
      %v2694 = vadd.f32 %v2662, 1.0
      %v2695 = vmul.f32 %v2663, 0.5
      %v2696 = vmul.f32 %v2664, 0.5
      %v2697 = vmul.f32 %v2665, 0.5
      %v2698 = vmul.f32 %v2666, 0.5
      %v2699 = vmul.f32 %v2667, 0.5
      %v2700 = vmul.f32 %v2668, 0.5
      %v2701 = vmul.f32 %v2669, 0.5
      %v2702 = vmul.f32 %v2670, 0.5
      %v2703 = vmul.f32 %v2671, 0.5
      %v2704 = vmul.f32 %v2672, 0.5
      %v2705 = vmul.f32 %v2673, 0.5
      %v2706 = vmul.f32 %v2674, 0.5
      %v2707 = vmul.f32 %v2675, 0.5
      %v2708 = vmul.f32 %v2676, 0.5
      %v2709 = vmul.f32 %v2677, 0.5
      %v2710 = vmul.f32 %v2678, 0.5
      %v2711 = vmul.f32 %v2679, 0.5
      %v2712 = vmul.f32 %v2680, 0.5
      %v2713 = vmul.f32 %v2681, 0.5
      %v2714 = vmul.f32 %v2682, 0.5
      %v2715 = vmul.f32 %v2683, 0.5
      %v2716 = vmul.f32 %v2684, 0.5
      %v2717 = vmul.f32 %v2685, 0.5
      %v2718 = vmul.f32 %v2686, 0.5
      %v2719 = vmul.f32 %v2687, 0.5
      %v2720 = vmul.f32 %v2688, 0.5
      %v2721 = vmul.f32 %v2689, 0.5
      %v2722 = vmul.f32 %v2690, 0.5
      %v2723 = vmul.f32 %v2691, 0.5
      %v2724 = vmul.f32 %v2692, 0.5
      %v2725 = vmul.f32 %v2693, 0.5
      %v2726 = vmul.f32 %v2694, 0.5
      %v2727 = vmul.f32 %v2360, %v2695
      %v2728 = vmul.f32 %v2362, %v2696
      %v2729 = vmul.f32 %v2433, %v2697
      %v2730 = vmul.f32 %v2435, %v2698
      %v2731 = vmul.f32 %v2364, %v2699
      %v2732 = vmul.f32 %v2366, %v2700
      %v2733 = vmul.f32 %v2437, %v2701
      %v2734 = vmul.f32 %v2439, %v2702
      %v2735 = vmul.f32 %v2370, %v2703
      %v2736 = vmul.f32 %v2372, %v2704
      %v2737 = vmul.f32 %v2443, %v2705
      %v2738 = vmul.f32 %v2445, %v2706
      %v2739 = vmul.f32 %v2374, %v2707
      %v2740 = vmul.f32 %v2376, %v2708
      %v2741 = vmul.f32 %v2447, %v2709
      %v2742 = vmul.f32 %v2449, %v2710
      %v2743 = vmul.f32 %v2380, %v2711
      %v2744 = vmul.f32 %v2382, %v2712
      %v2745 = vmul.f32 %v2453, %v2713
      %v2746 = vmul.f32 %v2455, %v2714
      %v2747 = vmul.f32 %v2384, %v2715
      %v2748 = vmul.f32 %v2386, %v2716
      %v2749 = vmul.f32 %v2457, %v2717
      %v2750 = vmul.f32 %v2459, %v2718
      %v2751 = vmul.f32 %v2390, %v2719
      %v2752 = vmul.f32 %v2392, %v2720
      %v2753 = vmul.f32 %v2463, %v2721
      %v2754 = vmul.f32 %v2465, %v2722
      %v2755 = vmul.f32 %v2394, %v2723
      %v2756 = vmul.f32 %v2396, %v2724
      %v2757 = vmul.f32 %v2467, %v2725
      %v2758 = vmul.f32 %v2469, %v2726
      %v2759 = vpack.c.bf16 %v2731, %v2727
      %v2760 = vpack.c.bf16 %v2732, %v2728
      %v2761 = vpack.c.bf16 %v2733, %v2729
      %v2762 = vpack.c.bf16 %v2734, %v2730
      %v2763 = vpack.c.bf16 %v2739, %v2735
      %v2764 = vpack.c.bf16 %v2740, %v2736
      %v2765 = vpack.c.bf16 %v2741, %v2737
      %v2766 = vpack.c.bf16 %v2742, %v2738
      %v2767 = vpack.c.bf16 %v2747, %v2743
      %v2768 = vpack.c.bf16 %v2748, %v2744
      %v2769 = vpack.c.bf16 %v2749, %v2745
      %v2770 = vpack.c.bf16 %v2750, %v2746
      %v2771 = vpack.c.bf16 %v2755, %v2751
      %v2772 = vpack.c.bf16 %v2756, %v2752
      %v2773 = vpack.c.bf16 %v2757, %v2753
      %v2774 = vpack.c.bf16 %v2758, %v2754
      %v2775 = vld [vmem:[%s11] sm:$0xf]
      %v2776 = vld [vmem:[%s11 + $0x4] sm:$0xf]
      %v2777 = vld [vmem:[%s11 + $0x8] sm:$0xf]
      %v2778 = vld [vmem:[%s11 + $0xc] sm:$0xf]
      %v2779 = vld [vmem:[%s11 + $0x10] sm:$0xf]
      %v2780 = vld [vmem:[%s11 + $0x14] sm:$0xf]
      %v2781 = vld [vmem:[%s11 + $0x18] sm:$0xf]
      %v2782 = vld [vmem:[%s11 + $0x1c] sm:$0xf]
      %v2783 = vld [vmem:[%s11 + $0x20] sm:$0xf]
      %v2784 = vld [vmem:[%s11 + $0x24] sm:$0xf]
      %v2785 = vld [vmem:[%s11 + $0x28] sm:$0xf]
      %v2786 = vld [vmem:[%s11 + $0x2c] sm:$0xf]
      %v2787 = vld [vmem:[%s11 + $0x30] sm:$0xf]
      %v2788 = vld [vmem:[%s11 + $0x34] sm:$0xf]
      %v2789 = vld [vmem:[%s11 + $0x38] sm:$0xf]
      %v2790 = vld [vmem:[%s11 + $0x3c] sm:$0xf]
      %v2791 = vld [vmem:[%s11 + $0x40] sm:$0xf]
      %v2792 = vld [vmem:[%s11 + $0x44] sm:$0xf]
      %v2793 = vld [vmem:[%s11 + $0x48] sm:$0xf]
      %v2794 = vld [vmem:[%s11 + $0x4c] sm:$0xf]
      %v2795 = vld [vmem:[%s11 + $0x50] sm:$0xf]
      %v2796 = vld [vmem:[%s11 + $0x54] sm:$0xf]
      %v2797 = vld [vmem:[%s11 + $0x58] sm:$0xf]
      %v2798 = vld [vmem:[%s11 + $0x5c] sm:$0xf]
      %v2799 = vld [vmem:[%s11 + $0x60] sm:$0xf]
      %v2800 = vld [vmem:[%s11 + $0x64] sm:$0xf]
      %v2801 = vld [vmem:[%s11 + $0x68] sm:$0xf]
      %v2802 = vld [vmem:[%s11 + $0x6c] sm:$0xf]
      %v2803 = vld [vmem:[%s11 + $0x70] sm:$0xf]
      %v2804 = vld [vmem:[%s11 + $0x74] sm:$0xf]
      %v2805 = vld [vmem:[%s11 + $0x78] sm:$0xf]
      %v2806 = vld [vmem:[%s11 + $0x7c] sm:$0xf]
      %v2807 = vld [vmem:[%s11 + $0x80] sm:$0xf]
      %v2808 = vld [vmem:[%s11 + $0x84] sm:$0xf]
      %v2809 = vld [vmem:[%s11 + $0x88] sm:$0xf]
      %v2810 = vld [vmem:[%s11 + $0x8c] sm:$0xf]
      %v2811 = vld [vmem:[%s11 + $0x90] sm:$0xf]
      %v2812 = vld [vmem:[%s11 + $0x94] sm:$0xf]
      %v2813 = vld [vmem:[%s11 + $0x98] sm:$0xf]
      %v2814 = vld [vmem:[%s11 + $0x9c] sm:$0xf]
      %v2815 = vld [vmem:[%s11 + $0xa0] sm:$0xf]
      %v2816 = vld [vmem:[%s11 + $0xa4] sm:$0xf]
      %v2817 = vld [vmem:[%s11 + $0xa8] sm:$0xf]
      %v2818 = vld [vmem:[%s11 + $0xac] sm:$0xf]
      %v2819 = vld [vmem:[%s11 + $0xb0] sm:$0xf]
      %v2820 = vld [vmem:[%s11 + $0xb4] sm:$0xf]
      %v2821 = vld [vmem:[%s11 + $0xb8] sm:$0xf]
      %v2822 = vld [vmem:[%s11 + $0xbc] sm:$0xf]
      %v2823 = vld [vmem:[%s11 + $0xc0] sm:$0xf]
      %v2824 = vld [vmem:[%s11 + $0xc4] sm:$0xf]
      %v2825 = vld [vmem:[%s11 + $0xc8] sm:$0xf]
      %v2826 = vld [vmem:[%s11 + $0xcc] sm:$0xf]
      %v2827 = vld [vmem:[%s11 + $0xd0] sm:$0xf]
      %v2828 = vld [vmem:[%s11 + $0xd4] sm:$0xf]
      %v2829 = vld [vmem:[%s11 + $0xd8] sm:$0xf]
      %v2830 = vld [vmem:[%s11 + $0xdc] sm:$0xf]
      %v2831 = vld [vmem:[%s11 + $0xe0] sm:$0xf]
      %v2832 = vld [vmem:[%s11 + $0xe4] sm:$0xf]
      %v2833 = vld [vmem:[%s11 + $0xe8] sm:$0xf]
      %v2834 = vld [vmem:[%s11 + $0xec] sm:$0xf]
      %v2835 = vld [vmem:[%s11 + $0xf0] sm:$0xf]
      %v2836 = vld [vmem:[%s11 + $0xf4] sm:$0xf]
      %v2837 = vld [vmem:[%s11 + $0xf8] sm:$0xf]
      %v2838 = vld [vmem:[%s11 + $0xfc] sm:$0xf]
      %v2839 = vld [vmem:[%s12] sm:$0x1]
      %v2841 = vlaneseq
      %v2842 = vshrl.u32 %v2841, 7
      %v2843 = vsub.s32 0, %v2842
      %v2844 = vrot.slane %v2839, %v2843
      %v2910 = vunpack.c.l.b16 %v2775
      %v2911 = vunpack.c.l.b16 %v2776
      %v2912 = vunpack.c.l.b16 %v2777
      %v2913 = vunpack.c.l.b16 %v2778
      %v2914 = vunpack.c.l.b16 %v2779
      %v2915 = vunpack.c.l.b16 %v2780
      %v2916 = vunpack.c.l.b16 %v2781
      %v2917 = vunpack.c.l.b16 %v2782
      %v2918 = vunpack.c.l.b16 %v2783
      %v2919 = vunpack.c.l.b16 %v2784
      %v2920 = vunpack.c.l.b16 %v2785
      %v2921 = vunpack.c.l.b16 %v2786
      %v2922 = vunpack.c.l.b16 %v2787
      %v2923 = vunpack.c.l.b16 %v2788
      %v2924 = vunpack.c.l.b16 %v2789
      %v2925 = vunpack.c.l.b16 %v2790
      %v2926 = vunpack.c.l.b16 %v2791
      %v2927 = vunpack.c.l.b16 %v2792
      %v2928 = vunpack.c.l.b16 %v2793
      %v2929 = vunpack.c.l.b16 %v2794
      %v2930 = vunpack.c.l.b16 %v2795
      %v2931 = vunpack.c.l.b16 %v2796
      %v2932 = vunpack.c.l.b16 %v2797
      %v2933 = vunpack.c.l.b16 %v2798
      %v2934 = vunpack.c.l.b16 %v2799
      %v2935 = vunpack.c.l.b16 %v2800
      %v2936 = vunpack.c.l.b16 %v2801
      %v2937 = vunpack.c.l.b16 %v2802
      %v2938 = vunpack.c.l.b16 %v2803
      %v2939 = vunpack.c.l.b16 %v2804
      %v2940 = vunpack.c.l.b16 %v2805
      %v2941 = vunpack.c.l.b16 %v2806
      %v2942 = vunpack.c.l.b16 %v2807
      %v2943 = vunpack.c.l.b16 %v2808
      %v2944 = vunpack.c.l.b16 %v2809
      %v2945 = vunpack.c.l.b16 %v2810
      %v2946 = vunpack.c.l.b16 %v2811
      %v2947 = vunpack.c.l.b16 %v2812
      %v2948 = vunpack.c.l.b16 %v2813
      %v2949 = vunpack.c.l.b16 %v2814
      %v2950 = vunpack.c.l.b16 %v2815
      %v2951 = vunpack.c.l.b16 %v2816
      %v2952 = vunpack.c.l.b16 %v2817
      %v2953 = vunpack.c.l.b16 %v2818
      %v2954 = vunpack.c.l.b16 %v2819
      %v2955 = vunpack.c.l.b16 %v2820
      %v2956 = vunpack.c.l.b16 %v2821
      %v2957 = vunpack.c.l.b16 %v2822
      %v2958 = vunpack.c.l.b16 %v2823
      %v2959 = vunpack.c.l.b16 %v2824
      %v2960 = vunpack.c.l.b16 %v2825
      %v2961 = vunpack.c.l.b16 %v2826
      %v2962 = vunpack.c.l.b16 %v2827
      %v2963 = vunpack.c.l.b16 %v2828
      %v2964 = vunpack.c.l.b16 %v2829
      %v2965 = vunpack.c.l.b16 %v2830
      %v2966 = vunpack.c.l.b16 %v2831
      %v2967 = vunpack.c.l.b16 %v2832
      %v2968 = vunpack.c.l.b16 %v2833
      %v2969 = vunpack.c.l.b16 %v2834
      %v2970 = vunpack.c.l.b16 %v2835
      %v2971 = vunpack.c.l.b16 %v2836
      %v2972 = vunpack.c.l.b16 %v2837
      %v2973 = vunpack.c.l.b16 %v2838
      %v2974 = vpack.c.b16 %v2911, %v2910
      %v2975 = vpack.c.b16 %v2913, %v2912
      %v2976 = vpack.c.b16 %v2915, %v2914
      %v2977 = vpack.c.b16 %v2917, %v2916
      %v2978 = vpack.c.b16 %v2919, %v2918
      %v2979 = vpack.c.b16 %v2921, %v2920
      %v2980 = vpack.c.b16 %v2923, %v2922
      %v2981 = vpack.c.b16 %v2925, %v2924
      %v2982 = vpack.c.b16 %v2927, %v2926
      %v2983 = vpack.c.b16 %v2929, %v2928
      %v2984 = vpack.c.b16 %v2931, %v2930
      %v2985 = vpack.c.b16 %v2933, %v2932
      %v2986 = vpack.c.b16 %v2935, %v2934
      %v2987 = vpack.c.b16 %v2937, %v2936
      %v2988 = vpack.c.b16 %v2939, %v2938
      %v2989 = vpack.c.b16 %v2941, %v2940
      %v2990 = vpack.c.b16 %v2943, %v2942
      %v2991 = vpack.c.b16 %v2945, %v2944
      %v2992 = vpack.c.b16 %v2947, %v2946
      %v2993 = vpack.c.b16 %v2949, %v2948
      %v2994 = vpack.c.b16 %v2951, %v2950
      %v2995 = vpack.c.b16 %v2953, %v2952
      %v2996 = vpack.c.b16 %v2955, %v2954
      %v2997 = vpack.c.b16 %v2957, %v2956
      %v2998 = vpack.c.b16 %v2959, %v2958
      %v2999 = vpack.c.b16 %v2961, %v2960
      %v3000 = vpack.c.b16 %v2963, %v2962
      %v3001 = vpack.c.b16 %v2965, %v2964
      %v3002 = vpack.c.b16 %v2967, %v2966
      %v3003 = vpack.c.b16 %v2969, %v2968
      %v3004 = vpack.c.b16 %v2971, %v2970
      %v3005 = vpack.c.b16 %v2973, %v2972
      %3038 = vmatprep.subr.bf16.mxu0 0
      %3039 = vmatpush1.bf16.msra.mxu0 %v2974
      %3040 = vmatprep.subr.bf16.mxu0 0
      %3041 = vmatpush1.bf16.msra.mxu0 %v2975
      %3042 = vmatprep.subr.bf16.mxu0 0
      %3043 = vmatpush1.bf16.msra.mxu0 %v2976
      %3044 = vmatprep.subr.bf16.mxu0 0
      %3045 = vmatpush1.bf16.msra.mxu0 %v2977
      %3046 = vmatprep.subr.bf16.mxu0 0
      %3047 = vmatpush1.bf16.msra.mxu0 %v2978
      %3048 = vmatprep.subr.bf16.mxu0 0
      %3049 = vmatpush1.bf16.msra.mxu0 %v2979
      %3050 = vmatprep.subr.bf16.mxu0 0
      %3051 = vmatpush1.bf16.msra.mxu0 %v2980
      %3052 = vmatprep.subr.bf16.mxu0 0
      %3053 = vmatpush1.bf16.msra.mxu0 %v2981
      %3054 = vmatprep.subr.bf16.mxu0 0
      %3055 = vmatpush1.bf16.msra.mxu0 %v2982
      %3056 = vmatprep.subr.bf16.mxu0 0
      %3057 = vmatpush1.bf16.msra.mxu0 %v2983
      %3058 = vmatprep.subr.bf16.mxu0 0
      %3059 = vmatpush1.bf16.msra.mxu0 %v2984
      %3060 = vmatprep.subr.bf16.mxu0 0
      %3061 = vmatpush1.bf16.msra.mxu0 %v2985
      %3062 = vmatprep.subr.bf16.mxu0 0
      %3063 = vmatpush1.bf16.msra.mxu0 %v2986
      %3064 = vmatprep.subr.bf16.mxu0 0
      %3065 = vmatpush1.bf16.msra.mxu0 %v2987
      %3066 = vmatprep.subr.bf16.mxu0 0
      %3067 = vmatpush1.bf16.msra.mxu0 %v2988
      %3068 = vmatprep.subr.bf16.mxu0 0
      %3069 = vmatpush1.bf16.msra.mxu0 %v2989
      %3070 = vmatprep.mubr.bf16.mxu0 %v2760
      %3071 = vmatmul.mubr.bf16.gmra.mrb[0].mxu0 %v2759
      %v3072 = vpop.f32.mrb[0].mxu0
      %v3073 = vadd.f32 %v2844, %v3072
      %v3074 = vpop.f32.mrb[0].mxu0
      %v3075 = vpop.f32.mrb[0].mxu0
      %v3076 = vadd.f32 %v2844, %v3075
      %v3077 = vpop.f32.mrb[0].mxu0
      %3078 = vmatprep.mubr.bf16.mxu0 %v2764
      %3079 = vmatmul.mubr.bf16.gmra.mrb[0].mxu0 %v2763
      %v3080 = vpop.f32.mrb[0].mxu0
      %v3081 = vadd.f32 %v2844, %v3080
      %v3082 = vpop.f32.mrb[0].mxu0
      %v3083 = vpop.f32.mrb[0].mxu0
      %v3084 = vadd.f32 %v2844, %v3083
      %v3085 = vpop.f32.mrb[0].mxu0
      %3086 = vmatprep.mubr.bf16.mxu0 %v2768
      %3087 = vmatmul.mubr.bf16.gmra.mrb[0].mxu0 %v2767
      %v3088 = vpop.f32.mrb[0].mxu0
      %v3089 = vadd.f32 %v2844, %v3088
      %v3090 = vpop.f32.mrb[0].mxu0
      %v3091 = vpop.f32.mrb[0].mxu0
      %v3092 = vadd.f32 %v2844, %v3091
      %v3093 = vpop.f32.mrb[0].mxu0
      %3094 = vmatprep.mubr.bf16.mxu0 %v2772
      %3095 = vmatmul.mubr.bf16.gmra.mrb[0].mxu0 %v2771
      %v3096 = vpop.f32.mrb[0].mxu0
      %v3097 = vadd.f32 %v2844, %v3096
      %v3098 = vpop.f32.mrb[0].mxu0
      %v3099 = vpop.f32.mrb[0].mxu0
      %v3100 = vadd.f32 %v2844, %v3099
      %v3101 = vpop.f32.mrb[0].mxu0
      %3102 = vdwg.mxu0
      %3103 = vmatprep.subr.bf16.mxu0 0
      %3104 = vmatpush1.bf16.msra.mxu0 %v2990
      %3105 = vmatprep.subr.bf16.mxu0 0
      %3106 = vmatpush1.bf16.msra.mxu0 %v2991
      %3107 = vmatprep.subr.bf16.mxu0 0
      %3108 = vmatpush1.bf16.msra.mxu0 %v2992
      %3109 = vmatprep.subr.bf16.mxu0 0
      %3110 = vmatpush1.bf16.msra.mxu0 %v2993
      %3111 = vmatprep.subr.bf16.mxu0 0
      %3112 = vmatpush1.bf16.msra.mxu0 %v2994
      %3113 = vmatprep.subr.bf16.mxu0 0
      %3114 = vmatpush1.bf16.msra.mxu0 %v2995
      %3115 = vmatprep.subr.bf16.mxu0 0
      %3116 = vmatpush1.bf16.msra.mxu0 %v2996
      %3117 = vmatprep.subr.bf16.mxu0 0
      %3118 = vmatpush1.bf16.msra.mxu0 %v2997
      %3119 = vmatprep.subr.bf16.mxu0 0
      %3120 = vmatpush1.bf16.msra.mxu0 %v2998
      %3121 = vmatprep.subr.bf16.mxu0 0
      %3122 = vmatpush1.bf16.msra.mxu0 %v2999
      %3123 = vmatprep.subr.bf16.mxu0 0
      %3124 = vmatpush1.bf16.msra.mxu0 %v3000
      %3125 = vmatprep.subr.bf16.mxu0 0
      %3126 = vmatpush1.bf16.msra.mxu0 %v3001
      %3127 = vmatprep.subr.bf16.mxu0 0
      %3128 = vmatpush1.bf16.msra.mxu0 %v3002
      %3129 = vmatprep.subr.bf16.mxu0 0
      %3130 = vmatpush1.bf16.msra.mxu0 %v3003
      %3131 = vmatprep.subr.bf16.mxu0 0
      %3132 = vmatpush1.bf16.msra.mxu0 %v3004
      %3133 = vmatprep.subr.bf16.mxu0 0
      %3134 = vmatpush1.bf16.msra.mxu0 %v3005
      %3135 = vmatprep.mubr.bf16.mxu0 %v2762
      %3136 = vmatmul.mubr.bf16.gmra.mrb[0].mxu0 %v2761
      %v3137 = vpop.f32.mrb[0].mxu0
      %v3138 = vadd.f32 %v3073, %v3137
      %v3139 = vpop.f32.mrb[0].mxu0
      %v3140 = vpop.f32.mrb[0].mxu0
      %v3141 = vadd.f32 %v3076, %v3140
      %v3142 = vpop.f32.mrb[0].mxu0
      %3143 = vmatprep.mubr.bf16.mxu0 %v2766
      %3144 = vmatmul.mubr.bf16.gmra.mrb[0].mxu0 %v2765
      %v3145 = vpop.f32.mrb[0].mxu0
      %v3146 = vadd.f32 %v3081, %v3145
      %v3147 = vpop.f32.mrb[0].mxu0
      %v3148 = vpop.f32.mrb[0].mxu0
      %v3149 = vadd.f32 %v3084, %v3148
      %v3150 = vpop.f32.mrb[0].mxu0
      %3151 = vmatprep.mubr.bf16.mxu0 %v2770
      %3152 = vmatmul.mubr.bf16.gmra.mrb[0].mxu0 %v2769
      %v3153 = vpop.f32.mrb[0].mxu0
      %v3154 = vadd.f32 %v3089, %v3153
      %v3155 = vpop.f32.mrb[0].mxu0
      %v3156 = vpop.f32.mrb[0].mxu0
      %v3157 = vadd.f32 %v3092, %v3156
      %v3158 = vpop.f32.mrb[0].mxu0
      %3159 = vmatprep.mubr.bf16.mxu0 %v2774
      %3160 = vmatmul.mubr.bf16.gmra.mrb[0].mxu0 %v2773
      %v3161 = vpop.f32.mrb[0].mxu0
      %v3162 = vadd.f32 %v3097, %v3161
      %v3163 = vpop.f32.mrb[0].mxu0
      %v3164 = vpop.f32.mrb[0].mxu0
      %v3165 = vadd.f32 %v3100, %v3164
      %v3166 = vpop.f32.mrb[0].mxu0
      %3167 = vdwg.mxu0
      %v3168 = vadd.f32 %v1981, %v3138
      %v3169 = vadd.f32 %v1982, %v3141
      %v3170 = vadd.f32 %v1983, %v3146
      %v3171 = vadd.f32 %v1984, %v3149
      %v3172 = vadd.f32 %v1985, %v3154
      %v3173 = vadd.f32 %v1986, %v3157
      %v3174 = vadd.f32 %v1987, %v3162
      %v3175 = vadd.f32 %v1988, %v3165
      %3176 = vst [vmem:[%s447] sm:$0xff] %v3168
      %3177 = vst [vmem:[%s447 + $0x8] sm:$0xff] %v3169
      %3178 = vst [vmem:[%s447 + $0x10] sm:$0xff] %v3170
      %3179 = vst [vmem:[%s447 + $0x18] sm:$0xff] %v3171
      %3180 = vst [vmem:[%s447 + $0x20] sm:$0xff] %v3172
      %3181 = vst [vmem:[%s447 + $0x28] sm:$0xff] %v3173
      %3182 = vst [vmem:[%s447 + $0x30] sm:$0xff] %v3174
      %3183 = vst [vmem:[%s447 + $0x38] sm:$0xff] %v3175
      %s3184 = smul.u32 4, %s24
      %p3185 = scmp.lt.s32.totalorder %s3184, 7
      %s3186 = scalar_select %p3185, %s3184, 7
      %s3187 = smul.addr %s3186, 2
      %s3188 = smul.addr %s3187, 8
      %s3189 = scalar_lea.vmem %s13, %s3188
      // Predicated region
      $region73: #{maxvit_finetune_forward.5} parent=71 // pred_check
        %p3190 = pneg %p320
      $region74: #{maxvit_finetune_forward.5} parent=71 // pred_check_branch
        %3192 = sbr.rel (%p3190) target = $region76
      $region75: #{maxvit_finetune_forward.5} parent=71 // pred_region
        %s3193 = smul.u32 4, %s24
      $region76: #{maxvit_finetune_forward.5} parent=71 // pred_fallthru
        _
    $region72: #{maxvit_finetune_forward.5} parent=5 // pred_fallthru
      _
    %p3194 = scmp.le.s32.totalorder 2, %s19
    // Predicated region
    $region77: #{maxvit_finetune_forward.5} parent=5 // pred_check
      %p3195 = pneg %p3194
    $region78: #{maxvit_finetune_forward.5} parent=5 // pred_check_branch
      %3197 = sbr.rel (%p3195) target = $region80
    $region79: #{maxvit_finetune_forward.5} parent=5 // pred_region
      %s3198 = ssub.s32 %s19, 2
      // Predicated region
      $region81: #{maxvit_finetune_forward.5} parent=79 // pred_check
        %p3199 = pneg %p326
      $region82: #{maxvit_finetune_forward.5} parent=79 // pred_check_branch
        %3201 = sbr.rel (%p3199) target = $region84
      $region83: #{maxvit_finetune_forward.5} parent=79 // pred_region
        %s3202 = smul.u32 4, %s25
        %p3203 = scmp.lt.s32.totalorder %s3202, 7
        %s3204 = scalar_select %p3203, %s3202, 7
        %s3205 = smul.addr %s3204, 2
        %s3206 = smul.addr %s3205, 8
        %s3207 = scalar_lea.vmem %s13, %s3206
      $region84: #{maxvit_finetune_forward.5} parent=79 // pred_fallthru
        _
    $region80: #{maxvit_finetune_forward.5} parent=5 // pred_fallthru
      _
  $region6: #{maxvit_finetune_forward.5} parent=0 // loop_footer
    %s23 = sadd.s32 1, %s19
  $region7: #{maxvit_finetune_forward.5} parent=0 // loop_footer_branch
    %18 = sbr.rel target = $region3
  $region8: #{maxvit_finetune_forward.5} parent=0 // loop_exit
    _

</llo_original>
